<compile_context>
chip_gen: v5e
topology: v5e:2x2
jax: 0.10.0
libtpu: 0.0.40
codegen_flags: <defaults>
</compile_context>

<pallas_src>
import functools

import jax
import jax.numpy as jnp
from jax.experimental import pallas as pl
from jax.experimental.pallas import tpu as pltpu

LANE = 128                       # lane-padded channel width for all GEMM outputs
COMPUTE_DTYPE = jnp.bfloat16     # activation / weight storage + MXU input dtype
DEFAULT_TM = 256                 # M-tile; sweep 256..1024 for large batches
                                 # (256 keeps double-buffered VMEM tiny even on
                                 #  v5e's 16 MiB scoped default / v7x 64 MiB phys)


def _round_up(x, m):
    return (x + m - 1) // m * m


# ---------------------------------------------------------------------------
# Pallas kernels
# ---------------------------------------------------------------------------
def _conv_gemm_kernel(p_ref, w_ref, b_ref, o_ref, *, relu):
    # patches(bf16) @ weight(bf16, BN-scale folded) on the MXU, f32 accumulate,
    # + bias, optional ReLU, store bf16 lane-dense.
    acc = jnp.dot(p_ref[...], w_ref[...], preferred_element_type=jnp.float32)
    acc = acc + b_ref[...]
    if relu:
        acc = jnp.maximum(acc, 0.0)
    o_ref[...] = acc.astype(o_ref.dtype)


def _conv_gemm_res_kernel(p_ref, w_ref, b_ref, r_ref, o_ref, *, relu):
    # Same plus residual add (BasicBlock shortcut).
    acc = jnp.dot(p_ref[...], w_ref[...], preferred_element_type=jnp.float32)
    acc = acc + b_ref[...] + r_ref[...].astype(jnp.float32)
    if relu:
        acc = jnp.maximum(acc, 0.0)
    o_ref[...] = acc.astype(o_ref.dtype)


def _head_kernel(x_ref, w_ref, b_ref, o_ref):
    # Global average pool over spatial positions (sublane reduce) + linear.
    feat = jnp.mean(x_ref[...].astype(jnp.float32), axis=1)          # [N, C]
    o_ref[...] = jnp.dot(feat.astype(w_ref.dtype), w_ref[...],
                         preferred_element_type=jnp.float32) + b_ref[...]


# ---------------------------------------------------------------------------
# Pallas-call wrappers
# ---------------------------------------------------------------------------
def fused_conv_gemm(patches, w, bias, residual=None, relu=True, tm=DEFAULT_TM):
    """patches: [M, K] bf16; w: [K, 128] bf16 (scale folded); bias: [1, 128] f32;
    residual: optional [M, 128] bf16.  Returns [M, 128] bf16."""
    M, K = patches.shape
    CP = w.shape[1]
    tm = min(tm, _round_up(M, 8))
    M_pad = _round_up(M, tm)
    if M_pad != M:
        patches = jnp.pad(patches, ((0, M_pad - M), (0, 0)))
        if residual is not None:
            residual = jnp.pad(residual, ((0, M_pad - M), (0, 0)))
    grid = (M_pad // tm,)

    in_specs = [
        pl.BlockSpec((tm, K), lambda i: (i, 0)),     # patch tile (pipelined)
        pl.BlockSpec((K, CP), lambda i: (0, 0)),     # weight: grid-invariant -> resident
        pl.BlockSpec((1, CP), lambda i: (0, 0)),     # bias:   grid-invariant -> resident
    ]
    args = [patches, w, bias]
    if residual is None:
        kernel = functools.partial(_conv_gemm_kernel, relu=relu)
    else:
        kernel = functools.partial(_conv_gemm_res_kernel, relu=relu)
        in_specs.append(pl.BlockSpec((tm, CP), lambda i: (i, 0)))
        args.append(residual)

    flops = 2 * M_pad * K * CP
    bytes_accessed = (patches.size * patches.dtype.itemsize
                      + w.size * w.dtype.itemsize
                      + bias.size * bias.dtype.itemsize
                      + M_pad * CP * 2
                      + (residual.size * residual.dtype.itemsize
                         if residual is not None else 0))

    out = pl.pallas_call(
        kernel,
        out_shape=jax.ShapeDtypeStruct((M_pad, CP), COMPUTE_DTYPE),
        grid=grid,
        in_specs=in_specs,
        out_specs=pl.BlockSpec((tm, CP), lambda i: (i, 0)),
        compiler_params=pltpu.CompilerParams(
            dimension_semantics=("parallel",),
            vmem_limit_bytes=32 * 1024 * 1024),
        cost_estimate=pl.CostEstimate(flops=flops, transcendentals=0,
                                      bytes_accessed=bytes_accessed),
    )(*args)
    return out[:M]


def head(x_nhwc, w_lin, b_lin, num_classes):
    N, H, W, C = x_nhwc.shape
    x3 = x_nhwc.reshape(N, H * W, C)
    out = pl.pallas_call(
        _head_kernel,
        out_shape=jax.ShapeDtypeStruct((N, LANE), jnp.float32),
        grid=(1,),
        in_specs=[
            pl.BlockSpec((N, H * W, C), lambda i: (0, 0, 0)),
            pl.BlockSpec((C, LANE), lambda i: (0, 0)),
            pl.BlockSpec((1, LANE), lambda i: (0, 0)),
        ],
        out_specs=pl.BlockSpec((N, LANE), lambda i: (0, 0)),
    )(x3, w_lin, b_lin)
    return out[:, :num_classes]


# ---------------------------------------------------------------------------
# Glue (im2col, shortcut, parameter prep)
# ---------------------------------------------------------------------------
def im2col(x, kh, kw, stride, pad):
    # x: [N, H, W, C] -> patches [N*OH*OW, kh*kw*C] with (kh, kw, C) ordering.
    N, H, W, C = x.shape
    xp = jnp.pad(x, ((0, 0), (pad, pad), (pad, pad), (0, 0)))
    OH = (H + 2 * pad - kh) // stride + 1
    OW = (W + 2 * pad - kw) // stride + 1
    cols = []
    for i in range(kh):
        for j in range(kw):
            cols.append(xp[:, i:i + stride * OH:stride, j:j + stride * OW:stride, :])
    patches = jnp.stack(cols, axis=3)                    # [N, OH, OW, kh*kw, C]
    return patches.reshape(N * OH * OW, kh * kw * C), (N, OH, OW)


def conv_bn_relu(x, conv, stride, residual=None, relu=True):
    kh, kw = conv["kh"], conv["kw"]
    pad = (kh - 1) // 2                                  # "same" padding for odd k
    patches, (N, OH, OW) = im2col(x, kh, kw, stride, pad)
    K = patches.shape[1]
    if conv["k_pad"] != K:                               # sublane-align K (conv1: 27->32)
        patches = jnp.pad(patches, ((0, 0), (0, conv["k_pad"] - K)))
    res = None
    if residual is not None:
        res = residual.reshape(N * OH * OW, residual.shape[-1])
    out = fused_conv_gemm(patches, conv["w"], conv["b"], res, relu)
    return out[:, :conv["cout"]].reshape(N, OH, OW, conv["cout"])


def basic_block(x, bp, stride):
    in_c = x.shape[-1]
    planes = bp["conv1"]["cout"]
    h = conv_bn_relu(x, bp["conv1"], stride=stride, relu=True)
    if stride != 1 or in_c != planes:
        # Option-A shortcut: spatial subsample (only when strided) + zero channel
        # padding; then pad to the lane-dense 128-channel residual layout.
        sc = x[:, ::stride, ::stride, :]
        pad_lo = planes // 4
        sc = jnp.pad(sc, ((0, 0), (0, 0), (0, 0), (pad_lo, LANE - in_c - pad_lo)))
    else:
        sc = jnp.pad(x, ((0, 0), (0, 0), (0, 0), (0, LANE - in_c)))
    return conv_bn_relu(h, bp["conv2"], stride=1, residual=sc, relu=True)


def resnet_forward(x_nchw, params):
    x = jnp.transpose(x_nchw, (0, 2, 3, 1)).astype(COMPUTE_DTYPE)   # NCHW -> NHWC
    out = conv_bn_relu(x, params["conv1"], stride=1, relu=True)
    for layer_name, stride0 in (("layer1", 1), ("layer2", 2), ("layer3", 2)):
        for bi, bp in enumerate(params[layer_name]):
            out = basic_block(out, bp, stride0 if bi == 0 else 1)
    return head(out, params["linear_w"], params["linear_b"], params["num_classes"])


# ---------------------------------------------------------------------------
# Deterministic parameter initialization (kaiming_normal, eval-mode BN),
# pre-folded / pre-padded into the kernel-friendly layout.
# ---------------------------------------------------------------------------
def _kaiming_conv(key, cout, cin, kh=3, kw=3):
    std = (2.0 / (cin * kh * kw)) ** 0.5
    return jax.random.normal(key, (cout, cin, kh, kw), jnp.float32) * std


def _bn_stats(cout):
    gamma = jnp.ones((cout,), jnp.float32)
    beta = jnp.zeros((cout,), jnp.float32)
    mean = jnp.zeros((cout,), jnp.float32)
    var = jnp.ones((cout,), jnp.float32)
    return gamma, beta, mean, var


def _prep_conv(w_pt, gamma, beta, mean, var, eps=1e-5):
    # w_pt: PyTorch conv weight [Cout, Cin, KH, KW].  Folds BN scale into the
    # weight, pads K to a multiple of 8 and Cout to 128 lanes, casts to bf16.
    cout, cin, kh, kw = w_pt.shape
    scale = gamma / jnp.sqrt(var + eps)
    bias = beta - mean * scale
    k = kh * kw * cin
    w2 = jnp.transpose(w_pt, (2, 3, 1, 0)).reshape(k, cout) * scale[None, :]
    k_pad = _round_up(k, 8)
    w2 = jnp.pad(w2, ((0, k_pad - k), (0, LANE - cout)))
    b2 = jnp.pad(bias, (0, LANE - cout)).reshape(1, LANE).astype(jnp.float32)
    return {"w": w2.astype(COMPUTE_DTYPE), "b": b2,
            "kh": kh, "kw": kw, "cin": cin, "cout": cout, "k_pad": k_pad}


def make_params(key, num_blocks=(1, 1, 1), num_classes=10):
    n_keys = 4 + 2 * sum(num_blocks)
    keys = iter(jax.random.split(key, n_keys))
    params = {"num_classes": num_classes}
    params["conv1"] = _prep_conv(_kaiming_conv(next(keys), 16, 3), *_bn_stats(16))

    in_planes = 16
    for li, (layer_name, planes) in enumerate((("layer1", 16),
                                               ("layer2", 32),
                                               ("layer3", 64))):
        blocks = []
        for _ in range(num_blocks[li]):
            bp = {
                "conv1": _prep_conv(_kaiming_conv(next(keys), planes, in_planes),
                                    *_bn_stats(planes)),
                "conv2": _prep_conv(_kaiming_conv(next(keys), planes, planes),
                                    *_bn_stats(planes)),
            }
            blocks.append(bp)
            in_planes = planes
        params[layer_name] = blocks

    lin_std = (2.0 / 64.0) ** 0.5
    w_lin_pt = jax.random.normal(next(keys), (num_classes, 64), jnp.float32) * lin_std
    params["linear_w"] = jnp.pad(
        w_lin_pt.T, ((0, 0), (0, LANE - num_classes))).astype(COMPUTE_DTYPE)
    bound = 1.0 / (64.0 ** 0.5)
    b_lin = jax.random.uniform(next(keys), (num_classes,), jnp.float32, -bound, bound)
    params["linear_b"] = jnp.pad(b_lin, (0, LANE - num_classes)).reshape(1, LANE)
    return params


# ---------------------------------------------------------------------------
if __name__ == "__main__":
    key = jax.random.PRNGKey(0)
    pkey, xkey = jax.random.split(key)
    params = make_params(pkey, num_blocks=(1, 1, 1), num_classes=10)

    # Small CIFAR-like input: batch=2, 3 channels, 16x16 spatial (NCHW).
    x = jax.random.normal(xkey, (2, 3, 16, 16), jnp.float32)

    # Close over params so python-int metadata stays static under jit.
    fwd = jax.jit(functools.partial(resnet_forward, params=params))
    logits = fwd(x)
    jax.block_until_ready(logits)
    assert logits.shape == (2, 10)
    print("KERNEL_OK")
</pallas_src>

<mosaic_0001>
module attributes {stable_mosaic.version = 11 : i64} {
  func.func @_conv_gemm_kernel(%arg0: i32, %arg1: memref<256x32xbf16, #tpu.memory_space<vmem>>, %arg2: memref<32x128xbf16, #tpu.memory_space<vmem>>, %arg3: memref<1x128xf32, #tpu.memory_space<vmem>>, %arg4: memref<256x128xbf16, #tpu.memory_space<vmem>>) attributes {dimension_semantics = [#tpu.dimension_semantics<parallel>], iteration_bounds = array<i64: 2>, scalar_prefetch = 0 : i64, scratch_operands = 0 : i64, tpu.core_type = #tpu.core_type<tc>, window_params = [{transform_indices = @transform_0, window_bounds = array<i64: 256, 32>}, {pipeline_mode = #tpu.pipeline_mode<synchronous>, transform_indices = @transform_1, window_bounds = array<i64: 32, 128>}, {pipeline_mode = #tpu.pipeline_mode<synchronous>, transform_indices = @transform_2, window_bounds = array<i64: 1, 128>}, {transform_indices = @transform_3, window_bounds = array<i64: 256, 128>}]} {
    %c0 = arith.constant 0 : index
    %c0_0 = arith.constant 0 : index
    %0 = vector.load %arg1[%c0, %c0_0] : memref<256x32xbf16, #tpu.memory_space<vmem>>, vector<256x32xbf16>
    %c0_1 = arith.constant 0 : index
    %c0_2 = arith.constant 0 : index
    %1 = vector.load %arg2[%c0_1, %c0_2] : memref<32x128xbf16, #tpu.memory_space<vmem>>, vector<32x128xbf16>
    %cst = arith.constant dense<0.000000e+00> : vector<256x128xf32>
    %2 = tpu.matmul %0, %1, %cst {dimension_numbers = #tpu.dot_dimension_numbers<[1], [0], [0], [1], [0, 0, 1, 1], [], []>} : vector<256x32xbf16>, vector<32x128xbf16>, vector<256x128xf32> -> vector<256x128xf32>
    %c0_3 = arith.constant 0 : index
    %c0_4 = arith.constant 0 : index
    %3 = vector.load %arg3[%c0_3, %c0_4] : memref<1x128xf32, #tpu.memory_space<vmem>>, vector<1x128xf32>
    %4 = vector.broadcast %3 : vector<1x128xf32> to vector<256x128xf32>
    %5 = arith.addf %2, %4 : vector<256x128xf32>
    %cst_5 = arith.constant 0.000000e+00 : f32
    %6 = vector.broadcast %cst_5 : f32 to vector<256x128xf32>
    %7 = arith.maximumf %5, %6 : vector<256x128xf32>
    %8 = arith.truncf %7 : vector<256x128xf32> to vector<256x128xbf16>
    %c0_6 = arith.constant 0 : index
    %c0_7 = arith.constant 0 : index
    %9 = vector.load %arg4[%c0_6, %c0_7] : memref<256x128xbf16, #tpu.memory_space<vmem>>, vector<256x128xbf16>
    tpu.vector_store %arg4[%c0_6, %c0_7], %8 {strides = array<i32>} : memref<256x128xbf16, #tpu.memory_space<vmem>>, vector<256x128xbf16>,
    return
  }
  func.func @transform_0(%arg0: i32) -> (i32, i32) {
    %c0_i32 = arith.constant 0 : i32
    %c0_i32_0 = arith.constant 0 : i32
    return %arg0, %c0_i32 : i32, i32
  }
  func.func @transform_1(%arg0: i32) -> (i32, i32) {
    %c0_i32 = arith.constant 0 : i32
    %c0_i32_0 = arith.constant 0 : i32
    %c0_i32_1 = arith.constant 0 : i32
    return %c0_i32, %c0_i32_0 : i32, i32
  }
  func.func @transform_2(%arg0: i32) -> (i32, i32) {
    %c0_i32 = arith.constant 0 : i32
    %c0_i32_0 = arith.constant 0 : i32
    %c0_i32_1 = arith.constant 0 : i32
    return %c0_i32, %c0_i32_0 : i32, i32
  }
  func.func @transform_3(%arg0: i32) -> (i32, i32) {
    %c0_i32 = arith.constant 0 : i32
    %c0_i32_0 = arith.constant 0 : i32
    return %arg0, %c0_i32 : i32, i32
  }
}

module attributes {stable_mosaic.version = 11 : i64} {
  func.func @_conv_gemm_kernel(%arg0: i32, %arg1: memref<256x144xbf16, #tpu.memory_space<vmem>>, %arg2: memref<144x128xbf16, #tpu.memory_space<vmem>>, %arg3: memref<1x128xf32, #tpu.memory_space<vmem>>, %arg4: memref<256x128xbf16, #tpu.memory_space<vmem>>) attributes {dimension_semantics = [#tpu.dimension_semantics<parallel>], iteration_bounds = array<i64: 2>, scalar_prefetch = 0 : i64, scratch_operands = 0 : i64, tpu.core_type = #tpu.core_type<tc>, window_params = [{transform_indices = @transform_0, window_bounds = array<i64: 256, 144>}, {pipeline_mode = #tpu.pipeline_mode<synchronous>, transform_indices = @transform_1, window_bounds = array<i64: 144, 128>}, {pipeline_mode = #tpu.pipeline_mode<synchronous>, transform_indices = @transform_2, window_bounds = array<i64: 1, 128>}, {transform_indices = @transform_3, window_bounds = array<i64: 256, 128>}]} {
    %c0 = arith.constant 0 : index
    %c0_0 = arith.constant 0 : index
    %0 = vector.load %arg1[%c0, %c0_0] : memref<256x144xbf16, #tpu.memory_space<vmem>>, vector<256x144xbf16>
    %c0_1 = arith.constant 0 : index
    %c0_2 = arith.constant 0 : index
    %1 = vector.load %arg2[%c0_1, %c0_2] : memref<144x128xbf16, #tpu.memory_space<vmem>>, vector<144x128xbf16>
    %cst = arith.constant dense<0.000000e+00> : vector<256x128xf32>
    %2 = tpu.matmul %0, %1, %cst {dimension_numbers = #tpu.dot_dimension_numbers<[1], [0], [0], [1], [0, 0, 1, 1], [], []>} : vector<256x144xbf16>, vector<144x128xbf16>, vector<256x128xf32> -> vector<256x128xf32>
    %c0_3 = arith.constant 0 : index
    %c0_4 = arith.constant 0 : index
    %3 = vector.load %arg3[%c0_3, %c0_4] : memref<1x128xf32, #tpu.memory_space<vmem>>, vector<1x128xf32>
    %4 = vector.broadcast %3 : vector<1x128xf32> to vector<256x128xf32>
    %5 = arith.addf %2, %4 : vector<256x128xf32>
    %cst_5 = arith.constant 0.000000e+00 : f32
    %6 = vector.broadcast %cst_5 : f32 to vector<256x128xf32>
    %7 = arith.maximumf %5, %6 : vector<256x128xf32>
    %8 = arith.truncf %7 : vector<256x128xf32> to vector<256x128xbf16>
    %c0_6 = arith.constant 0 : index
    %c0_7 = arith.constant 0 : index
    %9 = vector.load %arg4[%c0_6, %c0_7] : memref<256x128xbf16, #tpu.memory_space<vmem>>, vector<256x128xbf16>
    tpu.vector_store %arg4[%c0_6, %c0_7], %8 {strides = array<i32>} : memref<256x128xbf16, #tpu.memory_space<vmem>>, vector<256x128xbf16>,
    return
  }
  func.func @transform_0(%arg0: i32) -> (i32, i32) {
    %c0_i32 = arith.constant 0 : i32
    %c0_i32_0 = arith.constant 0 : i32
    return %arg0, %c0_i32 : i32, i32
  }
  func.func @transform_1(%arg0: i32) -> (i32, i32) {
    %c0_i32 = arith.constant 0 : i32
    %c0_i32_0 = arith.constant 0 : i32
    %c0_i32_1 = arith.constant 0 : i32
    return %c0_i32, %c0_i32_0 : i32, i32
  }
  func.func @transform_2(%arg0: i32) -> (i32, i32) {
    %c0_i32 = arith.constant 0 : i32
    %c0_i32_0 = arith.constant 0 : i32
    %c0_i32_1 = arith.constant 0 : i32
    return %c0_i32, %c0_i32_0 : i32, i32
  }
  func.func @transform_3(%arg0: i32) -> (i32, i32) {
    %c0_i32 = arith.constant 0 : i32
    %c0_i32_0 = arith.constant 0 : i32
    return %arg0, %c0_i32 : i32, i32
  }
}

module attributes {stable_mosaic.version = 11 : i64} {
  func.func @_conv_gemm_res_kernel(%arg0: i32, %arg1: memref<256x144xbf16, #tpu.memory_space<vmem>>, %arg2: memref<144x128xbf16, #tpu.memory_space<vmem>>, %arg3: memref<1x128xf32, #tpu.memory_space<vmem>>, %arg4: memref<256x128xbf16, #tpu.memory_space<vmem>>, %arg5: memref<256x128xbf16, #tpu.memory_space<vmem>>) attributes {dimension_semantics = [#tpu.dimension_semantics<parallel>], iteration_bounds = array<i64: 2>, scalar_prefetch = 0 : i64, scratch_operands = 0 : i64, tpu.core_type = #tpu.core_type<tc>, window_params = [{transform_indices = @transform_0, window_bounds = array<i64: 256, 144>}, {pipeline_mode = #tpu.pipeline_mode<synchronous>, transform_indices = @transform_1, window_bounds = array<i64: 144, 128>}, {pipeline_mode = #tpu.pipeline_mode<synchronous>, transform_indices = @transform_2, window_bounds = array<i64: 1, 128>}, {transform_indices = @transform_3, window_bounds = array<i64: 256, 128>}, {transform_indices = @transform_4, window_bounds = array<i64: 256, 128>}]} {
    %c0 = arith.constant 0 : index
    %c0_0 = arith.constant 0 : index
    %0 = vector.load %arg1[%c0, %c0_0] : memref<256x144xbf16, #tpu.memory_space<vmem>>, vector<256x144xbf16>
    %c0_1 = arith.constant 0 : index
    %c0_2 = arith.constant 0 : index
    %1 = vector.load %arg2[%c0_1, %c0_2] : memref<144x128xbf16, #tpu.memory_space<vmem>>, vector<144x128xbf16>
    %cst = arith.constant dense<0.000000e+00> : vector<256x128xf32>
    %2 = tpu.matmul %0, %1, %cst {dimension_numbers = #tpu.dot_dimension_numbers<[1], [0], [0], [1], [0, 0, 1, 1], [], []>} : vector<256x144xbf16>, vector<144x128xbf16>, vector<256x128xf32> -> vector<256x128xf32>
    %c0_3 = arith.constant 0 : index
    %c0_4 = arith.constant 0 : index
    %3 = vector.load %arg3[%c0_3, %c0_4] : memref<1x128xf32, #tpu.memory_space<vmem>>, vector<1x128xf32>
    %4 = vector.broadcast %3 : vector<1x128xf32> to vector<256x128xf32>
    %5 = arith.addf %2, %4 : vector<256x128xf32>
    %c0_5 = arith.constant 0 : index
    %c0_6 = arith.constant 0 : index
    %6 = vector.load %arg4[%c0_5, %c0_6] : memref<256x128xbf16, #tpu.memory_space<vmem>>, vector<256x128xbf16>
    %7 = arith.extf %6 : vector<256x128xbf16> to vector<256x128xf32>
    %8 = arith.addf %5, %7 : vector<256x128xf32>
    %cst_7 = arith.constant 0.000000e+00 : f32
    %9 = vector.broadcast %cst_7 : f32 to vector<256x128xf32>
    %10 = arith.maximumf %8, %9 : vector<256x128xf32>
    %11 = arith.truncf %10 : vector<256x128xf32> to vector<256x128xbf16>
    %c0_8 = arith.constant 0 : index
    %c0_9 = arith.constant 0 : index
    %12 = vector.load %arg5[%c0_8, %c0_9] : memref<256x128xbf16, #tpu.memory_space<vmem>>, vector<256x128xbf16>
    tpu.vector_store %arg5[%c0_8, %c0_9], %11 {strides = array<i32>} : memref<256x128xbf16, #tpu.memory_space<vmem>>, vector<256x128xbf16>,
    return
  }
  func.func @transform_0(%arg0: i32) -> (i32, i32) {
    %c0_i32 = arith.constant 0 : i32
    %c0_i32_0 = arith.constant 0 : i32
    return %arg0, %c0_i32 : i32, i32
  }
  func.func @transform_1(%arg0: i32) -> (i32, i32) {
    %c0_i32 = arith.constant 0 : i32
    %c0_i32_0 = arith.constant 0 : i32
    %c0_i32_1 = arith.constant 0 : i32
    return %c0_i32, %c0_i32_0 : i32, i32
  }
  func.func @transform_2(%arg0: i32) -> (i32, i32) {
    %c0_i32 = arith.constant 0 : i32
    %c0_i32_0 = arith.constant 0 : i32
    %c0_i32_1 = arith.constant 0 : i32
    return %c0_i32, %c0_i32_0 : i32, i32
  }
  func.func @transform_3(%arg0: i32) -> (i32, i32) {
    %c0_i32 = arith.constant 0 : i32
    %c0_i32_0 = arith.constant 0 : i32
    return %arg0, %c0_i32 : i32, i32
  }
  func.func @transform_4(%arg0: i32) -> (i32, i32) {
    %c0_i32 = arith.constant 0 : i32
    %c0_i32_0 = arith.constant 0 : i32
    return %arg0, %c0_i32 : i32, i32
  }
}

module attributes {stable_mosaic.version = 11 : i64} {
  func.func @_conv_gemm_kernel(%arg0: i32, %arg1: memref<128x144xbf16, #tpu.memory_space<vmem>>, %arg2: memref<144x128xbf16, #tpu.memory_space<vmem>>, %arg3: memref<1x128xf32, #tpu.memory_space<vmem>>, %arg4: memref<128x128xbf16, #tpu.memory_space<vmem>>) attributes {dimension_semantics = [#tpu.dimension_semantics<parallel>], iteration_bounds = array<i64: 1>, scalar_prefetch = 0 : i64, scratch_operands = 0 : i64, tpu.core_type = #tpu.core_type<tc>, window_params = [{transform_indices = @transform_0, window_bounds = array<i64: 128, 144>}, {pipeline_mode = #tpu.pipeline_mode<synchronous>, transform_indices = @transform_1, window_bounds = array<i64: 144, 128>}, {pipeline_mode = #tpu.pipeline_mode<synchronous>, transform_indices = @transform_2, window_bounds = array<i64: 1, 128>}, {transform_indices = @transform_3, window_bounds = array<i64: 128, 128>}]} {
    %c0 = arith.constant 0 : index
    %c0_0 = arith.constant 0 : index
    %0 = vector.load %arg1[%c0, %c0_0] : memref<128x144xbf16, #tpu.memory_space<vmem>>, vector<128x144xbf16>
    %c0_1 = arith.constant 0 : index
    %c0_2 = arith.constant 0 : index
    %1 = vector.load %arg2[%c0_1, %c0_2] : memref<144x128xbf16, #tpu.memory_space<vmem>>, vector<144x128xbf16>
    %cst = arith.constant dense<0.000000e+00> : vector<128x128xf32>
    %2 = tpu.matmul %0, %1, %cst {dimension_numbers = #tpu.dot_dimension_numbers<[1], [0], [0], [1], [0, 0, 1, 1], [], []>} : vector<128x144xbf16>, vector<144x128xbf16>, vector<128x128xf32> -> vector<128x128xf32>
    %c0_3 = arith.constant 0 : index
    %c0_4 = arith.constant 0 : index
    %3 = vector.load %arg3[%c0_3, %c0_4] : memref<1x128xf32, #tpu.memory_space<vmem>>, vector<1x128xf32>
    %4 = vector.broadcast %3 : vector<1x128xf32> to vector<128x128xf32>
    %5 = arith.addf %2, %4 : vector<128x128xf32>
    %cst_5 = arith.constant 0.000000e+00 : f32
    %6 = vector.broadcast %cst_5 : f32 to vector<128x128xf32>
    %7 = arith.maximumf %5, %6 : vector<128x128xf32>
    %8 = arith.truncf %7 : vector<128x128xf32> to vector<128x128xbf16>
    %c0_6 = arith.constant 0 : index
    %c0_7 = arith.constant 0 : index
    %9 = vector.load %arg4[%c0_6, %c0_7] : memref<128x128xbf16, #tpu.memory_space<vmem>>, vector<128x128xbf16>
    tpu.vector_store %arg4[%c0_6, %c0_7], %8 {strides = array<i32>} : memref<128x128xbf16, #tpu.memory_space<vmem>>, vector<128x128xbf16>,
    return
  }
  func.func @transform_0(%arg0: i32) -> (i32, i32) {
    %c0_i32 = arith.constant 0 : i32
    %c0_i32_0 = arith.constant 0 : i32
    return %arg0, %c0_i32 : i32, i32
  }
  func.func @transform_1(%arg0: i32) -> (i32, i32) {
    %c0_i32 = arith.constant 0 : i32
    %c0_i32_0 = arith.constant 0 : i32
    %c0_i32_1 = arith.constant 0 : i32
    return %c0_i32, %c0_i32_0 : i32, i32
  }
  func.func @transform_2(%arg0: i32) -> (i32, i32) {
    %c0_i32 = arith.constant 0 : i32
    %c0_i32_0 = arith.constant 0 : i32
    %c0_i32_1 = arith.constant 0 : i32
    return %c0_i32, %c0_i32_0 : i32, i32
  }
  func.func @transform_3(%arg0: i32) -> (i32, i32) {
    %c0_i32 = arith.constant 0 : i32
    %c0_i32_0 = arith.constant 0 : i32
    return %arg0, %c0_i32 : i32, i32
  }
}

module attributes {stable_mosaic.version = 11 : i64} {
  func.func @_conv_gemm_res_kernel(%arg0: i32, %arg1: memref<128x288xbf16, #tpu.memory_space<vmem>>, %arg2: memref<288x128xbf16, #tpu.memory_space<vmem>>, %arg3: memref<1x128xf32, #tpu.memory_space<vmem>>, %arg4: memref<128x128xbf16, #tpu.memory_space<vmem>>, %arg5: memref<128x128xbf16, #tpu.memory_space<vmem>>) attributes {dimension_semantics = [#tpu.dimension_semantics<parallel>], iteration_bounds = array<i64: 1>, scalar_prefetch = 0 : i64, scratch_operands = 0 : i64, tpu.core_type = #tpu.core_type<tc>, window_params = [{transform_indices = @transform_0, window_bounds = array<i64: 128, 288>}, {pipeline_mode = #tpu.pipeline_mode<synchronous>, transform_indices = @transform_1, window_bounds = array<i64: 288, 128>}, {pipeline_mode = #tpu.pipeline_mode<synchronous>, transform_indices = @transform_2, window_bounds = array<i64: 1, 128>}, {transform_indices = @transform_3, window_bounds = array<i64: 128, 128>}, {transform_indices = @transform_4, window_bounds = array<i64: 128, 128>}]} {
    %c0 = arith.constant 0 : index
    %c0_0 = arith.constant 0 : index
    %0 = vector.load %arg1[%c0, %c0_0] : memref<128x288xbf16, #tpu.memory_space<vmem>>, vector<128x288xbf16>
    %c0_1 = arith.constant 0 : index
    %c0_2 = arith.constant 0 : index
    %1 = vector.load %arg2[%c0_1, %c0_2] : memref<288x128xbf16, #tpu.memory_space<vmem>>, vector<288x128xbf16>
    %cst = arith.constant dense<0.000000e+00> : vector<128x128xf32>
    %2 = tpu.matmul %0, %1, %cst {dimension_numbers = #tpu.dot_dimension_numbers<[1], [0], [0], [1], [0, 0, 1, 1], [], []>} : vector<128x288xbf16>, vector<288x128xbf16>, vector<128x128xf32> -> vector<128x128xf32>
    %c0_3 = arith.constant 0 : index
    %c0_4 = arith.constant 0 : index
    %3 = vector.load %arg3[%c0_3, %c0_4] : memref<1x128xf32, #tpu.memory_space<vmem>>, vector<1x128xf32>
    %4 = vector.broadcast %3 : vector<1x128xf32> to vector<128x128xf32>
    %5 = arith.addf %2, %4 : vector<128x128xf32>
    %c0_5 = arith.constant 0 : index
    %c0_6 = arith.constant 0 : index
    %6 = vector.load %arg4[%c0_5, %c0_6] : memref<128x128xbf16, #tpu.memory_space<vmem>>, vector<128x128xbf16>
    %7 = arith.extf %6 : vector<128x128xbf16> to vector<128x128xf32>
    %8 = arith.addf %5, %7 : vector<128x128xf32>
    %cst_7 = arith.constant 0.000000e+00 : f32
    %9 = vector.broadcast %cst_7 : f32 to vector<128x128xf32>
    %10 = arith.maximumf %8, %9 : vector<128x128xf32>
    %11 = arith.truncf %10 : vector<128x128xf32> to vector<128x128xbf16>
    %c0_8 = arith.constant 0 : index
    %c0_9 = arith.constant 0 : index
    %12 = vector.load %arg5[%c0_8, %c0_9] : memref<128x128xbf16, #tpu.memory_space<vmem>>, vector<128x128xbf16>
    tpu.vector_store %arg5[%c0_8, %c0_9], %11 {strides = array<i32>} : memref<128x128xbf16, #tpu.memory_space<vmem>>, vector<128x128xbf16>,
    return
  }
  func.func @transform_0(%arg0: i32) -> (i32, i32) {
    %c0_i32 = arith.constant 0 : i32
    %c0_i32_0 = arith.constant 0 : i32
    return %arg0, %c0_i32 : i32, i32
  }
  func.func @transform_1(%arg0: i32) -> (i32, i32) {
    %c0_i32 = arith.constant 0 : i32
    %c0_i32_0 = arith.constant 0 : i32
    %c0_i32_1 = arith.constant 0 : i32
    return %c0_i32, %c0_i32_0 : i32, i32
  }
  func.func @transform_2(%arg0: i32) -> (i32, i32) {
    %c0_i32 = arith.constant 0 : i32
    %c0_i32_0 = arith.constant 0 : i32
    %c0_i32_1 = arith.constant 0 : i32
    return %c0_i32, %c0_i32_0 : i32, i32
  }
  func.func @transform_3(%arg0: i32) -> (i32, i32) {
    %c0_i32 = arith.constant 0 : i32
    %c0_i32_0 = arith.constant 0 : i32
    return %arg0, %c0_i32 : i32, i32
  }
  func.func @transform_4(%arg0: i32) -> (i32, i32) {
    %c0_i32 = arith.constant 0 : i32
    %c0_i32_0 = arith.constant 0 : i32
    return %arg0, %c0_i32 : i32, i32
  }
}

module attributes {stable_mosaic.version = 11 : i64} {
  func.func @_conv_gemm_kernel(%arg0: i32, %arg1: memref<32x288xbf16, #tpu.memory_space<vmem>>, %arg2: memref<288x128xbf16, #tpu.memory_space<vmem>>, %arg3: memref<1x128xf32, #tpu.memory_space<vmem>>, %arg4: memref<32x128xbf16, #tpu.memory_space<vmem>>) attributes {dimension_semantics = [#tpu.dimension_semantics<parallel>], iteration_bounds = array<i64: 1>, scalar_prefetch = 0 : i64, scratch_operands = 0 : i64, tpu.core_type = #tpu.core_type<tc>, window_params = [{transform_indices = @transform_0, window_bounds = array<i64: 32, 288>}, {pipeline_mode = #tpu.pipeline_mode<synchronous>, transform_indices = @transform_1, window_bounds = array<i64: 288, 128>}, {pipeline_mode = #tpu.pipeline_mode<synchronous>, transform_indices = @transform_2, window_bounds = array<i64: 1, 128>}, {transform_indices = @transform_3, window_bounds = array<i64: 32, 128>}]} {
    %c0 = arith.constant 0 : index
    %c0_0 = arith.constant 0 : index
    %0 = vector.load %arg1[%c0, %c0_0] : memref<32x288xbf16, #tpu.memory_space<vmem>>, vector<32x288xbf16>
    %c0_1 = arith.constant 0 : index
    %c0_2 = arith.constant 0 : index
    %1 = vector.load %arg2[%c0_1, %c0_2] : memref<288x128xbf16, #tpu.memory_space<vmem>>, vector<288x128xbf16>
    %cst = arith.constant dense<0.000000e+00> : vector<32x128xf32>
    %2 = tpu.matmul %0, %1, %cst {dimension_numbers = #tpu.dot_dimension_numbers<[1], [0], [0], [1], [0, 0, 1, 1], [], []>} : vector<32x288xbf16>, vector<288x128xbf16>, vector<32x128xf32> -> vector<32x128xf32>
    %c0_3 = arith.constant 0 : index
    %c0_4 = arith.constant 0 : index
    %3 = vector.load %arg3[%c0_3, %c0_4] : memref<1x128xf32, #tpu.memory_space<vmem>>, vector<1x128xf32>
    %4 = vector.broadcast %3 : vector<1x128xf32> to vector<32x128xf32>
    %5 = arith.addf %2, %4 : vector<32x128xf32>
    %cst_5 = arith.constant 0.000000e+00 : f32
    %6 = vector.broadcast %cst_5 : f32 to vector<32x128xf32>
    %7 = arith.maximumf %5, %6 : vector<32x128xf32>
    %8 = arith.truncf %7 : vector<32x128xf32> to vector<32x128xbf16>
    %c0_6 = arith.constant 0 : index
    %c0_7 = arith.constant 0 : index
    %9 = vector.load %arg4[%c0_6, %c0_7] : memref<32x128xbf16, #tpu.memory_space<vmem>>, vector<32x128xbf16>
    tpu.vector_store %arg4[%c0_6, %c0_7], %8 {strides = array<i32>} : memref<32x128xbf16, #tpu.memory_space<vmem>>, vector<32x128xbf16>,
    return
  }
  func.func @transform_0(%arg0: i32) -> (i32, i32) {
    %c0_i32 = arith.constant 0 : i32
    %c0_i32_0 = arith.constant 0 : i32
    return %arg0, %c0_i32 : i32, i32
  }
  func.func @transform_1(%arg0: i32) -> (i32, i32) {
    %c0_i32 = arith.constant 0 : i32
    %c0_i32_0 = arith.constant 0 : i32
    %c0_i32_1 = arith.constant 0 : i32
    return %c0_i32, %c0_i32_0 : i32, i32
  }
  func.func @transform_2(%arg0: i32) -> (i32, i32) {
    %c0_i32 = arith.constant 0 : i32
    %c0_i32_0 = arith.constant 0 : i32
    %c0_i32_1 = arith.constant 0 : i32
    return %c0_i32, %c0_i32_0 : i32, i32
  }
  func.func @transform_3(%arg0: i32) -> (i32, i32) {
    %c0_i32 = arith.constant 0 : i32
    %c0_i32_0 = arith.constant 0 : i32
    return %arg0, %c0_i32 : i32, i32
  }
}

module attributes {stable_mosaic.version = 11 : i64} {
  func.func @_conv_gemm_res_kernel(%arg0: i32, %arg1: memref<32x576xbf16, #tpu.memory_space<vmem>>, %arg2: memref<576x128xbf16, #tpu.memory_space<vmem>>, %arg3: memref<1x128xf32, #tpu.memory_space<vmem>>, %arg4: memref<32x128xbf16, #tpu.memory_space<vmem>>, %arg5: memref<32x128xbf16, #tpu.memory_space<vmem>>) attributes {dimension_semantics = [#tpu.dimension_semantics<parallel>], iteration_bounds = array<i64: 1>, scalar_prefetch = 0 : i64, scratch_operands = 0 : i64, tpu.core_type = #tpu.core_type<tc>, window_params = [{transform_indices = @transform_0, window_bounds = array<i64: 32, 576>}, {pipeline_mode = #tpu.pipeline_mode<synchronous>, transform_indices = @transform_1, window_bounds = array<i64: 576, 128>}, {pipeline_mode = #tpu.pipeline_mode<synchronous>, transform_indices = @transform_2, window_bounds = array<i64: 1, 128>}, {transform_indices = @transform_3, window_bounds = array<i64: 32, 128>}, {transform_indices = @transform_4, window_bounds = array<i64: 32, 128>}]} {
    %c0 = arith.constant 0 : index
    %c0_0 = arith.constant 0 : index
    %0 = vector.load %arg1[%c0, %c0_0] : memref<32x576xbf16, #tpu.memory_space<vmem>>, vector<32x576xbf16>
    %c0_1 = arith.constant 0 : index
    %c0_2 = arith.constant 0 : index
    %1 = vector.load %arg2[%c0_1, %c0_2] : memref<576x128xbf16, #tpu.memory_space<vmem>>, vector<576x128xbf16>
    %cst = arith.constant dense<0.000000e+00> : vector<32x128xf32>
    %2 = tpu.matmul %0, %1, %cst {dimension_numbers = #tpu.dot_dimension_numbers<[1], [0], [0], [1], [0, 0, 1, 1], [], []>} : vector<32x576xbf16>, vector<576x128xbf16>, vector<32x128xf32> -> vector<32x128xf32>
    %c0_3 = arith.constant 0 : index
    %c0_4 = arith.constant 0 : index
    %3 = vector.load %arg3[%c0_3, %c0_4] : memref<1x128xf32, #tpu.memory_space<vmem>>, vector<1x128xf32>
    %4 = vector.broadcast %3 : vector<1x128xf32> to vector<32x128xf32>
    %5 = arith.addf %2, %4 : vector<32x128xf32>
    %c0_5 = arith.constant 0 : index
    %c0_6 = arith.constant 0 : index
    %6 = vector.load %arg4[%c0_5, %c0_6] : memref<32x128xbf16, #tpu.memory_space<vmem>>, vector<32x128xbf16>
    %7 = arith.extf %6 : vector<32x128xbf16> to vector<32x128xf32>
    %8 = arith.addf %5, %7 : vector<32x128xf32>
    %cst_7 = arith.constant 0.000000e+00 : f32
    %9 = vector.broadcast %cst_7 : f32 to vector<32x128xf32>
    %10 = arith.maximumf %8, %9 : vector<32x128xf32>
    %11 = arith.truncf %10 : vector<32x128xf32> to vector<32x128xbf16>
    %c0_8 = arith.constant 0 : index
    %c0_9 = arith.constant 0 : index
    %12 = vector.load %arg5[%c0_8, %c0_9] : memref<32x128xbf16, #tpu.memory_space<vmem>>, vector<32x128xbf16>
    tpu.vector_store %arg5[%c0_8, %c0_9], %11 {strides = array<i32>} : memref<32x128xbf16, #tpu.memory_space<vmem>>, vector<32x128xbf16>,
    return
  }
  func.func @transform_0(%arg0: i32) -> (i32, i32) {
    %c0_i32 = arith.constant 0 : i32
    %c0_i32_0 = arith.constant 0 : i32
    return %arg0, %c0_i32 : i32, i32
  }
  func.func @transform_1(%arg0: i32) -> (i32, i32) {
    %c0_i32 = arith.constant 0 : i32
    %c0_i32_0 = arith.constant 0 : i32
    %c0_i32_1 = arith.constant 0 : i32
    return %c0_i32, %c0_i32_0 : i32, i32
  }
  func.func @transform_2(%arg0: i32) -> (i32, i32) {
    %c0_i32 = arith.constant 0 : i32
    %c0_i32_0 = arith.constant 0 : i32
    %c0_i32_1 = arith.constant 0 : i32
    return %c0_i32, %c0_i32_0 : i32, i32
  }
  func.func @transform_3(%arg0: i32) -> (i32, i32) {
    %c0_i32 = arith.constant 0 : i32
    %c0_i32_0 = arith.constant 0 : i32
    return %arg0, %c0_i32 : i32, i32
  }
  func.func @transform_4(%arg0: i32) -> (i32, i32) {
    %c0_i32 = arith.constant 0 : i32
    %c0_i32_0 = arith.constant 0 : i32
    return %arg0, %c0_i32 : i32, i32
  }
}

module attributes {stable_mosaic.version = 11 : i64} {
  func.func @_head_kernel(%arg0: i32, %arg1: memref<2x16x64xbf16, #tpu.memory_space<vmem>>, %arg2: memref<64x128xbf16, #tpu.memory_space<vmem>>, %arg3: memref<1x128xf32, #tpu.memory_space<vmem>>, %arg4: memref<2x128xf32, #tpu.memory_space<vmem>>) attributes {dimension_semantics = [#tpu.dimension_semantics<arbitrary>], iteration_bounds = array<i64: 1>, scalar_prefetch = 0 : i64, scratch_operands = 0 : i64, tpu.core_type = #tpu.core_type<tc>, window_params = [{pipeline_mode = #tpu.pipeline_mode<synchronous>, transform_indices = @transform_0, window_bounds = array<i64: 2, 16, 64>}, {pipeline_mode = #tpu.pipeline_mode<synchronous>, transform_indices = @transform_1, window_bounds = array<i64: 64, 128>}, {pipeline_mode = #tpu.pipeline_mode<synchronous>, transform_indices = @transform_2, window_bounds = array<i64: 1, 128>}, {pipeline_mode = #tpu.pipeline_mode<synchronous>, transform_indices = @transform_3, window_bounds = array<i64: 2, 128>}]} {
    %c0 = arith.constant 0 : index
    %c0_0 = arith.constant 0 : index
    %c0_1 = arith.constant 0 : index
    %0 = vector.load %arg1[%c0, %c0_0, %c0_1] : memref<2x16x64xbf16, #tpu.memory_space<vmem>>, vector<2x16x64xbf16>
    %1 = arith.extf %0 : vector<2x16x64xbf16> to vector<2x16x64xf32>
    %cst = arith.constant dense<0.000000e+00> : vector<2x64xf32>
    %2 = vector.multi_reduction <add>, %1, %cst [1] : vector<2x16x64xf32> to vector<2x64xf32>
    %cst_2 = arith.constant 1.600000e+01 : f32
    %3 = vector.broadcast %cst_2 : f32 to vector<2x64xf32>
    %4 = arith.divf %2, %3 : vector<2x64xf32>
    %5 = arith.truncf %4 : vector<2x64xf32> to vector<2x64xbf16>
    %c0_3 = arith.constant 0 : index
    %c0_4 = arith.constant 0 : index
    %6 = vector.load %arg2[%c0_3, %c0_4] : memref<64x128xbf16, #tpu.memory_space<vmem>>, vector<64x128xbf16>
    %cst_5 = arith.constant dense<0.000000e+00> : vector<2x128xf32>
    %7 = tpu.matmul %5, %6, %cst_5 {dimension_numbers = #tpu.dot_dimension_numbers<[1], [0], [0], [1], [0, 0, 1, 1], [], []>} : vector<2x64xbf16>, vector<64x128xbf16>, vector<2x128xf32> -> vector<2x128xf32>
    %c0_6 = arith.constant 0 : index
    %c0_7 = arith.constant 0 : index
    %8 = vector.load %arg3[%c0_6, %c0_7] : memref<1x128xf32, #tpu.memory_space<vmem>>, vector<1x128xf32>
    %9 = vector.broadcast %8 : vector<1x128xf32> to vector<2x128xf32>
    %10 = arith.addf %7, %9 : vector<2x128xf32>
    %c0_8 = arith.constant 0 : index
    %c0_9 = arith.constant 0 : index
    %11 = vector.load %arg4[%c0_8, %c0_9] : memref<2x128xf32, #tpu.memory_space<vmem>>, vector<2x128xf32>
    tpu.vector_store %arg4[%c0_8, %c0_9], %10 {strides = array<i32>} : memref<2x128xf32, #tpu.memory_space<vmem>>, vector<2x128xf32>,
    return
  }
  func.func @transform_0(%arg0: i32) -> (i32, i32, i32) {
    %c0_i32 = arith.constant 0 : i32
    %c0_i32_0 = arith.constant 0 : i32
    %c0_i32_1 = arith.constant 0 : i32
    %c0_i32_2 = arith.constant 0 : i32
    return %c0_i32, %c0_i32_0, %c0_i32_1 : i32, i32, i32
  }
  func.func @transform_1(%arg0: i32) -> (i32, i32) {
    %c0_i32 = arith.constant 0 : i32
    %c0_i32_0 = arith.constant 0 : i32
    %c0_i32_1 = arith.constant 0 : i32
    return %c0_i32, %c0_i32_0 : i32, i32
  }
  func.func @transform_2(%arg0: i32) -> (i32, i32) {
    %c0_i32 = arith.constant 0 : i32
    %c0_i32_0 = arith.constant 0 : i32
    %c0_i32_1 = arith.constant 0 : i32
    return %c0_i32, %c0_i32_0 : i32, i32
  }
  func.func @transform_3(%arg0: i32) -> (i32, i32) {
    %c0_i32 = arith.constant 0 : i32
    %c0_i32_0 = arith.constant 0 : i32
    %c0_i32_1 = arith.constant 0 : i32
    return %c0_i32, %c0_i32_0 : i32, i32
  }
}

</mosaic_0001>

<llo_original>
// kernel: resnet_forward.8
$region0: #{resnet_forward.8}
  #allocation0 [shape = 'u32[]', space=smem, size = 0x4, offset = 0x4, fixed_abs, tag = 'smem constant byte address 0x4 - core index']
  #allocation1 [shape = 'u32[72,128]{1,0:T(1,128)}', space=vmem, size = 0x9000, scoped, tag = 'internal scratch']
  %s0 = inlined_call_operand.vmem [shape: bf16[512,32], index: 0, kind: input, shape index: {}]
  %s1 = inlined_call_operand.vmem [shape: bf16[32,128], index: 1, kind: input, shape index: {}]
  %s2 = inlined_call_operand.vmem [shape: f32[1,128], index: 2, kind: input, shape index: {}]
  %s3 = inlined_call_operand.vmem [shape: bf16[512,128], index: 3, kind: output, shape index: {}]
  %s4 = sld [smem:[#allocation0]]
  $region45: #{resnet_forward.8} parent=0
    _
  %s6 = ssub.s32 1, %s4
  %s7 = scalar_select 0, %s6, %s4
  loop: start=0, step=1, limit=4
  $region2: #{resnet_forward.8} parent=0 // loop_pre_header
    _
  $region3: #{resnet_forward.8} parent=0 // loop_header
    %s9 = sphi 0, %s13
    %p10 = scmp.ge.s32.totalorder %s9, 4
    %s19 = sphi 0, %s21
    %s22 = sphi 0, %s19
    %s23 = sphi 0, %s22
    %s39 = sphi 0, %s23
    %s43 = sphi 0, %s43
    %s45 = sphi 0, %s43
    %s46 = sphi 0, %s45
    %s60 = sphi 0, %s46
    %s64 = sphi 0, %s64
    %s66 = sphi 0, %s64
    %s67 = sphi 0, %s66
    %s81 = sphi 0, %s67
    %s87 = sphi 0, %s89
    %s90 = sphi 0, %s87
    %s91 = sphi 0, %s90
    %s107 = sphi 0, %s91
  $region4: #{resnet_forward.8} parent=0 // loop_header_branch
    %12 = sbr.rel (%p10) target = $region8
  $region5: #{resnet_forward.8} parent=0 // loop_body
    %s14 = ssub.s32 %s9, 1
    %s15 = ssub.s32 %s9, 2
    %s16 = sadd.s32 %s9, 1
    %s17 = ssub.s32 %s9, %s16
    %p18 = scmp.eq.s32.totalorder %s17, 0
    %s20 = sadd.s32 %s19, 1
    %s21 = scalar_select %p18, %s19, %s20
    %p24 = pneg %p18
    %p25 = scmp.eq.s32.totalorder %s9, 1
    %p26 = por %p24, %p25
    %p27 = scmp.ne.s32.totalorder %s19, %s22
    %p28 = scmp.eq.s32.totalorder %s9, 0
    %p29 = por %p27, %p28
    %p30 = scmp.ne.s32.totalorder %s19, %s22
    %p31 = scmp.eq.s32.totalorder %s14, 1
    %p32 = por %p30, %p31
    %p33 = scmp.ne.s32.totalorder %s22, %s23
    %p34 = scmp.eq.s32.totalorder %s14, 0
    %p35 = por %p33, %p34
    %p36 = scmp.ne.s32.totalorder %s22, %s23
    %p37 = scmp.eq.s32.totalorder %s15, 1
    %p38 = por %p36, %p37
    %p40 = scmp.ne.s32.totalorder %s23, %s39
    %p41 = scmp.eq.s32.totalorder %s15, 0
    %p42 = por %p40, %p41
    %s44 = sadd.s32 %s43, 1
    %p47 = scmp.eq.s32.totalorder %s9, 1
    %p48 = scmp.ne.s32.totalorder %s43, %s45
    %p49 = scmp.eq.s32.totalorder %s9, 0
    %p50 = por %p48, %p49
    %p51 = scmp.ne.s32.totalorder %s43, %s45
    %p52 = scmp.eq.s32.totalorder %s14, 1
    %p53 = por %p51, %p52
    %p54 = scmp.ne.s32.totalorder %s45, %s46
    %p55 = scmp.eq.s32.totalorder %s14, 0
    %p56 = por %p54, %p55
    %p57 = scmp.ne.s32.totalorder %s45, %s46
    %p58 = scmp.eq.s32.totalorder %s15, 1
    %p59 = por %p57, %p58
    %p61 = scmp.ne.s32.totalorder %s46, %s60
    %p62 = scmp.eq.s32.totalorder %s15, 0
    %p63 = por %p61, %p62
    %s65 = sadd.s32 %s64, 1
    %p68 = scmp.eq.s32.totalorder %s9, 1
    %p69 = scmp.ne.s32.totalorder %s64, %s66
    %p70 = scmp.eq.s32.totalorder %s9, 0
    %p71 = por %p69, %p70
    %p72 = scmp.ne.s32.totalorder %s64, %s66
    %p73 = scmp.eq.s32.totalorder %s14, 1
    %p74 = por %p72, %p73
    %p75 = scmp.ne.s32.totalorder %s66, %s67
    %p76 = scmp.eq.s32.totalorder %s14, 0
    %p77 = por %p75, %p76
    %p78 = scmp.ne.s32.totalorder %s66, %s67
    %p79 = scmp.eq.s32.totalorder %s15, 1
    %p80 = por %p78, %p79
    %p82 = scmp.ne.s32.totalorder %s67, %s81
    %p83 = scmp.eq.s32.totalorder %s15, 0
    %p84 = por %p82, %p83
    %s85 = ssub.s32 %s9, %s16
    %p86 = scmp.eq.s32.totalorder %s85, 0
    %s88 = sadd.s32 %s87, 1
    %s89 = scalar_select %p86, %s87, %s88
    %p92 = pneg %p86
    %p93 = scmp.eq.s32.totalorder %s9, 1
    %p94 = por %p92, %p93
    %p95 = scmp.ne.s32.totalorder %s87, %s90
    %p96 = scmp.eq.s32.totalorder %s9, 0
    %p97 = por %p95, %p96
    %p98 = scmp.ne.s32.totalorder %s87, %s90
    %p99 = scmp.eq.s32.totalorder %s14, 1
    %p100 = por %p98, %p99
    %p101 = scmp.ne.s32.totalorder %s90, %s91
    %p102 = scmp.eq.s32.totalorder %s14, 0
    %p103 = por %p101, %p102
    %p104 = scmp.ne.s32.totalorder %s90, %s91
    %p105 = scmp.eq.s32.totalorder %s15, 1
    %p106 = por %p104, %p105
    %p108 = scmp.ne.s32.totalorder %s91, %s107
    %p109 = scmp.eq.s32.totalorder %s15, 0
    %p110 = por %p108, %p109
    %p111 = scmp.le.s32.totalorder 1, %s9
    %p112 = scmp.lt.s32.totalorder %s9, 3
    %p113 = pnand %p111, %p112
    %p114 = pneg %p113
    // Predicated region
    $region9: #{resnet_forward.8} parent=5 // pred_check
      _
    $region10: #{resnet_forward.8} parent=5 // pred_check_branch
      %116 = sbr.rel (%p113) target = $region12
    $region11: #{resnet_forward.8} parent=5 // pred_region
      %s117 = ssub.s32 %s9, 1
      // Predicated region
      $region13: #{resnet_forward.8} parent=11 // pred_check
        %p118 = pneg %p56
      $region14: #{resnet_forward.8} parent=11 // pred_check_branch
        %120 = sbr.rel (%p118) target = $region16
      $region15: #{resnet_forward.8} parent=11 // pred_region
        _
      $region16: #{resnet_forward.8} parent=11 // pred_fallthru
        _
      // Predicated region
      $region17: #{resnet_forward.8} parent=11 // pred_check
        %p121 = pneg %p77
      $region18: #{resnet_forward.8} parent=11 // pred_check_branch
        %123 = sbr.rel (%p121) target = $region20
      $region19: #{resnet_forward.8} parent=11 // pred_region
        _
      $region20: #{resnet_forward.8} parent=11 // pred_fallthru
        _
    $region12: #{resnet_forward.8} parent=5 // pred_fallthru
      _
    %p124 = scmp.lt.s32.totalorder %s9, 2
    // Predicated region
    $region21: #{resnet_forward.8} parent=5 // pred_check
      %p125 = pneg %p124
    $region22: #{resnet_forward.8} parent=5 // pred_check_branch
      %127 = sbr.rel (%p125) target = $region24
    $region23: #{resnet_forward.8} parent=5 // pred_region
      // Predicated region
      $region25: #{resnet_forward.8} parent=23 // pred_check
        %p128 = pneg %p29
      $region26: #{resnet_forward.8} parent=23 // pred_check_branch
        %130 = sbr.rel (%p128) target = $region28
      $region27: #{resnet_forward.8} parent=23 // pred_region
        %s131 = smul.u32 32, %s9
        %p132 = scmp.lt.s32.totalorder %s131, 63
        %s133 = scalar_select %p132, %s131, 63
        %s134 = smul.addr %s133, 4
        %s135 = scalar_lea.vmem %s0, %s134
        %s136 = smul.u32 32, %s9
      $region28: #{resnet_forward.8} parent=23 // pred_fallthru
        _
    $region24: #{resnet_forward.8} parent=5 // pred_fallthru
      _
    %p137 = scmp.le.s32.totalorder 1, %s9
    %p138 = scmp.lt.s32.totalorder %s9, 3
    %p139 = pnand %p137, %p138
    %p140 = pneg %p139
    // Predicated region
    $region29: #{resnet_forward.8} parent=5 // pred_check
      _
    $region30: #{resnet_forward.8} parent=5 // pred_check_branch
      %142 = sbr.rel (%p139) target = $region32
    $region31: #{resnet_forward.8} parent=5 // pred_region
      %s143 = ssub.s32 %s9, 1
      %s144 = smul.u32 32, %s14
      %p145 = scmp.lt.s32.totalorder %s144, 63
      %s146 = scalar_select %p145, %s144, 63
      %s147 = smul.addr %s146, 4
      %s148 = scalar_lea.vmem %s0, %s147
      %p149 = pneg %p35
      %p150 = pneg %p32
      %p151 = pneg %p56
      %p152 = pneg %p53
      %p153 = pneg %p77
      %p154 = pneg %p74
      %p155 = pneg %p103
      %p156 = pneg %p100
      %s157 = smul.u32 32, %s14
      %p158 = scmp.lt.s32.totalorder %s157, 63
      %s159 = scalar_select %p158, %s157, 63
      %s160 = smul.addr %s159, 4
      %s161 = scalar_lea.vmem %s3, %s160
      %s162 = smul.u32 32, %s14
      %p163 = scmp.lt.s32.totalorder %s162, 63
      %s164 = scalar_select %p163, %s162, 63
      %s165 = smul.addr %s164, 4
      %s166 = scalar_lea.vmem %s0, %s165
      %s167 = smul.u32 32, %s14
      %s168 = smul.u32 32, %s14
      %p169 = scmp.lt.s32.totalorder %s168, 63
      %s170 = scalar_select %p169, %s168, 63
      %s171 = smul.addr %s170, 4
      %s172 = scalar_lea.vmem %s3, %s171
      %s173 = smul.u32 32, %s14
      %v175 = vld [vmem:[%s166] sm:$0xf]
      %v176 = vld [vmem:[%s166 + $0x4] sm:$0xf]
      %v177 = vld [vmem:[%s166 + $0x8] sm:$0xf]
      %v178 = vld [vmem:[%s166 + $0xc] sm:$0xf]
      %v179 = vld [vmem:[%s166 + $0x10] sm:$0xf]
      %v180 = vld [vmem:[%s166 + $0x14] sm:$0xf]
      %v181 = vld [vmem:[%s166 + $0x18] sm:$0xf]
      %v182 = vld [vmem:[%s166 + $0x1c] sm:$0xf]
      %v183 = vld [vmem:[%s166 + $0x20] sm:$0xf]
      %v184 = vld [vmem:[%s166 + $0x24] sm:$0xf]
      %v185 = vld [vmem:[%s166 + $0x28] sm:$0xf]
      %v186 = vld [vmem:[%s166 + $0x2c] sm:$0xf]
      %v187 = vld [vmem:[%s166 + $0x30] sm:$0xf]
      %v188 = vld [vmem:[%s166 + $0x34] sm:$0xf]
      %v189 = vld [vmem:[%s166 + $0x38] sm:$0xf]
      %v190 = vld [vmem:[%s166 + $0x3c] sm:$0xf]
      %v191 = vld [vmem:[%s166 + $0x40] sm:$0xf]
      %v192 = vld [vmem:[%s166 + $0x44] sm:$0xf]
      %v193 = vld [vmem:[%s166 + $0x48] sm:$0xf]
      %v194 = vld [vmem:[%s166 + $0x4c] sm:$0xf]
      %v195 = vld [vmem:[%s166 + $0x50] sm:$0xf]
      %v196 = vld [vmem:[%s166 + $0x54] sm:$0xf]
      %v197 = vld [vmem:[%s166 + $0x58] sm:$0xf]
      %v198 = vld [vmem:[%s166 + $0x5c] sm:$0xf]
      %v199 = vld [vmem:[%s166 + $0x60] sm:$0xf]
      %v200 = vld [vmem:[%s166 + $0x64] sm:$0xf]
      %v201 = vld [vmem:[%s166 + $0x68] sm:$0xf]
      %v202 = vld [vmem:[%s166 + $0x6c] sm:$0xf]
      %v203 = vld [vmem:[%s166 + $0x70] sm:$0xf]
      %v204 = vld [vmem:[%s166 + $0x74] sm:$0xf]
      %v205 = vld [vmem:[%s166 + $0x78] sm:$0xf]
      %v206 = vld [vmem:[%s166 + $0x7c] sm:$0xf]
      %v207 = vld [vmem:[%s1] sm:$0xf]
      %v208 = vld [vmem:[%s1 + $0x4] sm:$0xf]
      %v209 = vld [vmem:[%s1 + $0x8] sm:$0xf]
      %v210 = vld [vmem:[%s1 + $0xc] sm:$0xf]
      %v211 = vld [vmem:[%s2] sm:$0x1]
      %v213 = vperm.slane %v211, 0
      %v247 = vunpack.c.l.b16 %v175
      %v248 = vunpack.c.l.b16 %v176
      %v249 = vunpack.c.l.b16 %v177
      %v250 = vunpack.c.l.b16 %v178
      %v251 = vunpack.c.l.b16 %v179
      %v252 = vunpack.c.l.b16 %v180
      %v253 = vunpack.c.l.b16 %v181
      %v254 = vunpack.c.l.b16 %v182
      %v255 = vunpack.c.l.b16 %v183
      %v256 = vunpack.c.l.b16 %v184
      %v257 = vunpack.c.l.b16 %v185
      %v258 = vunpack.c.l.b16 %v186
      %v259 = vunpack.c.l.b16 %v187
      %v260 = vunpack.c.l.b16 %v188
      %v261 = vunpack.c.l.b16 %v189
      %v262 = vunpack.c.l.b16 %v190
      %v263 = vunpack.c.l.b16 %v191
      %v264 = vunpack.c.l.b16 %v192
      %v265 = vunpack.c.l.b16 %v193
      %v266 = vunpack.c.l.b16 %v194
      %v267 = vunpack.c.l.b16 %v195
      %v268 = vunpack.c.l.b16 %v196
      %v269 = vunpack.c.l.b16 %v197
      %v270 = vunpack.c.l.b16 %v198
      %v271 = vunpack.c.l.b16 %v199
      %v272 = vunpack.c.l.b16 %v200
      %v273 = vunpack.c.l.b16 %v201
      %v274 = vunpack.c.l.b16 %v202
      %v275 = vunpack.c.l.b16 %v203
      %v276 = vunpack.c.l.b16 %v204
      %v277 = vunpack.c.l.b16 %v205
      %v278 = vunpack.c.l.b16 %v206
      %v279 = vpack.c.b16 %v248, %v247
      %v280 = vpack.c.b16 %v250, %v249
      %v281 = vpack.c.b16 %v252, %v251
      %v282 = vpack.c.b16 %v254, %v253
      %v283 = vpack.c.b16 %v256, %v255
      %v284 = vpack.c.b16 %v258, %v257
      %v285 = vpack.c.b16 %v260, %v259
      %v286 = vpack.c.b16 %v262, %v261
      %v287 = vpack.c.b16 %v264, %v263
      %v288 = vpack.c.b16 %v266, %v265
      %v289 = vpack.c.b16 %v268, %v267
      %v290 = vpack.c.b16 %v270, %v269
      %v291 = vpack.c.b16 %v272, %v271
      %v292 = vpack.c.b16 %v274, %v273
      %v293 = vpack.c.b16 %v276, %v275
      %v294 = vpack.c.b16 %v278, %v277
      %v299 = vunpack.c.l.b16 %v207
      %v300 = vunpack.c.l.b16 %v208
      %v301 = vunpack.c.l.b16 %v209
      %v302 = vunpack.c.l.b16 %v210
      %v303 = vpack.c.b16 %v300, %v299
      %v304 = vpack.c.b16 %v302, %v301
      %vm307 = vcmask 261120
      %v309 = vsel %vm307, %v279, 0
      %v312 = vsel %vm307, %v280, 0
      %v315 = vsel %vm307, %v281, 0
      %v318 = vsel %vm307, %v282, 0
      %v321 = vsel %vm307, %v283, 0
      %v324 = vsel %vm307, %v284, 0
      %v327 = vsel %vm307, %v285, 0
      %v330 = vsel %vm307, %v286, 0
      %v333 = vsel %vm307, %v287, 0
      %v336 = vsel %vm307, %v288, 0
      %v339 = vsel %vm307, %v289, 0
      %v342 = vsel %vm307, %v290, 0
      %v345 = vsel %vm307, %v291, 0
      %v348 = vsel %vm307, %v292, 0
      %v351 = vsel %vm307, %v293, 0
      %v354 = vsel %vm307, %v294, 0
      %356 = vmatpush.bf16.msra.mxu0 0
      %357 = vmatpush.bf16.msra.mxu0 0
      %358 = vmatpush.bf16.msra.mxu0 0
      %359 = vmatpush.bf16.msra.mxu0 0
      %360 = vmatpush.bf16.msra.mxu0 0
      %361 = vmatpush.bf16.msra.mxu0 0
      %362 = vmatpush.bf16.msra.mxu0 %v304
      %363 = vmatpush.bf16.msra.mxu0 %v303
      %364 = vmatmul.bf16.gmra.mxu0 %v309
      %v365 = vpop.f32.mrf.mxu0
      %v366 = vadd.f32 %v213, %v365
      %v367 = vpop.f32.mrf.mxu0
      %v368 = vadd.f32 %v213, %v367
      %369 = vmatmul.bf16.gmra.mxu0 %v312
      %v370 = vpop.f32.mrf.mxu0
      %v371 = vadd.f32 %v213, %v370
      %v372 = vpop.f32.mrf.mxu0
      %v373 = vadd.f32 %v213, %v372
      %374 = vmatmul.bf16.gmra.mxu0 %v315
      %v375 = vpop.f32.mrf.mxu0
      %v376 = vadd.f32 %v213, %v375
      %v377 = vpop.f32.mrf.mxu0
      %v378 = vadd.f32 %v213, %v377
      %379 = vmatmul.bf16.gmra.mxu0 %v318
      %v380 = vpop.f32.mrf.mxu0
      %v381 = vadd.f32 %v213, %v380
      %v382 = vpop.f32.mrf.mxu0
      %v383 = vadd.f32 %v213, %v382
      %384 = vmatmul.bf16.gmra.mxu0 %v321
      %v385 = vpop.f32.mrf.mxu0
      %v386 = vadd.f32 %v213, %v385
      %v387 = vpop.f32.mrf.mxu0
      %v388 = vadd.f32 %v213, %v387
      %389 = vmatmul.bf16.gmra.mxu0 %v324
      %v390 = vpop.f32.mrf.mxu0
      %v391 = vadd.f32 %v213, %v390
      %v392 = vpop.f32.mrf.mxu0
      %v393 = vadd.f32 %v213, %v392
      %394 = vmatmul.bf16.gmra.mxu0 %v327
      %v395 = vpop.f32.mrf.mxu0
      %v396 = vadd.f32 %v213, %v395
      %v397 = vpop.f32.mrf.mxu0
      %v398 = vadd.f32 %v213, %v397
      %399 = vmatmul.bf16.gmra.mxu0 %v330
      %v400 = vpop.f32.mrf.mxu0
      %v401 = vadd.f32 %v213, %v400
      %v402 = vpop.f32.mrf.mxu0
      %v403 = vadd.f32 %v213, %v402
      %404 = vmatmul.bf16.gmra.mxu0 %v333
      %v405 = vpop.f32.mrf.mxu0
      %v406 = vadd.f32 %v213, %v405
      %v407 = vpop.f32.mrf.mxu0
      %v408 = vadd.f32 %v213, %v407
      %409 = vmatmul.bf16.gmra.mxu0 %v336
      %v410 = vpop.f32.mrf.mxu0
      %v411 = vadd.f32 %v213, %v410
      %v412 = vpop.f32.mrf.mxu0
      %v413 = vadd.f32 %v213, %v412
      %414 = vmatmul.bf16.gmra.mxu0 %v339
      %v415 = vpop.f32.mrf.mxu0
      %v416 = vadd.f32 %v213, %v415
      %v417 = vpop.f32.mrf.mxu0
      %v418 = vadd.f32 %v213, %v417
      %419 = vmatmul.bf16.gmra.mxu0 %v342
      %v420 = vpop.f32.mrf.mxu0
      %v421 = vadd.f32 %v213, %v420
      %v422 = vpop.f32.mrf.mxu0
      %v423 = vadd.f32 %v213, %v422
      %424 = vmatmul.bf16.gmra.mxu0 %v345
      %v425 = vpop.f32.mrf.mxu0
      %v426 = vadd.f32 %v213, %v425
      %v427 = vpop.f32.mrf.mxu0
      %v428 = vadd.f32 %v213, %v427
      %429 = vmatmul.bf16.gmra.mxu0 %v348
      %v430 = vpop.f32.mrf.mxu0
      %v431 = vadd.f32 %v213, %v430
      %v432 = vpop.f32.mrf.mxu0
      %v433 = vadd.f32 %v213, %v432
      %434 = vmatmul.bf16.gmra.mxu0 %v351
      %v435 = vpop.f32.mrf.mxu0
      %v436 = vadd.f32 %v213, %v435
      %v437 = vpop.f32.mrf.mxu0
      %v438 = vadd.f32 %v213, %v437
      %439 = vmatmul.bf16.gmra.mxu0 %v354
      %v440 = vpop.f32.mrf.mxu0
      %v441 = vadd.f32 %v213, %v440
      %v442 = vpop.f32.mrf.mxu0
      %v443 = vadd.f32 %v213, %v442
      %444 = vdwg.mxu0
      %v445 = vmax.f32 %v366, 0.0
      %v446 = vmax.f32 %v368, 0.0
      %v447 = vmax.f32 %v371, 0.0
      %v448 = vmax.f32 %v373, 0.0
      %v449 = vmax.f32 %v376, 0.0
      %v450 = vmax.f32 %v378, 0.0
      %v451 = vmax.f32 %v381, 0.0
      %v452 = vmax.f32 %v383, 0.0
      %v453 = vmax.f32 %v386, 0.0
      %v454 = vmax.f32 %v388, 0.0
      %v455 = vmax.f32 %v391, 0.0
      %v456 = vmax.f32 %v393, 0.0
      %v457 = vmax.f32 %v396, 0.0
      %v458 = vmax.f32 %v398, 0.0
      %v459 = vmax.f32 %v401, 0.0
      %v460 = vmax.f32 %v403, 0.0
      %v461 = vmax.f32 %v406, 0.0
      %v462 = vmax.f32 %v408, 0.0
      %v463 = vmax.f32 %v411, 0.0
      %v464 = vmax.f32 %v413, 0.0
      %v465 = vmax.f32 %v416, 0.0
      %v466 = vmax.f32 %v418, 0.0
      %v467 = vmax.f32 %v421, 0.0
      %v468 = vmax.f32 %v423, 0.0
      %v469 = vmax.f32 %v426, 0.0
      %v470 = vmax.f32 %v428, 0.0
      %v471 = vmax.f32 %v431, 0.0
      %v472 = vmax.f32 %v433, 0.0
      %v473 = vmax.f32 %v436, 0.0
      %v474 = vmax.f32 %v438, 0.0
      %v475 = vmax.f32 %v441, 0.0
      %v476 = vmax.f32 %v443, 0.0
      %v477 = vpack.c.bf16 %v445, %v445
      %v478 = vpack.c.bf16 %v446, %v446
      %v479 = vpack.c.bf16 %v447, %v447
      %v480 = vpack.c.bf16 %v448, %v448
      %v481 = vpack.c.bf16 %v449, %v449
      %v482 = vpack.c.bf16 %v450, %v450
      %v483 = vpack.c.bf16 %v451, %v451
      %v484 = vpack.c.bf16 %v452, %v452
      %v485 = vpack.c.bf16 %v453, %v453
      %v486 = vpack.c.bf16 %v454, %v454
      %v487 = vpack.c.bf16 %v455, %v455
      %v488 = vpack.c.bf16 %v456, %v456
      %v489 = vpack.c.bf16 %v457, %v457
      %v490 = vpack.c.bf16 %v458, %v458
      %v491 = vpack.c.bf16 %v459, %v459
      %v492 = vpack.c.bf16 %v460, %v460
      %v493 = vpack.c.bf16 %v461, %v461
      %v494 = vpack.c.bf16 %v462, %v462
      %v495 = vpack.c.bf16 %v463, %v463
      %v496 = vpack.c.bf16 %v464, %v464
      %v497 = vpack.c.bf16 %v465, %v465
      %v498 = vpack.c.bf16 %v466, %v466
      %v499 = vpack.c.bf16 %v467, %v467
      %v500 = vpack.c.bf16 %v468, %v468
      %v501 = vpack.c.bf16 %v469, %v469
      %v502 = vpack.c.bf16 %v470, %v470
      %v503 = vpack.c.bf16 %v471, %v471
      %v504 = vpack.c.bf16 %v472, %v472
      %v505 = vpack.c.bf16 %v473, %v473
      %v506 = vpack.c.bf16 %v474, %v474
      %v507 = vpack.c.bf16 %v475, %v475
      %v508 = vpack.c.bf16 %v476, %v476
      %509 = vst [vmem:[%s172] sm:$0xf] %v477
      %510 = vst [vmem:[%s172 + $0x4] sm:$0xf] %v478
      %511 = vst [vmem:[%s172 + $0x8] sm:$0xf] %v479
      %512 = vst [vmem:[%s172 + $0xc] sm:$0xf] %v480
      %513 = vst [vmem:[%s172 + $0x10] sm:$0xf] %v481
      %514 = vst [vmem:[%s172 + $0x14] sm:$0xf] %v482
      %515 = vst [vmem:[%s172 + $0x18] sm:$0xf] %v483
      %516 = vst [vmem:[%s172 + $0x1c] sm:$0xf] %v484
      %517 = vst [vmem:[%s172 + $0x20] sm:$0xf] %v485
      %518 = vst [vmem:[%s172 + $0x24] sm:$0xf] %v486
      %519 = vst [vmem:[%s172 + $0x28] sm:$0xf] %v487
      %520 = vst [vmem:[%s172 + $0x2c] sm:$0xf] %v488
      %521 = vst [vmem:[%s172 + $0x30] sm:$0xf] %v489
      %522 = vst [vmem:[%s172 + $0x34] sm:$0xf] %v490
      %523 = vst [vmem:[%s172 + $0x38] sm:$0xf] %v491
      %524 = vst [vmem:[%s172 + $0x3c] sm:$0xf] %v492
      %525 = vst [vmem:[%s172 + $0x40] sm:$0xf] %v493
      %526 = vst [vmem:[%s172 + $0x44] sm:$0xf] %v494
      %527 = vst [vmem:[%s172 + $0x48] sm:$0xf] %v495
      %528 = vst [vmem:[%s172 + $0x4c] sm:$0xf] %v496
      %529 = vst [vmem:[%s172 + $0x50] sm:$0xf] %v497
      %530 = vst [vmem:[%s172 + $0x54] sm:$0xf] %v498
      %531 = vst [vmem:[%s172 + $0x58] sm:$0xf] %v499
      %532 = vst [vmem:[%s172 + $0x5c] sm:$0xf] %v500
      %533 = vst [vmem:[%s172 + $0x60] sm:$0xf] %v501
      %534 = vst [vmem:[%s172 + $0x64] sm:$0xf] %v502
      %535 = vst [vmem:[%s172 + $0x68] sm:$0xf] %v503
      %536 = vst [vmem:[%s172 + $0x6c] sm:$0xf] %v504
      %537 = vst [vmem:[%s172 + $0x70] sm:$0xf] %v505
      %538 = vst [vmem:[%s172 + $0x74] sm:$0xf] %v506
      %539 = vst [vmem:[%s172 + $0x78] sm:$0xf] %v507
      %540 = vst [vmem:[%s172 + $0x7c] sm:$0xf] %v508
      %s541 = smul.u32 32, %s14
      %p542 = scmp.lt.s32.totalorder %s541, 63
      %s543 = scalar_select %p542, %s541, 63
      %s544 = smul.addr %s543, 4
      %s545 = scalar_lea.vmem %s3, %s544
      // Predicated region
      $region33: #{resnet_forward.8} parent=31 // pred_check
        %p546 = pneg %p100
      $region34: #{resnet_forward.8} parent=31 // pred_check_branch
        %548 = sbr.rel (%p546) target = $region36
      $region35: #{resnet_forward.8} parent=31 // pred_region
        %s549 = smul.u32 32, %s14
      $region36: #{resnet_forward.8} parent=31 // pred_fallthru
        _
    $region32: #{resnet_forward.8} parent=5 // pred_fallthru
      _
    %p550 = scmp.le.s32.totalorder 2, %s9
    // Predicated region
    $region37: #{resnet_forward.8} parent=5 // pred_check
      %p551 = pneg %p550
    $region38: #{resnet_forward.8} parent=5 // pred_check_branch
      %553 = sbr.rel (%p551) target = $region40
    $region39: #{resnet_forward.8} parent=5 // pred_region
      %s554 = ssub.s32 %s9, 2
      // Predicated region
      $region41: #{resnet_forward.8} parent=39 // pred_check
        %p555 = pneg %p106
      $region42: #{resnet_forward.8} parent=39 // pred_check_branch
        %557 = sbr.rel (%p555) target = $region44
      $region43: #{resnet_forward.8} parent=39 // pred_region
        %s558 = smul.u32 32, %s15
        %p559 = scmp.lt.s32.totalorder %s558, 63
        %s560 = scalar_select %p559, %s558, 63
        %s561 = smul.addr %s560, 4
        %s562 = scalar_lea.vmem %s3, %s561
      $region44: #{resnet_forward.8} parent=39 // pred_fallthru
        _
    $region40: #{resnet_forward.8} parent=5 // pred_fallthru
      _
  $region6: #{resnet_forward.8} parent=0 // loop_footer
    %s13 = sadd.s32 1, %s9
  $region7: #{resnet_forward.8} parent=0 // loop_footer_branch
    %8 = sbr.rel target = $region3
  $region8: #{resnet_forward.8} parent=0 // loop_exit
    _

// kernel: resnet_forward.9
$region0: #{resnet_forward.9}
  #allocation0 [shape = 'u32[]', space=smem, size = 0x4, offset = 0x4, fixed_abs, tag = 'smem constant byte address 0x4 - core index']
  #allocation1 [shape = 'u32[72,128]{1,0:T(1,128)}', space=vmem, size = 0x9000, scoped, tag = 'internal scratch']
  %s0 = inlined_call_operand.vmem [shape: bf16[512,144], index: 0, kind: input, shape index: {}]
  %s1 = inlined_call_operand.vmem [shape: bf16[144,128], index: 1, kind: input, shape index: {}]
  %s2 = inlined_call_operand.vmem [shape: f32[1,128], index: 2, kind: input, shape index: {}]
  %s3 = inlined_call_operand.vmem [shape: bf16[512,128], index: 3, kind: output, shape index: {}]
  %s4 = sld [smem:[#allocation0]]
  $region45: #{resnet_forward.9} parent=0
    _
  %s6 = ssub.s32 1, %s4
  %s7 = scalar_select 0, %s6, %s4
  loop: start=0, step=1, limit=4
  $region2: #{resnet_forward.9} parent=0 // loop_pre_header
    _
  $region3: #{resnet_forward.9} parent=0 // loop_header
    %s9 = sphi 0, %s13
    %p10 = scmp.ge.s32.totalorder %s9, 4
    %s19 = sphi 0, %s21
    %s22 = sphi 0, %s19
    %s23 = sphi 0, %s22
    %s39 = sphi 0, %s23
    %s43 = sphi 0, %s43
    %s45 = sphi 0, %s43
    %s46 = sphi 0, %s45
    %s60 = sphi 0, %s46
    %s64 = sphi 0, %s64
    %s66 = sphi 0, %s64
    %s67 = sphi 0, %s66
    %s81 = sphi 0, %s67
    %s87 = sphi 0, %s89
    %s90 = sphi 0, %s87
    %s91 = sphi 0, %s90
    %s107 = sphi 0, %s91
  $region4: #{resnet_forward.9} parent=0 // loop_header_branch
    %12 = sbr.rel (%p10) target = $region8
  $region5: #{resnet_forward.9} parent=0 // loop_body
    %s14 = ssub.s32 %s9, 1
    %s15 = ssub.s32 %s9, 2
    %s16 = sadd.s32 %s9, 1
    %s17 = ssub.s32 %s9, %s16
    %p18 = scmp.eq.s32.totalorder %s17, 0
    %s20 = sadd.s32 %s19, 1
    %s21 = scalar_select %p18, %s19, %s20
    %p24 = pneg %p18
    %p25 = scmp.eq.s32.totalorder %s9, 1
    %p26 = por %p24, %p25
    %p27 = scmp.ne.s32.totalorder %s19, %s22
    %p28 = scmp.eq.s32.totalorder %s9, 0
    %p29 = por %p27, %p28
    %p30 = scmp.ne.s32.totalorder %s19, %s22
    %p31 = scmp.eq.s32.totalorder %s14, 1
    %p32 = por %p30, %p31
    %p33 = scmp.ne.s32.totalorder %s22, %s23
    %p34 = scmp.eq.s32.totalorder %s14, 0
    %p35 = por %p33, %p34
    %p36 = scmp.ne.s32.totalorder %s22, %s23
    %p37 = scmp.eq.s32.totalorder %s15, 1
    %p38 = por %p36, %p37
    %p40 = scmp.ne.s32.totalorder %s23, %s39
    %p41 = scmp.eq.s32.totalorder %s15, 0
    %p42 = por %p40, %p41
    %s44 = sadd.s32 %s43, 1
    %p47 = scmp.eq.s32.totalorder %s9, 1
    %p48 = scmp.ne.s32.totalorder %s43, %s45
    %p49 = scmp.eq.s32.totalorder %s9, 0
    %p50 = por %p48, %p49
    %p51 = scmp.ne.s32.totalorder %s43, %s45
    %p52 = scmp.eq.s32.totalorder %s14, 1
    %p53 = por %p51, %p52
    %p54 = scmp.ne.s32.totalorder %s45, %s46
    %p55 = scmp.eq.s32.totalorder %s14, 0
    %p56 = por %p54, %p55
    %p57 = scmp.ne.s32.totalorder %s45, %s46
    %p58 = scmp.eq.s32.totalorder %s15, 1
    %p59 = por %p57, %p58
    %p61 = scmp.ne.s32.totalorder %s46, %s60
    %p62 = scmp.eq.s32.totalorder %s15, 0
    %p63 = por %p61, %p62
    %s65 = sadd.s32 %s64, 1
    %p68 = scmp.eq.s32.totalorder %s9, 1
    %p69 = scmp.ne.s32.totalorder %s64, %s66
    %p70 = scmp.eq.s32.totalorder %s9, 0
    %p71 = por %p69, %p70
    %p72 = scmp.ne.s32.totalorder %s64, %s66
    %p73 = scmp.eq.s32.totalorder %s14, 1
    %p74 = por %p72, %p73
    %p75 = scmp.ne.s32.totalorder %s66, %s67
    %p76 = scmp.eq.s32.totalorder %s14, 0
    %p77 = por %p75, %p76
    %p78 = scmp.ne.s32.totalorder %s66, %s67
    %p79 = scmp.eq.s32.totalorder %s15, 1
    %p80 = por %p78, %p79
    %p82 = scmp.ne.s32.totalorder %s67, %s81
    %p83 = scmp.eq.s32.totalorder %s15, 0
    %p84 = por %p82, %p83
    %s85 = ssub.s32 %s9, %s16
    %p86 = scmp.eq.s32.totalorder %s85, 0
    %s88 = sadd.s32 %s87, 1
    %s89 = scalar_select %p86, %s87, %s88
    %p92 = pneg %p86
    %p93 = scmp.eq.s32.totalorder %s9, 1
    %p94 = por %p92, %p93
    %p95 = scmp.ne.s32.totalorder %s87, %s90
    %p96 = scmp.eq.s32.totalorder %s9, 0
    %p97 = por %p95, %p96
    %p98 = scmp.ne.s32.totalorder %s87, %s90
    %p99 = scmp.eq.s32.totalorder %s14, 1
    %p100 = por %p98, %p99
    %p101 = scmp.ne.s32.totalorder %s90, %s91
    %p102 = scmp.eq.s32.totalorder %s14, 0
    %p103 = por %p101, %p102
    %p104 = scmp.ne.s32.totalorder %s90, %s91
    %p105 = scmp.eq.s32.totalorder %s15, 1
    %p106 = por %p104, %p105
    %p108 = scmp.ne.s32.totalorder %s91, %s107
    %p109 = scmp.eq.s32.totalorder %s15, 0
    %p110 = por %p108, %p109
    %p111 = scmp.le.s32.totalorder 1, %s9
    %p112 = scmp.lt.s32.totalorder %s9, 3
    %p113 = pnand %p111, %p112
    %p114 = pneg %p113
    // Predicated region
    $region9: #{resnet_forward.9} parent=5 // pred_check
      _
    $region10: #{resnet_forward.9} parent=5 // pred_check_branch
      %116 = sbr.rel (%p113) target = $region12
    $region11: #{resnet_forward.9} parent=5 // pred_region
      %s117 = ssub.s32 %s9, 1
      // Predicated region
      $region13: #{resnet_forward.9} parent=11 // pred_check
        %p118 = pneg %p56
      $region14: #{resnet_forward.9} parent=11 // pred_check_branch
        %120 = sbr.rel (%p118) target = $region16
      $region15: #{resnet_forward.9} parent=11 // pred_region
        _
      $region16: #{resnet_forward.9} parent=11 // pred_fallthru
        _
      // Predicated region
      $region17: #{resnet_forward.9} parent=11 // pred_check
        %p121 = pneg %p77
      $region18: #{resnet_forward.9} parent=11 // pred_check_branch
        %123 = sbr.rel (%p121) target = $region20
      $region19: #{resnet_forward.9} parent=11 // pred_region
        _
      $region20: #{resnet_forward.9} parent=11 // pred_fallthru
        _
    $region12: #{resnet_forward.9} parent=5 // pred_fallthru
      _
    %p124 = scmp.lt.s32.totalorder %s9, 2
    // Predicated region
    $region21: #{resnet_forward.9} parent=5 // pred_check
      %p125 = pneg %p124
    $region22: #{resnet_forward.9} parent=5 // pred_check_branch
      %127 = sbr.rel (%p125) target = $region24
    $region23: #{resnet_forward.9} parent=5 // pred_region
      // Predicated region
      $region25: #{resnet_forward.9} parent=23 // pred_check
        %p128 = pneg %p29
      $region26: #{resnet_forward.9} parent=23 // pred_check_branch
        %130 = sbr.rel (%p128) target = $region28
      $region27: #{resnet_forward.9} parent=23 // pred_region
        %s131 = smul.u32 32, %s9
        %p132 = scmp.lt.s32.totalorder %s131, 63
        %s133 = scalar_select %p132, %s131, 63
        %s134 = smul.addr %s133, 2
        %s135 = smul.addr %s134, 4
        %s136 = scalar_lea.vmem %s0, %s135
        %s137 = smul.u32 32, %s9
      $region28: #{resnet_forward.9} parent=23 // pred_fallthru
        _
    $region24: #{resnet_forward.9} parent=5 // pred_fallthru
      _
    %p138 = scmp.le.s32.totalorder 1, %s9
    %p139 = scmp.lt.s32.totalorder %s9, 3
    %p140 = pnand %p138, %p139
    %p141 = pneg %p140
    // Predicated region
    $region29: #{resnet_forward.9} parent=5 // pred_check
      _
    $region30: #{resnet_forward.9} parent=5 // pred_check_branch
      %143 = sbr.rel (%p140) target = $region32
    $region31: #{resnet_forward.9} parent=5 // pred_region
      %s144 = ssub.s32 %s9, 1
      %s145 = smul.u32 32, %s14
      %p146 = scmp.lt.s32.totalorder %s145, 63
      %s147 = scalar_select %p146, %s145, 63
      %s148 = smul.addr %s147, 2
      %s149 = smul.addr %s148, 4
      %s150 = scalar_lea.vmem %s0, %s149
      %p151 = pneg %p35
      %p152 = pneg %p32
      %p153 = pneg %p56
      %p154 = pneg %p53
      %p155 = pneg %p77
      %p156 = pneg %p74
      %p157 = pneg %p103
      %p158 = pneg %p100
      %s159 = smul.u32 32, %s14
      %p160 = scmp.lt.s32.totalorder %s159, 63
      %s161 = scalar_select %p160, %s159, 63
      %s162 = smul.addr %s161, 4
      %s163 = scalar_lea.vmem %s3, %s162
      %s164 = smul.u32 32, %s14
      %p165 = scmp.lt.s32.totalorder %s164, 63
      %s166 = scalar_select %p165, %s164, 63
      %s167 = smul.addr %s166, 2
      %s168 = smul.addr %s167, 4
      %s169 = scalar_lea.vmem %s0, %s168
      %s170 = smul.u32 32, %s14
      %s171 = smul.u32 32, %s14
      %p172 = scmp.lt.s32.totalorder %s171, 63
      %s173 = scalar_select %p172, %s171, 63
      %s174 = smul.addr %s173, 4
      %s175 = scalar_lea.vmem %s3, %s174
      %s176 = smul.u32 32, %s14
      %v178 = vld [vmem:[%s169] sm:$0xff]
      %v179 = vld [vmem:[%s169 + $0x8] sm:$0xff]
      %v180 = vld [vmem:[%s169 + $0x10] sm:$0xff]
      %v181 = vld [vmem:[%s169 + $0x18] sm:$0xff]
      %v182 = vld [vmem:[%s169 + $0x20] sm:$0xff]
      %v183 = vld [vmem:[%s169 + $0x28] sm:$0xff]
      %v184 = vld [vmem:[%s169 + $0x30] sm:$0xff]
      %v185 = vld [vmem:[%s169 + $0x38] sm:$0xff]
      %v186 = vld [vmem:[%s169 + $0x40] sm:$0xff]
      %v187 = vld [vmem:[%s169 + $0x48] sm:$0xff]
      %v188 = vld [vmem:[%s169 + $0x50] sm:$0xff]
      %v189 = vld [vmem:[%s169 + $0x58] sm:$0xff]
      %v190 = vld [vmem:[%s169 + $0x60] sm:$0xff]
      %v191 = vld [vmem:[%s169 + $0x68] sm:$0xff]
      %v192 = vld [vmem:[%s169 + $0x70] sm:$0xff]
      %v193 = vld [vmem:[%s169 + $0x78] sm:$0xff]
      %v194 = vld [vmem:[%s169 + $0x80] sm:$0xff]
      %v195 = vld [vmem:[%s169 + $0x88] sm:$0xff]
      %v196 = vld [vmem:[%s169 + $0x90] sm:$0xff]
      %v197 = vld [vmem:[%s169 + $0x98] sm:$0xff]
      %v198 = vld [vmem:[%s169 + $0xa0] sm:$0xff]
      %v199 = vld [vmem:[%s169 + $0xa8] sm:$0xff]
      %v200 = vld [vmem:[%s169 + $0xb0] sm:$0xff]
      %v201 = vld [vmem:[%s169 + $0xb8] sm:$0xff]
      %v202 = vld [vmem:[%s169 + $0xc0] sm:$0xff]
      %v203 = vld [vmem:[%s169 + $0xc8] sm:$0xff]
      %v204 = vld [vmem:[%s169 + $0xd0] sm:$0xff]
      %v205 = vld [vmem:[%s169 + $0xd8] sm:$0xff]
      %v206 = vld [vmem:[%s169 + $0xe0] sm:$0xff]
      %v207 = vld [vmem:[%s169 + $0xe8] sm:$0xff]
      %v208 = vld [vmem:[%s169 + $0xf0] sm:$0xff]
      %v209 = vld [vmem:[%s169 + $0xf8] sm:$0xff]
      %v210 = vld [vmem:[%s1] sm:$0xf]
      %v211 = vld [vmem:[%s1 + $0x4] sm:$0xf]
      %v212 = vld [vmem:[%s1 + $0x8] sm:$0xf]
      %v213 = vld [vmem:[%s1 + $0xc] sm:$0xf]
      %v214 = vld [vmem:[%s1 + $0x10] sm:$0xf]
      %v215 = vld [vmem:[%s1 + $0x14] sm:$0xf]
      %v216 = vld [vmem:[%s1 + $0x18] sm:$0xf]
      %v217 = vld [vmem:[%s1 + $0x1c] sm:$0xf]
      %v218 = vld [vmem:[%s1 + $0x20] sm:$0xf]
      %v219 = vld [vmem:[%s1 + $0x24] sm:$0xf]
      %v220 = vld [vmem:[%s1 + $0x28] sm:$0xf]
      %v221 = vld [vmem:[%s1 + $0x2c] sm:$0xf]
      %v222 = vld [vmem:[%s1 + $0x30] sm:$0xf]
      %v223 = vld [vmem:[%s1 + $0x34] sm:$0xf]
      %v224 = vld [vmem:[%s1 + $0x38] sm:$0xf]
      %v225 = vld [vmem:[%s1 + $0x3c] sm:$0xf]
      %v226 = vld [vmem:[%s1 + $0x40] sm:$0xf]
      %v227 = vld [vmem:[%s1 + $0x44] sm:$0xf]
      %v228 = vld [vmem:[%s2] sm:$0x1]
      %v230 = vperm.slane %v228, 0
      %v264 = vunpack.c.l.b16 %v178
      %v265 = vunpack.c.h.b16 %v178
      %v266 = vunpack.c.l.b16 %v179
      %v267 = vunpack.c.h.b16 %v179
      %v268 = vunpack.c.l.b16 %v180
      %v269 = vunpack.c.h.b16 %v180
      %v270 = vunpack.c.l.b16 %v181
      %v271 = vunpack.c.h.b16 %v181
      %v272 = vunpack.c.l.b16 %v182
      %v273 = vunpack.c.h.b16 %v182
      %v274 = vunpack.c.l.b16 %v183
      %v275 = vunpack.c.h.b16 %v183
      %v276 = vunpack.c.l.b16 %v184
      %v277 = vunpack.c.h.b16 %v184
      %v278 = vunpack.c.l.b16 %v185
      %v279 = vunpack.c.h.b16 %v185
      %v280 = vunpack.c.l.b16 %v186
      %v281 = vunpack.c.h.b16 %v186
      %v282 = vunpack.c.l.b16 %v187
      %v283 = vunpack.c.h.b16 %v187
      %v284 = vunpack.c.l.b16 %v188
      %v285 = vunpack.c.h.b16 %v188
      %v286 = vunpack.c.l.b16 %v189
      %v287 = vunpack.c.h.b16 %v189
      %v288 = vunpack.c.l.b16 %v190
      %v289 = vunpack.c.h.b16 %v190
      %v290 = vunpack.c.l.b16 %v191
      %v291 = vunpack.c.h.b16 %v191
      %v292 = vunpack.c.l.b16 %v192
      %v293 = vunpack.c.h.b16 %v192
      %v294 = vunpack.c.l.b16 %v193
      %v295 = vunpack.c.h.b16 %v193
      %v296 = vunpack.c.l.b16 %v194
      %v297 = vunpack.c.h.b16 %v194
      %v298 = vunpack.c.l.b16 %v195
      %v299 = vunpack.c.h.b16 %v195
      %v300 = vunpack.c.l.b16 %v196
      %v301 = vunpack.c.h.b16 %v196
      %v302 = vunpack.c.l.b16 %v197
      %v303 = vunpack.c.h.b16 %v197
      %v304 = vunpack.c.l.b16 %v198
      %v305 = vunpack.c.h.b16 %v198
      %v306 = vunpack.c.l.b16 %v199
      %v307 = vunpack.c.h.b16 %v199
      %v308 = vunpack.c.l.b16 %v200
      %v309 = vunpack.c.h.b16 %v200
      %v310 = vunpack.c.l.b16 %v201
      %v311 = vunpack.c.h.b16 %v201
      %v312 = vunpack.c.l.b16 %v202
      %v313 = vunpack.c.h.b16 %v202
      %v314 = vunpack.c.l.b16 %v203
      %v315 = vunpack.c.h.b16 %v203
      %v316 = vunpack.c.l.b16 %v204
      %v317 = vunpack.c.h.b16 %v204
      %v318 = vunpack.c.l.b16 %v205
      %v319 = vunpack.c.h.b16 %v205
      %v320 = vunpack.c.l.b16 %v206
      %v321 = vunpack.c.h.b16 %v206
      %v322 = vunpack.c.l.b16 %v207
      %v323 = vunpack.c.h.b16 %v207
      %v324 = vunpack.c.l.b16 %v208
      %v325 = vunpack.c.h.b16 %v208
      %v326 = vunpack.c.l.b16 %v209
      %v327 = vunpack.c.h.b16 %v209
      %v328 = vpack.c.b16 %v266, %v264
      %v329 = vpack.c.b16 %v267, %v265
      %v330 = vpack.c.b16 %v270, %v268
      %v331 = vpack.c.b16 %v271, %v269
      %v332 = vpack.c.b16 %v274, %v272
      %v333 = vpack.c.b16 %v275, %v273
      %v334 = vpack.c.b16 %v278, %v276
      %v335 = vpack.c.b16 %v279, %v277
      %v336 = vpack.c.b16 %v282, %v280
      %v337 = vpack.c.b16 %v283, %v281
      %v338 = vpack.c.b16 %v286, %v284
      %v339 = vpack.c.b16 %v287, %v285
      %v340 = vpack.c.b16 %v290, %v288
      %v341 = vpack.c.b16 %v291, %v289
      %v342 = vpack.c.b16 %v294, %v292
      %v343 = vpack.c.b16 %v295, %v293
      %v344 = vpack.c.b16 %v298, %v296
      %v345 = vpack.c.b16 %v299, %v297
      %v346 = vpack.c.b16 %v302, %v300
      %v347 = vpack.c.b16 %v303, %v301
      %v348 = vpack.c.b16 %v306, %v304
      %v349 = vpack.c.b16 %v307, %v305
      %v350 = vpack.c.b16 %v310, %v308
      %v351 = vpack.c.b16 %v311, %v309
      %v352 = vpack.c.b16 %v314, %v312
      %v353 = vpack.c.b16 %v315, %v313
      %v354 = vpack.c.b16 %v318, %v316
      %v355 = vpack.c.b16 %v319, %v317
      %v356 = vpack.c.b16 %v322, %v320
      %v357 = vpack.c.b16 %v323, %v321
      %v358 = vpack.c.b16 %v326, %v324
      %v359 = vpack.c.b16 %v327, %v325
      %v394 = vunpack.c.l.b16 %v210
      %v395 = vunpack.c.l.b16 %v211
      %v396 = vunpack.c.l.b16 %v212
      %v397 = vunpack.c.l.b16 %v213
      %v398 = vunpack.c.l.b16 %v214
      %v399 = vunpack.c.l.b16 %v215
      %v400 = vunpack.c.l.b16 %v216
      %v401 = vunpack.c.l.b16 %v217
      %v402 = vunpack.c.l.b16 %v218
      %v403 = vunpack.c.l.b16 %v219
      %v404 = vunpack.c.l.b16 %v220
      %v405 = vunpack.c.l.b16 %v221
      %v406 = vunpack.c.l.b16 %v222
      %v407 = vunpack.c.l.b16 %v223
      %v408 = vunpack.c.l.b16 %v224
      %v409 = vunpack.c.l.b16 %v225
      %v410 = vunpack.c.l.b16 %v226
      %v411 = vunpack.c.l.b16 %v227
      %v412 = vpack.c.b16 %v395, %v394
      %v413 = vpack.c.b16 %v397, %v396
      %v414 = vpack.c.b16 %v399, %v398
      %v415 = vpack.c.b16 %v401, %v400
      %v416 = vpack.c.b16 %v403, %v402
      %v417 = vpack.c.b16 %v405, %v404
      %v418 = vpack.c.b16 %v407, %v406
      %v419 = vpack.c.b16 %v409, %v408
      %v420 = vpack.c.b16 %v411, %v410
      %vm430 = vcmask 130048
      %v432 = vsel %vm430, %v329, 0
      %v435 = vsel %vm430, %v331, 0
      %v438 = vsel %vm430, %v333, 0
      %v441 = vsel %vm430, %v335, 0
      %v444 = vsel %vm430, %v337, 0
      %v447 = vsel %vm430, %v339, 0
      %v450 = vsel %vm430, %v341, 0
      %v453 = vsel %vm430, %v343, 0
      %v456 = vsel %vm430, %v345, 0
      %v459 = vsel %vm430, %v347, 0
      %v462 = vsel %vm430, %v349, 0
      %v465 = vsel %vm430, %v351, 0
      %v468 = vsel %vm430, %v353, 0
      %v471 = vsel %vm430, %v355, 0
      %v474 = vsel %vm430, %v357, 0
      %v477 = vsel %vm430, %v359, 0
      %479 = vmatpush.bf16.msra.mxu0 %v419
      %480 = vmatpush.bf16.msra.mxu0 %v418
      %481 = vmatpush.bf16.msra.mxu0 %v417
      %482 = vmatpush.bf16.msra.mxu0 %v416
      %483 = vmatpush.bf16.msra.mxu0 %v415
      %484 = vmatpush.bf16.msra.mxu0 %v414
      %485 = vmatpush.bf16.msra.mxu0 %v413
      %486 = vmatpush.bf16.msra.mxu0 %v412
      %487 = vmatmul.bf16.gmra.mxu0 %v328
      %v488 = vpop.f32.mrf.mxu0
      %v489 = vadd.f32 %v230, %v488
      %v490 = vpop.f32.mrf.mxu0
      %v491 = vadd.f32 %v230, %v490
      %492 = vmatmul.bf16.gmra.mxu0 %v330
      %v493 = vpop.f32.mrf.mxu0
      %v494 = vadd.f32 %v230, %v493
      %v495 = vpop.f32.mrf.mxu0
      %v496 = vadd.f32 %v230, %v495
      %497 = vmatmul.bf16.gmra.mxu0 %v332
      %v498 = vpop.f32.mrf.mxu0
      %v499 = vadd.f32 %v230, %v498
      %v500 = vpop.f32.mrf.mxu0
      %v501 = vadd.f32 %v230, %v500
      %502 = vmatmul.bf16.gmra.mxu0 %v334
      %v503 = vpop.f32.mrf.mxu0
      %v504 = vadd.f32 %v230, %v503
      %v505 = vpop.f32.mrf.mxu0
      %v506 = vadd.f32 %v230, %v505
      %507 = vmatmul.bf16.gmra.mxu0 %v336
      %v508 = vpop.f32.mrf.mxu0
      %v509 = vadd.f32 %v230, %v508
      %v510 = vpop.f32.mrf.mxu0
      %v511 = vadd.f32 %v230, %v510
      %512 = vmatmul.bf16.gmra.mxu0 %v338
      %v513 = vpop.f32.mrf.mxu0
      %v514 = vadd.f32 %v230, %v513
      %v515 = vpop.f32.mrf.mxu0
      %v516 = vadd.f32 %v230, %v515
      %517 = vmatmul.bf16.gmra.mxu0 %v340
      %v518 = vpop.f32.mrf.mxu0
      %v519 = vadd.f32 %v230, %v518
      %v520 = vpop.f32.mrf.mxu0
      %v521 = vadd.f32 %v230, %v520
      %522 = vmatmul.bf16.gmra.mxu0 %v342
      %v523 = vpop.f32.mrf.mxu0
      %v524 = vadd.f32 %v230, %v523
      %v525 = vpop.f32.mrf.mxu0
      %v526 = vadd.f32 %v230, %v525
      %527 = vmatmul.bf16.gmra.mxu0 %v344
      %v528 = vpop.f32.mrf.mxu0
      %v529 = vadd.f32 %v230, %v528
      %v530 = vpop.f32.mrf.mxu0
      %v531 = vadd.f32 %v230, %v530
      %532 = vmatmul.bf16.gmra.mxu0 %v346
      %v533 = vpop.f32.mrf.mxu0
      %v534 = vadd.f32 %v230, %v533
      %v535 = vpop.f32.mrf.mxu0
      %v536 = vadd.f32 %v230, %v535
      %537 = vmatmul.bf16.gmra.mxu0 %v348
      %v538 = vpop.f32.mrf.mxu0
      %v539 = vadd.f32 %v230, %v538
      %v540 = vpop.f32.mrf.mxu0
      %v541 = vadd.f32 %v230, %v540
      %542 = vmatmul.bf16.gmra.mxu0 %v350
      %v543 = vpop.f32.mrf.mxu0
      %v544 = vadd.f32 %v230, %v543
      %v545 = vpop.f32.mrf.mxu0
      %v546 = vadd.f32 %v230, %v545
      %547 = vmatmul.bf16.gmra.mxu0 %v352
      %v548 = vpop.f32.mrf.mxu0
      %v549 = vadd.f32 %v230, %v548
      %v550 = vpop.f32.mrf.mxu0
      %v551 = vadd.f32 %v230, %v550
      %552 = vmatmul.bf16.gmra.mxu0 %v354
      %v553 = vpop.f32.mrf.mxu0
      %v554 = vadd.f32 %v230, %v553
      %v555 = vpop.f32.mrf.mxu0
      %v556 = vadd.f32 %v230, %v555
      %557 = vmatmul.bf16.gmra.mxu0 %v356
      %v558 = vpop.f32.mrf.mxu0
      %v559 = vadd.f32 %v230, %v558
      %v560 = vpop.f32.mrf.mxu0
      %v561 = vadd.f32 %v230, %v560
      %562 = vmatmul.bf16.gmra.mxu0 %v358
      %v563 = vpop.f32.mrf.mxu0
      %v564 = vadd.f32 %v230, %v563
      %v565 = vpop.f32.mrf.mxu0
      %v566 = vadd.f32 %v230, %v565
      %567 = vdwg.mxu0
      %568 = vmatpush.bf16.msra.mxu0 0
      %569 = vmatpush.bf16.msra.mxu0 0
      %570 = vmatpush.bf16.msra.mxu0 0
      %571 = vmatpush.bf16.msra.mxu0 0
      %572 = vmatpush.bf16.msra.mxu0 0
      %573 = vmatpush.bf16.msra.mxu0 0
      %574 = vmatpush.bf16.msra.mxu0 0
      %575 = vmatpush.bf16.msra.mxu0 %v420
      %576 = vmatmul.bf16.gmra.mxu0 %v432
      %v577 = vpop.f32.mrf.mxu0
      %v578 = vadd.f32 %v489, %v577
      %v579 = vpop.f32.mrf.mxu0
      %v580 = vadd.f32 %v491, %v579
      %581 = vmatmul.bf16.gmra.mxu0 %v435
      %v582 = vpop.f32.mrf.mxu0
      %v583 = vadd.f32 %v494, %v582
      %v584 = vpop.f32.mrf.mxu0
      %v585 = vadd.f32 %v496, %v584
      %586 = vmatmul.bf16.gmra.mxu0 %v438
      %v587 = vpop.f32.mrf.mxu0
      %v588 = vadd.f32 %v499, %v587
      %v589 = vpop.f32.mrf.mxu0
      %v590 = vadd.f32 %v501, %v589
      %591 = vmatmul.bf16.gmra.mxu0 %v441
      %v592 = vpop.f32.mrf.mxu0
      %v593 = vadd.f32 %v504, %v592
      %v594 = vpop.f32.mrf.mxu0
      %v595 = vadd.f32 %v506, %v594
      %596 = vmatmul.bf16.gmra.mxu0 %v444
      %v597 = vpop.f32.mrf.mxu0
      %v598 = vadd.f32 %v509, %v597
      %v599 = vpop.f32.mrf.mxu0
      %v600 = vadd.f32 %v511, %v599
      %601 = vmatmul.bf16.gmra.mxu0 %v447
      %v602 = vpop.f32.mrf.mxu0
      %v603 = vadd.f32 %v514, %v602
      %v604 = vpop.f32.mrf.mxu0
      %v605 = vadd.f32 %v516, %v604
      %606 = vmatmul.bf16.gmra.mxu0 %v450
      %v607 = vpop.f32.mrf.mxu0
      %v608 = vadd.f32 %v519, %v607
      %v609 = vpop.f32.mrf.mxu0
      %v610 = vadd.f32 %v521, %v609
      %611 = vmatmul.bf16.gmra.mxu0 %v453
      %v612 = vpop.f32.mrf.mxu0
      %v613 = vadd.f32 %v524, %v612
      %v614 = vpop.f32.mrf.mxu0
      %v615 = vadd.f32 %v526, %v614
      %616 = vmatmul.bf16.gmra.mxu0 %v456
      %v617 = vpop.f32.mrf.mxu0
      %v618 = vadd.f32 %v529, %v617
      %v619 = vpop.f32.mrf.mxu0
      %v620 = vadd.f32 %v531, %v619
      %621 = vmatmul.bf16.gmra.mxu0 %v459
      %v622 = vpop.f32.mrf.mxu0
      %v623 = vadd.f32 %v534, %v622
      %v624 = vpop.f32.mrf.mxu0
      %v625 = vadd.f32 %v536, %v624
      %626 = vmatmul.bf16.gmra.mxu0 %v462
      %v627 = vpop.f32.mrf.mxu0
      %v628 = vadd.f32 %v539, %v627
      %v629 = vpop.f32.mrf.mxu0
      %v630 = vadd.f32 %v541, %v629
      %631 = vmatmul.bf16.gmra.mxu0 %v465
      %v632 = vpop.f32.mrf.mxu0
      %v633 = vadd.f32 %v544, %v632
      %v634 = vpop.f32.mrf.mxu0
      %v635 = vadd.f32 %v546, %v634
      %636 = vmatmul.bf16.gmra.mxu0 %v468
      %v637 = vpop.f32.mrf.mxu0
      %v638 = vadd.f32 %v549, %v637
      %v639 = vpop.f32.mrf.mxu0
      %v640 = vadd.f32 %v551, %v639
      %641 = vmatmul.bf16.gmra.mxu0 %v471
      %v642 = vpop.f32.mrf.mxu0
      %v643 = vadd.f32 %v554, %v642
      %v644 = vpop.f32.mrf.mxu0
      %v645 = vadd.f32 %v556, %v644
      %646 = vmatmul.bf16.gmra.mxu0 %v474
      %v647 = vpop.f32.mrf.mxu0
      %v648 = vadd.f32 %v559, %v647
      %v649 = vpop.f32.mrf.mxu0
      %v650 = vadd.f32 %v561, %v649
      %651 = vmatmul.bf16.gmra.mxu0 %v477
      %v652 = vpop.f32.mrf.mxu0
      %v653 = vadd.f32 %v564, %v652
      %v654 = vpop.f32.mrf.mxu0
      %v655 = vadd.f32 %v566, %v654
      %656 = vdwg.mxu0
      %v657 = vmax.f32 %v578, 0.0
      %v658 = vmax.f32 %v580, 0.0
      %v659 = vmax.f32 %v583, 0.0
      %v660 = vmax.f32 %v585, 0.0
      %v661 = vmax.f32 %v588, 0.0
      %v662 = vmax.f32 %v590, 0.0
      %v663 = vmax.f32 %v593, 0.0
      %v664 = vmax.f32 %v595, 0.0
      %v665 = vmax.f32 %v598, 0.0
      %v666 = vmax.f32 %v600, 0.0
      %v667 = vmax.f32 %v603, 0.0
      %v668 = vmax.f32 %v605, 0.0
      %v669 = vmax.f32 %v608, 0.0
      %v670 = vmax.f32 %v610, 0.0
      %v671 = vmax.f32 %v613, 0.0
      %v672 = vmax.f32 %v615, 0.0
      %v673 = vmax.f32 %v618, 0.0
      %v674 = vmax.f32 %v620, 0.0
      %v675 = vmax.f32 %v623, 0.0
      %v676 = vmax.f32 %v625, 0.0
      %v677 = vmax.f32 %v628, 0.0
      %v678 = vmax.f32 %v630, 0.0
      %v679 = vmax.f32 %v633, 0.0
      %v680 = vmax.f32 %v635, 0.0
      %v681 = vmax.f32 %v638, 0.0
      %v682 = vmax.f32 %v640, 0.0
      %v683 = vmax.f32 %v643, 0.0
      %v684 = vmax.f32 %v645, 0.0
      %v685 = vmax.f32 %v648, 0.0
      %v686 = vmax.f32 %v650, 0.0
      %v687 = vmax.f32 %v653, 0.0
      %v688 = vmax.f32 %v655, 0.0
      %v689 = vpack.c.bf16 %v657, %v657
      %v690 = vpack.c.bf16 %v658, %v658
      %v691 = vpack.c.bf16 %v659, %v659
      %v692 = vpack.c.bf16 %v660, %v660
      %v693 = vpack.c.bf16 %v661, %v661
      %v694 = vpack.c.bf16 %v662, %v662
      %v695 = vpack.c.bf16 %v663, %v663
      %v696 = vpack.c.bf16 %v664, %v664
      %v697 = vpack.c.bf16 %v665, %v665
      %v698 = vpack.c.bf16 %v666, %v666
      %v699 = vpack.c.bf16 %v667, %v667
      %v700 = vpack.c.bf16 %v668, %v668
      %v701 = vpack.c.bf16 %v669, %v669
      %v702 = vpack.c.bf16 %v670, %v670
      %v703 = vpack.c.bf16 %v671, %v671
      %v704 = vpack.c.bf16 %v672, %v672
      %v705 = vpack.c.bf16 %v673, %v673
      %v706 = vpack.c.bf16 %v674, %v674
      %v707 = vpack.c.bf16 %v675, %v675
      %v708 = vpack.c.bf16 %v676, %v676
      %v709 = vpack.c.bf16 %v677, %v677
      %v710 = vpack.c.bf16 %v678, %v678
      %v711 = vpack.c.bf16 %v679, %v679
      %v712 = vpack.c.bf16 %v680, %v680
      %v713 = vpack.c.bf16 %v681, %v681
      %v714 = vpack.c.bf16 %v682, %v682
      %v715 = vpack.c.bf16 %v683, %v683
      %v716 = vpack.c.bf16 %v684, %v684
      %v717 = vpack.c.bf16 %v685, %v685
      %v718 = vpack.c.bf16 %v686, %v686
      %v719 = vpack.c.bf16 %v687, %v687
      %v720 = vpack.c.bf16 %v688, %v688
      %721 = vst [vmem:[%s175] sm:$0xf] %v689
      %722 = vst [vmem:[%s175 + $0x4] sm:$0xf] %v690
      %723 = vst [vmem:[%s175 + $0x8] sm:$0xf] %v691
      %724 = vst [vmem:[%s175 + $0xc] sm:$0xf] %v692
      %725 = vst [vmem:[%s175 + $0x10] sm:$0xf] %v693
      %726 = vst [vmem:[%s175 + $0x14] sm:$0xf] %v694
      %727 = vst [vmem:[%s175 + $0x18] sm:$0xf] %v695
      %728 = vst [vmem:[%s175 + $0x1c] sm:$0xf] %v696
      %729 = vst [vmem:[%s175 + $0x20] sm:$0xf] %v697
      %730 = vst [vmem:[%s175 + $0x24] sm:$0xf] %v698
      %731 = vst [vmem:[%s175 + $0x28] sm:$0xf] %v699
      %732 = vst [vmem:[%s175 + $0x2c] sm:$0xf] %v700
      %733 = vst [vmem:[%s175 + $0x30] sm:$0xf] %v701
      %734 = vst [vmem:[%s175 + $0x34] sm:$0xf] %v702
      %735 = vst [vmem:[%s175 + $0x38] sm:$0xf] %v703
      %736 = vst [vmem:[%s175 + $0x3c] sm:$0xf] %v704
      %737 = vst [vmem:[%s175 + $0x40] sm:$0xf] %v705
      %738 = vst [vmem:[%s175 + $0x44] sm:$0xf] %v706
      %739 = vst [vmem:[%s175 + $0x48] sm:$0xf] %v707
      %740 = vst [vmem:[%s175 + $0x4c] sm:$0xf] %v708
      %741 = vst [vmem:[%s175 + $0x50] sm:$0xf] %v709
      %742 = vst [vmem:[%s175 + $0x54] sm:$0xf] %v710
      %743 = vst [vmem:[%s175 + $0x58] sm:$0xf] %v711
      %744 = vst [vmem:[%s175 + $0x5c] sm:$0xf] %v712
      %745 = vst [vmem:[%s175 + $0x60] sm:$0xf] %v713
      %746 = vst [vmem:[%s175 + $0x64] sm:$0xf] %v714
      %747 = vst [vmem:[%s175 + $0x68] sm:$0xf] %v715
      %748 = vst [vmem:[%s175 + $0x6c] sm:$0xf] %v716
      %749 = vst [vmem:[%s175 + $0x70] sm:$0xf] %v717
      %750 = vst [vmem:[%s175 + $0x74] sm:$0xf] %v718
      %751 = vst [vmem:[%s175 + $0x78] sm:$0xf] %v719
      %752 = vst [vmem:[%s175 + $0x7c] sm:$0xf] %v720
      %s753 = smul.u32 32, %s14
      %p754 = scmp.lt.s32.totalorder %s753, 63
      %s755 = scalar_select %p754, %s753, 63
      %s756 = smul.addr %s755, 4
      %s757 = scalar_lea.vmem %s3, %s756
      // Predicated region
      $region33: #{resnet_forward.9} parent=31 // pred_check
        %p758 = pneg %p100
      $region34: #{resnet_forward.9} parent=31 // pred_check_branch
        %760 = sbr.rel (%p758) target = $region36
      $region35: #{resnet_forward.9} parent=31 // pred_region
        %s761 = smul.u32 32, %s14
      $region36: #{resnet_forward.9} parent=31 // pred_fallthru
        _
    $region32: #{resnet_forward.9} parent=5 // pred_fallthru
      _
    %p762 = scmp.le.s32.totalorder 2, %s9
    // Predicated region
    $region37: #{resnet_forward.9} parent=5 // pred_check
      %p763 = pneg %p762
    $region38: #{resnet_forward.9} parent=5 // pred_check_branch
      %765 = sbr.rel (%p763) target = $region40
    $region39: #{resnet_forward.9} parent=5 // pred_region
      %s766 = ssub.s32 %s9, 2
      // Predicated region
      $region41: #{resnet_forward.9} parent=39 // pred_check
        %p767 = pneg %p106
      $region42: #{resnet_forward.9} parent=39 // pred_check_branch
        %769 = sbr.rel (%p767) target = $region44
      $region43: #{resnet_forward.9} parent=39 // pred_region
        %s770 = smul.u32 32, %s15
        %p771 = scmp.lt.s32.totalorder %s770, 63
        %s772 = scalar_select %p771, %s770, 63
        %s773 = smul.addr %s772, 4
        %s774 = scalar_lea.vmem %s3, %s773
      $region44: #{resnet_forward.9} parent=39 // pred_fallthru
        _
    $region40: #{resnet_forward.9} parent=5 // pred_fallthru
      _
  $region6: #{resnet_forward.9} parent=0 // loop_footer
    %s13 = sadd.s32 1, %s9
  $region7: #{resnet_forward.9} parent=0 // loop_footer_branch
    %8 = sbr.rel target = $region3
  $region8: #{resnet_forward.9} parent=0 // loop_exit
    _

// kernel: resnet_forward.10
$region0: #{resnet_forward.10}
  #allocation0 [shape = 'u32[]', space=smem, size = 0x4, offset = 0x4, fixed_abs, tag = 'smem constant byte address 0x4 - core index']
  #allocation1 [shape = 'u32[72,128]{1,0:T(1,128)}', space=vmem, size = 0x9000, scoped, tag = 'internal scratch']
  %s0 = inlined_call_operand.vmem [shape: bf16[512,144], index: 0, kind: input, shape index: {}]
  %s1 = inlined_call_operand.vmem [shape: bf16[144,128], index: 1, kind: input, shape index: {}]
  %s2 = inlined_call_operand.vmem [shape: f32[1,128], index: 2, kind: input, shape index: {}]
  %s3 = inlined_call_operand.vmem [shape: bf16[512,128], index: 3, kind: input, shape index: {}]
  %s4 = inlined_call_operand.vmem [shape: bf16[512,128], index: 4, kind: output, shape index: {}]
  %s5 = sld [smem:[#allocation0]]
  $region49: #{resnet_forward.10} parent=0
    _
  %s7 = ssub.s32 1, %s5
  %s8 = scalar_select 0, %s7, %s5
  loop: start=0, step=1, limit=4
  $region2: #{resnet_forward.10} parent=0 // loop_pre_header
    _
  $region3: #{resnet_forward.10} parent=0 // loop_header
    %s10 = sphi 0, %s14
    %p11 = scmp.ge.s32.totalorder %s10, 4
    %s20 = sphi 0, %s22
    %s23 = sphi 0, %s20
    %s24 = sphi 0, %s23
    %s40 = sphi 0, %s24
    %s44 = sphi 0, %s44
    %s46 = sphi 0, %s44
    %s47 = sphi 0, %s46
    %s61 = sphi 0, %s47
    %s65 = sphi 0, %s65
    %s67 = sphi 0, %s65
    %s68 = sphi 0, %s67
    %s82 = sphi 0, %s68
    %s88 = sphi 0, %s90
    %s91 = sphi 0, %s88
    %s92 = sphi 0, %s91
    %s108 = sphi 0, %s92
    %s114 = sphi 0, %s116
    %s117 = sphi 0, %s114
    %s118 = sphi 0, %s117
    %s134 = sphi 0, %s118
  $region4: #{resnet_forward.10} parent=0 // loop_header_branch
    %13 = sbr.rel (%p11) target = $region8
  $region5: #{resnet_forward.10} parent=0 // loop_body
    %s15 = ssub.s32 %s10, 1
    %s16 = ssub.s32 %s10, 2
    %s17 = sadd.s32 %s10, 1
    %s18 = ssub.s32 %s10, %s17
    %p19 = scmp.eq.s32.totalorder %s18, 0
    %s21 = sadd.s32 %s20, 1
    %s22 = scalar_select %p19, %s20, %s21
    %p25 = pneg %p19
    %p26 = scmp.eq.s32.totalorder %s10, 1
    %p27 = por %p25, %p26
    %p28 = scmp.ne.s32.totalorder %s20, %s23
    %p29 = scmp.eq.s32.totalorder %s10, 0
    %p30 = por %p28, %p29
    %p31 = scmp.ne.s32.totalorder %s20, %s23
    %p32 = scmp.eq.s32.totalorder %s15, 1
    %p33 = por %p31, %p32
    %p34 = scmp.ne.s32.totalorder %s23, %s24
    %p35 = scmp.eq.s32.totalorder %s15, 0
    %p36 = por %p34, %p35
    %p37 = scmp.ne.s32.totalorder %s23, %s24
    %p38 = scmp.eq.s32.totalorder %s16, 1
    %p39 = por %p37, %p38
    %p41 = scmp.ne.s32.totalorder %s24, %s40
    %p42 = scmp.eq.s32.totalorder %s16, 0
    %p43 = por %p41, %p42
    %s45 = sadd.s32 %s44, 1
    %p48 = scmp.eq.s32.totalorder %s10, 1
    %p49 = scmp.ne.s32.totalorder %s44, %s46
    %p50 = scmp.eq.s32.totalorder %s10, 0
    %p51 = por %p49, %p50
    %p52 = scmp.ne.s32.totalorder %s44, %s46
    %p53 = scmp.eq.s32.totalorder %s15, 1
    %p54 = por %p52, %p53
    %p55 = scmp.ne.s32.totalorder %s46, %s47
    %p56 = scmp.eq.s32.totalorder %s15, 0
    %p57 = por %p55, %p56
    %p58 = scmp.ne.s32.totalorder %s46, %s47
    %p59 = scmp.eq.s32.totalorder %s16, 1
    %p60 = por %p58, %p59
    %p62 = scmp.ne.s32.totalorder %s47, %s61
    %p63 = scmp.eq.s32.totalorder %s16, 0
    %p64 = por %p62, %p63
    %s66 = sadd.s32 %s65, 1
    %p69 = scmp.eq.s32.totalorder %s10, 1
    %p70 = scmp.ne.s32.totalorder %s65, %s67
    %p71 = scmp.eq.s32.totalorder %s10, 0
    %p72 = por %p70, %p71
    %p73 = scmp.ne.s32.totalorder %s65, %s67
    %p74 = scmp.eq.s32.totalorder %s15, 1
    %p75 = por %p73, %p74
    %p76 = scmp.ne.s32.totalorder %s67, %s68
    %p77 = scmp.eq.s32.totalorder %s15, 0
    %p78 = por %p76, %p77
    %p79 = scmp.ne.s32.totalorder %s67, %s68
    %p80 = scmp.eq.s32.totalorder %s16, 1
    %p81 = por %p79, %p80
    %p83 = scmp.ne.s32.totalorder %s68, %s82
    %p84 = scmp.eq.s32.totalorder %s16, 0
    %p85 = por %p83, %p84
    %s86 = ssub.s32 %s10, %s17
    %p87 = scmp.eq.s32.totalorder %s86, 0
    %s89 = sadd.s32 %s88, 1
    %s90 = scalar_select %p87, %s88, %s89
    %p93 = pneg %p87
    %p94 = scmp.eq.s32.totalorder %s10, 1
    %p95 = por %p93, %p94
    %p96 = scmp.ne.s32.totalorder %s88, %s91
    %p97 = scmp.eq.s32.totalorder %s10, 0
    %p98 = por %p96, %p97
    %p99 = scmp.ne.s32.totalorder %s88, %s91
    %p100 = scmp.eq.s32.totalorder %s15, 1
    %p101 = por %p99, %p100
    %p102 = scmp.ne.s32.totalorder %s91, %s92
    %p103 = scmp.eq.s32.totalorder %s15, 0
    %p104 = por %p102, %p103
    %p105 = scmp.ne.s32.totalorder %s91, %s92
    %p106 = scmp.eq.s32.totalorder %s16, 1
    %p107 = por %p105, %p106
    %p109 = scmp.ne.s32.totalorder %s92, %s108
    %p110 = scmp.eq.s32.totalorder %s16, 0
    %p111 = por %p109, %p110
    %s112 = ssub.s32 %s10, %s17
    %p113 = scmp.eq.s32.totalorder %s112, 0
    %s115 = sadd.s32 %s114, 1
    %s116 = scalar_select %p113, %s114, %s115
    %p119 = pneg %p113
    %p120 = scmp.eq.s32.totalorder %s10, 1
    %p121 = por %p119, %p120
    %p122 = scmp.ne.s32.totalorder %s114, %s117
    %p123 = scmp.eq.s32.totalorder %s10, 0
    %p124 = por %p122, %p123
    %p125 = scmp.ne.s32.totalorder %s114, %s117
    %p126 = scmp.eq.s32.totalorder %s15, 1
    %p127 = por %p125, %p126
    %p128 = scmp.ne.s32.totalorder %s117, %s118
    %p129 = scmp.eq.s32.totalorder %s15, 0
    %p130 = por %p128, %p129
    %p131 = scmp.ne.s32.totalorder %s117, %s118
    %p132 = scmp.eq.s32.totalorder %s16, 1
    %p133 = por %p131, %p132
    %p135 = scmp.ne.s32.totalorder %s118, %s134
    %p136 = scmp.eq.s32.totalorder %s16, 0
    %p137 = por %p135, %p136
    %p138 = scmp.le.s32.totalorder 1, %s10
    %p139 = scmp.lt.s32.totalorder %s10, 3
    %p140 = pnand %p138, %p139
    %p141 = pneg %p140
    // Predicated region
    $region9: #{resnet_forward.10} parent=5 // pred_check
      _
    $region10: #{resnet_forward.10} parent=5 // pred_check_branch
      %143 = sbr.rel (%p140) target = $region12
    $region11: #{resnet_forward.10} parent=5 // pred_region
      %s144 = ssub.s32 %s10, 1
      // Predicated region
      $region13: #{resnet_forward.10} parent=11 // pred_check
        %p145 = pneg %p57
      $region14: #{resnet_forward.10} parent=11 // pred_check_branch
        %147 = sbr.rel (%p145) target = $region16
      $region15: #{resnet_forward.10} parent=11 // pred_region
        _
      $region16: #{resnet_forward.10} parent=11 // pred_fallthru
        _
      // Predicated region
      $region17: #{resnet_forward.10} parent=11 // pred_check
        %p148 = pneg %p78
      $region18: #{resnet_forward.10} parent=11 // pred_check_branch
        %150 = sbr.rel (%p148) target = $region20
      $region19: #{resnet_forward.10} parent=11 // pred_region
        _
      $region20: #{resnet_forward.10} parent=11 // pred_fallthru
        _
    $region12: #{resnet_forward.10} parent=5 // pred_fallthru
      _
    %p151 = scmp.lt.s32.totalorder %s10, 2
    // Predicated region
    $region21: #{resnet_forward.10} parent=5 // pred_check
      %p152 = pneg %p151
    $region22: #{resnet_forward.10} parent=5 // pred_check_branch
      %154 = sbr.rel (%p152) target = $region24
    $region23: #{resnet_forward.10} parent=5 // pred_region
      // Predicated region
      $region25: #{resnet_forward.10} parent=23 // pred_check
        %p155 = pneg %p30
      $region26: #{resnet_forward.10} parent=23 // pred_check_branch
        %157 = sbr.rel (%p155) target = $region28
      $region27: #{resnet_forward.10} parent=23 // pred_region
        %s158 = smul.u32 32, %s10
        %p159 = scmp.lt.s32.totalorder %s158, 63
        %s160 = scalar_select %p159, %s158, 63
        %s161 = smul.addr %s160, 2
        %s162 = smul.addr %s161, 4
        %s163 = scalar_lea.vmem %s0, %s162
        %s164 = smul.u32 32, %s10
      $region28: #{resnet_forward.10} parent=23 // pred_fallthru
        _
      // Predicated region
      $region29: #{resnet_forward.10} parent=23 // pred_check
        %p165 = pneg %p98
      $region30: #{resnet_forward.10} parent=23 // pred_check_branch
        %167 = sbr.rel (%p165) target = $region32
      $region31: #{resnet_forward.10} parent=23 // pred_region
        %s168 = smul.u32 32, %s10
        %p169 = scmp.lt.s32.totalorder %s168, 63
        %s170 = scalar_select %p169, %s168, 63
        %s171 = smul.addr %s170, 4
        %s172 = scalar_lea.vmem %s3, %s171
        %s173 = smul.u32 32, %s10
      $region32: #{resnet_forward.10} parent=23 // pred_fallthru
        _
    $region24: #{resnet_forward.10} parent=5 // pred_fallthru
      _
    %p174 = scmp.le.s32.totalorder 1, %s10
    %p175 = scmp.lt.s32.totalorder %s10, 3
    %p176 = pnand %p174, %p175
    %p177 = pneg %p176
    // Predicated region
    $region33: #{resnet_forward.10} parent=5 // pred_check
      _
    $region34: #{resnet_forward.10} parent=5 // pred_check_branch
      %179 = sbr.rel (%p176) target = $region36
    $region35: #{resnet_forward.10} parent=5 // pred_region
      %s180 = ssub.s32 %s10, 1
      %s181 = smul.u32 32, %s15
      %p182 = scmp.lt.s32.totalorder %s181, 63
      %s183 = scalar_select %p182, %s181, 63
      %s184 = smul.addr %s183, 2
      %s185 = smul.addr %s184, 4
      %s186 = scalar_lea.vmem %s0, %s185
      %p187 = pneg %p36
      %p188 = pneg %p33
      %p189 = pneg %p57
      %p190 = pneg %p54
      %p191 = pneg %p78
      %p192 = pneg %p75
      %s193 = smul.u32 32, %s15
      %p194 = scmp.lt.s32.totalorder %s193, 63
      %s195 = scalar_select %p194, %s193, 63
      %s196 = smul.addr %s195, 4
      %s197 = scalar_lea.vmem %s3, %s196
      %p198 = pneg %p104
      %p199 = pneg %p101
      %p200 = pneg %p130
      %p201 = pneg %p127
      %s202 = smul.u32 32, %s15
      %p203 = scmp.lt.s32.totalorder %s202, 63
      %s204 = scalar_select %p203, %s202, 63
      %s205 = smul.addr %s204, 4
      %s206 = scalar_lea.vmem %s4, %s205
      %s207 = smul.u32 32, %s15
      %p208 = scmp.lt.s32.totalorder %s207, 63
      %s209 = scalar_select %p208, %s207, 63
      %s210 = smul.addr %s209, 2
      %s211 = smul.addr %s210, 4
      %s212 = scalar_lea.vmem %s0, %s211
      %s213 = smul.u32 32, %s15
      %s214 = smul.u32 32, %s15
      %p215 = scmp.lt.s32.totalorder %s214, 63
      %s216 = scalar_select %p215, %s214, 63
      %s217 = smul.addr %s216, 4
      %s218 = scalar_lea.vmem %s3, %s217
      %s219 = smul.u32 32, %s15
      %s220 = smul.u32 32, %s15
      %p221 = scmp.lt.s32.totalorder %s220, 63
      %s222 = scalar_select %p221, %s220, 63
      %s223 = smul.addr %s222, 4
      %s224 = scalar_lea.vmem %s4, %s223
      %s225 = smul.u32 32, %s15
      %v227 = vld [vmem:[%s212] sm:$0xff]
      %v228 = vld [vmem:[%s212 + $0x8] sm:$0xff]
      %v229 = vld [vmem:[%s212 + $0x10] sm:$0xff]
      %v230 = vld [vmem:[%s212 + $0x18] sm:$0xff]
      %v231 = vld [vmem:[%s212 + $0x20] sm:$0xff]
      %v232 = vld [vmem:[%s212 + $0x28] sm:$0xff]
      %v233 = vld [vmem:[%s212 + $0x30] sm:$0xff]
      %v234 = vld [vmem:[%s212 + $0x38] sm:$0xff]
      %v235 = vld [vmem:[%s212 + $0x40] sm:$0xff]
      %v236 = vld [vmem:[%s212 + $0x48] sm:$0xff]
      %v237 = vld [vmem:[%s212 + $0x50] sm:$0xff]
      %v238 = vld [vmem:[%s212 + $0x58] sm:$0xff]
      %v239 = vld [vmem:[%s212 + $0x60] sm:$0xff]
      %v240 = vld [vmem:[%s212 + $0x68] sm:$0xff]
      %v241 = vld [vmem:[%s212 + $0x70] sm:$0xff]
      %v242 = vld [vmem:[%s212 + $0x78] sm:$0xff]
      %v243 = vld [vmem:[%s212 + $0x80] sm:$0xff]
      %v244 = vld [vmem:[%s212 + $0x88] sm:$0xff]
      %v245 = vld [vmem:[%s212 + $0x90] sm:$0xff]
      %v246 = vld [vmem:[%s212 + $0x98] sm:$0xff]
      %v247 = vld [vmem:[%s212 + $0xa0] sm:$0xff]
      %v248 = vld [vmem:[%s212 + $0xa8] sm:$0xff]
      %v249 = vld [vmem:[%s212 + $0xb0] sm:$0xff]
      %v250 = vld [vmem:[%s212 + $0xb8] sm:$0xff]
      %v251 = vld [vmem:[%s212 + $0xc0] sm:$0xff]
      %v252 = vld [vmem:[%s212 + $0xc8] sm:$0xff]
      %v253 = vld [vmem:[%s212 + $0xd0] sm:$0xff]
      %v254 = vld [vmem:[%s212 + $0xd8] sm:$0xff]
      %v255 = vld [vmem:[%s212 + $0xe0] sm:$0xff]
      %v256 = vld [vmem:[%s212 + $0xe8] sm:$0xff]
      %v257 = vld [vmem:[%s212 + $0xf0] sm:$0xff]
      %v258 = vld [vmem:[%s212 + $0xf8] sm:$0xff]
      %v259 = vld [vmem:[%s1] sm:$0xf]
      %v260 = vld [vmem:[%s1 + $0x4] sm:$0xf]
      %v261 = vld [vmem:[%s1 + $0x8] sm:$0xf]
      %v262 = vld [vmem:[%s1 + $0xc] sm:$0xf]
      %v263 = vld [vmem:[%s1 + $0x10] sm:$0xf]
      %v264 = vld [vmem:[%s1 + $0x14] sm:$0xf]
      %v265 = vld [vmem:[%s1 + $0x18] sm:$0xf]
      %v266 = vld [vmem:[%s1 + $0x1c] sm:$0xf]
      %v267 = vld [vmem:[%s1 + $0x20] sm:$0xf]
      %v268 = vld [vmem:[%s1 + $0x24] sm:$0xf]
      %v269 = vld [vmem:[%s1 + $0x28] sm:$0xf]
      %v270 = vld [vmem:[%s1 + $0x2c] sm:$0xf]
      %v271 = vld [vmem:[%s1 + $0x30] sm:$0xf]
      %v272 = vld [vmem:[%s1 + $0x34] sm:$0xf]
      %v273 = vld [vmem:[%s1 + $0x38] sm:$0xf]
      %v274 = vld [vmem:[%s1 + $0x3c] sm:$0xf]
      %v275 = vld [vmem:[%s1 + $0x40] sm:$0xf]
      %v276 = vld [vmem:[%s1 + $0x44] sm:$0xf]
      %v277 = vld [vmem:[%s2] sm:$0x1]
      %v279 = vperm.slane %v277, 0
      %v313 = vunpack.c.l.b16 %v227
      %v314 = vunpack.c.h.b16 %v227
      %v315 = vunpack.c.l.b16 %v228
      %v316 = vunpack.c.h.b16 %v228
      %v317 = vunpack.c.l.b16 %v229
      %v318 = vunpack.c.h.b16 %v229
      %v319 = vunpack.c.l.b16 %v230
      %v320 = vunpack.c.h.b16 %v230
      %v321 = vunpack.c.l.b16 %v231
      %v322 = vunpack.c.h.b16 %v231
      %v323 = vunpack.c.l.b16 %v232
      %v324 = vunpack.c.h.b16 %v232
      %v325 = vunpack.c.l.b16 %v233
      %v326 = vunpack.c.h.b16 %v233
      %v327 = vunpack.c.l.b16 %v234
      %v328 = vunpack.c.h.b16 %v234
      %v329 = vunpack.c.l.b16 %v235
      %v330 = vunpack.c.h.b16 %v235
      %v331 = vunpack.c.l.b16 %v236
      %v332 = vunpack.c.h.b16 %v236
      %v333 = vunpack.c.l.b16 %v237
      %v334 = vunpack.c.h.b16 %v237
      %v335 = vunpack.c.l.b16 %v238
      %v336 = vunpack.c.h.b16 %v238
      %v337 = vunpack.c.l.b16 %v239
      %v338 = vunpack.c.h.b16 %v239
      %v339 = vunpack.c.l.b16 %v240
      %v340 = vunpack.c.h.b16 %v240
      %v341 = vunpack.c.l.b16 %v241
      %v342 = vunpack.c.h.b16 %v241
      %v343 = vunpack.c.l.b16 %v242
      %v344 = vunpack.c.h.b16 %v242
      %v345 = vunpack.c.l.b16 %v243
      %v346 = vunpack.c.h.b16 %v243
      %v347 = vunpack.c.l.b16 %v244
      %v348 = vunpack.c.h.b16 %v244
      %v349 = vunpack.c.l.b16 %v245
      %v350 = vunpack.c.h.b16 %v245
      %v351 = vunpack.c.l.b16 %v246
      %v352 = vunpack.c.h.b16 %v246
      %v353 = vunpack.c.l.b16 %v247
      %v354 = vunpack.c.h.b16 %v247
      %v355 = vunpack.c.l.b16 %v248
      %v356 = vunpack.c.h.b16 %v248
      %v357 = vunpack.c.l.b16 %v249
      %v358 = vunpack.c.h.b16 %v249
      %v359 = vunpack.c.l.b16 %v250
      %v360 = vunpack.c.h.b16 %v250
      %v361 = vunpack.c.l.b16 %v251
      %v362 = vunpack.c.h.b16 %v251
      %v363 = vunpack.c.l.b16 %v252
      %v364 = vunpack.c.h.b16 %v252
      %v365 = vunpack.c.l.b16 %v253
      %v366 = vunpack.c.h.b16 %v253
      %v367 = vunpack.c.l.b16 %v254
      %v368 = vunpack.c.h.b16 %v254
      %v369 = vunpack.c.l.b16 %v255
      %v370 = vunpack.c.h.b16 %v255
      %v371 = vunpack.c.l.b16 %v256
      %v372 = vunpack.c.h.b16 %v256
      %v373 = vunpack.c.l.b16 %v257
      %v374 = vunpack.c.h.b16 %v257
      %v375 = vunpack.c.l.b16 %v258
      %v376 = vunpack.c.h.b16 %v258
      %v377 = vpack.c.b16 %v315, %v313
      %v378 = vpack.c.b16 %v316, %v314
      %v379 = vpack.c.b16 %v319, %v317
      %v380 = vpack.c.b16 %v320, %v318
      %v381 = vpack.c.b16 %v323, %v321
      %v382 = vpack.c.b16 %v324, %v322
      %v383 = vpack.c.b16 %v327, %v325
      %v384 = vpack.c.b16 %v328, %v326
      %v385 = vpack.c.b16 %v331, %v329
      %v386 = vpack.c.b16 %v332, %v330
      %v387 = vpack.c.b16 %v335, %v333
      %v388 = vpack.c.b16 %v336, %v334
      %v389 = vpack.c.b16 %v339, %v337
      %v390 = vpack.c.b16 %v340, %v338
      %v391 = vpack.c.b16 %v343, %v341
      %v392 = vpack.c.b16 %v344, %v342
      %v393 = vpack.c.b16 %v347, %v345
      %v394 = vpack.c.b16 %v348, %v346
      %v395 = vpack.c.b16 %v351, %v349
      %v396 = vpack.c.b16 %v352, %v350
      %v397 = vpack.c.b16 %v355, %v353
      %v398 = vpack.c.b16 %v356, %v354
      %v399 = vpack.c.b16 %v359, %v357
      %v400 = vpack.c.b16 %v360, %v358
      %v401 = vpack.c.b16 %v363, %v361
      %v402 = vpack.c.b16 %v364, %v362
      %v403 = vpack.c.b16 %v367, %v365
      %v404 = vpack.c.b16 %v368, %v366
      %v405 = vpack.c.b16 %v371, %v369
      %v406 = vpack.c.b16 %v372, %v370
      %v407 = vpack.c.b16 %v375, %v373
      %v408 = vpack.c.b16 %v376, %v374
      %v443 = vunpack.c.l.b16 %v259
      %v444 = vunpack.c.l.b16 %v260
      %v445 = vunpack.c.l.b16 %v261
      %v446 = vunpack.c.l.b16 %v262
      %v447 = vunpack.c.l.b16 %v263
      %v448 = vunpack.c.l.b16 %v264
      %v449 = vunpack.c.l.b16 %v265
      %v450 = vunpack.c.l.b16 %v266
      %v451 = vunpack.c.l.b16 %v267
      %v452 = vunpack.c.l.b16 %v268
      %v453 = vunpack.c.l.b16 %v269
      %v454 = vunpack.c.l.b16 %v270
      %v455 = vunpack.c.l.b16 %v271
      %v456 = vunpack.c.l.b16 %v272
      %v457 = vunpack.c.l.b16 %v273
      %v458 = vunpack.c.l.b16 %v274
      %v459 = vunpack.c.l.b16 %v275
      %v460 = vunpack.c.l.b16 %v276
      %v461 = vpack.c.b16 %v444, %v443
      %v462 = vpack.c.b16 %v446, %v445
      %v463 = vpack.c.b16 %v448, %v447
      %v464 = vpack.c.b16 %v450, %v449
      %v465 = vpack.c.b16 %v452, %v451
      %v466 = vpack.c.b16 %v454, %v453
      %v467 = vpack.c.b16 %v456, %v455
      %v468 = vpack.c.b16 %v458, %v457
      %v469 = vpack.c.b16 %v460, %v459
      %vm479 = vcmask 130048
      %v481 = vsel %vm479, %v378, 0
      %v484 = vsel %vm479, %v380, 0
      %v487 = vsel %vm479, %v382, 0
      %v490 = vsel %vm479, %v384, 0
      %v493 = vsel %vm479, %v386, 0
      %v496 = vsel %vm479, %v388, 0
      %v499 = vsel %vm479, %v390, 0
      %v502 = vsel %vm479, %v392, 0
      %v505 = vsel %vm479, %v394, 0
      %v508 = vsel %vm479, %v396, 0
      %v511 = vsel %vm479, %v398, 0
      %v514 = vsel %vm479, %v400, 0
      %v517 = vsel %vm479, %v402, 0
      %v520 = vsel %vm479, %v404, 0
      %v523 = vsel %vm479, %v406, 0
      %v526 = vsel %vm479, %v408, 0
      %528 = vmatpush.bf16.msra.mxu0 %v468
      %529 = vmatpush.bf16.msra.mxu0 %v467
      %530 = vmatpush.bf16.msra.mxu0 %v466
      %531 = vmatpush.bf16.msra.mxu0 %v465
      %532 = vmatpush.bf16.msra.mxu0 %v464
      %533 = vmatpush.bf16.msra.mxu0 %v463
      %534 = vmatpush.bf16.msra.mxu0 %v462
      %535 = vmatpush.bf16.msra.mxu0 %v461
      %536 = vmatmul.bf16.gmra.mxu0 %v377
      %v537 = vpop.f32.mrf.mxu0
      %v538 = vadd.f32 %v279, %v537
      %v539 = vpop.f32.mrf.mxu0
      %v540 = vadd.f32 %v279, %v539
      %541 = vmatmul.bf16.gmra.mxu0 %v379
      %v542 = vpop.f32.mrf.mxu0
      %v543 = vadd.f32 %v279, %v542
      %v544 = vpop.f32.mrf.mxu0
      %v545 = vadd.f32 %v279, %v544
      %546 = vmatmul.bf16.gmra.mxu0 %v381
      %v547 = vpop.f32.mrf.mxu0
      %v548 = vadd.f32 %v279, %v547
      %v549 = vpop.f32.mrf.mxu0
      %v550 = vadd.f32 %v279, %v549
      %551 = vmatmul.bf16.gmra.mxu0 %v383
      %v552 = vpop.f32.mrf.mxu0
      %v553 = vadd.f32 %v279, %v552
      %v554 = vpop.f32.mrf.mxu0
      %v555 = vadd.f32 %v279, %v554
      %556 = vmatmul.bf16.gmra.mxu0 %v385
      %v557 = vpop.f32.mrf.mxu0
      %v558 = vadd.f32 %v279, %v557
      %v559 = vpop.f32.mrf.mxu0
      %v560 = vadd.f32 %v279, %v559
      %561 = vmatmul.bf16.gmra.mxu0 %v387
      %v562 = vpop.f32.mrf.mxu0
      %v563 = vadd.f32 %v279, %v562
      %v564 = vpop.f32.mrf.mxu0
      %v565 = vadd.f32 %v279, %v564
      %566 = vmatmul.bf16.gmra.mxu0 %v389
      %v567 = vpop.f32.mrf.mxu0
      %v568 = vadd.f32 %v279, %v567
      %v569 = vpop.f32.mrf.mxu0
      %v570 = vadd.f32 %v279, %v569
      %571 = vmatmul.bf16.gmra.mxu0 %v391
      %v572 = vpop.f32.mrf.mxu0
      %v573 = vadd.f32 %v279, %v572
      %v574 = vpop.f32.mrf.mxu0
      %v575 = vadd.f32 %v279, %v574
      %576 = vmatmul.bf16.gmra.mxu0 %v393
      %v577 = vpop.f32.mrf.mxu0
      %v578 = vadd.f32 %v279, %v577
      %v579 = vpop.f32.mrf.mxu0
      %v580 = vadd.f32 %v279, %v579
      %581 = vmatmul.bf16.gmra.mxu0 %v395
      %v582 = vpop.f32.mrf.mxu0
      %v583 = vadd.f32 %v279, %v582
      %v584 = vpop.f32.mrf.mxu0
      %v585 = vadd.f32 %v279, %v584
      %586 = vmatmul.bf16.gmra.mxu0 %v397
      %v587 = vpop.f32.mrf.mxu0
      %v588 = vadd.f32 %v279, %v587
      %v589 = vpop.f32.mrf.mxu0
      %v590 = vadd.f32 %v279, %v589
      %591 = vmatmul.bf16.gmra.mxu0 %v399
      %v592 = vpop.f32.mrf.mxu0
      %v593 = vadd.f32 %v279, %v592
      %v594 = vpop.f32.mrf.mxu0
      %v595 = vadd.f32 %v279, %v594
      %596 = vmatmul.bf16.gmra.mxu0 %v401
      %v597 = vpop.f32.mrf.mxu0
      %v598 = vadd.f32 %v279, %v597
      %v599 = vpop.f32.mrf.mxu0
      %v600 = vadd.f32 %v279, %v599
      %601 = vmatmul.bf16.gmra.mxu0 %v403
      %v602 = vpop.f32.mrf.mxu0
      %v603 = vadd.f32 %v279, %v602
      %v604 = vpop.f32.mrf.mxu0
      %v605 = vadd.f32 %v279, %v604
      %606 = vmatmul.bf16.gmra.mxu0 %v405
      %v607 = vpop.f32.mrf.mxu0
      %v608 = vadd.f32 %v279, %v607
      %v609 = vpop.f32.mrf.mxu0
      %v610 = vadd.f32 %v279, %v609
      %611 = vmatmul.bf16.gmra.mxu0 %v407
      %v612 = vpop.f32.mrf.mxu0
      %v613 = vadd.f32 %v279, %v612
      %v614 = vpop.f32.mrf.mxu0
      %v615 = vadd.f32 %v279, %v614
      %616 = vdwg.mxu0
      %617 = vmatpush.bf16.msra.mxu0 0
      %618 = vmatpush.bf16.msra.mxu0 0
      %619 = vmatpush.bf16.msra.mxu0 0
      %620 = vmatpush.bf16.msra.mxu0 0
      %621 = vmatpush.bf16.msra.mxu0 0
      %622 = vmatpush.bf16.msra.mxu0 0
      %623 = vmatpush.bf16.msra.mxu0 0
      %624 = vmatpush.bf16.msra.mxu0 %v469
      %625 = vmatmul.bf16.gmra.mxu0 %v481
      %v626 = vpop.f32.mrf.mxu0
      %v627 = vadd.f32 %v538, %v626
      %v628 = vpop.f32.mrf.mxu0
      %v629 = vadd.f32 %v540, %v628
      %630 = vmatmul.bf16.gmra.mxu0 %v484
      %v631 = vpop.f32.mrf.mxu0
      %v632 = vadd.f32 %v543, %v631
      %v633 = vpop.f32.mrf.mxu0
      %v634 = vadd.f32 %v545, %v633
      %635 = vmatmul.bf16.gmra.mxu0 %v487
      %v636 = vpop.f32.mrf.mxu0
      %v637 = vadd.f32 %v548, %v636
      %v638 = vpop.f32.mrf.mxu0
      %v639 = vadd.f32 %v550, %v638
      %640 = vmatmul.bf16.gmra.mxu0 %v490
      %v641 = vpop.f32.mrf.mxu0
      %v642 = vadd.f32 %v553, %v641
      %v643 = vpop.f32.mrf.mxu0
      %v644 = vadd.f32 %v555, %v643
      %645 = vmatmul.bf16.gmra.mxu0 %v493
      %v646 = vpop.f32.mrf.mxu0
      %v647 = vadd.f32 %v558, %v646
      %v648 = vpop.f32.mrf.mxu0
      %v649 = vadd.f32 %v560, %v648
      %650 = vmatmul.bf16.gmra.mxu0 %v496
      %v651 = vpop.f32.mrf.mxu0
      %v652 = vadd.f32 %v563, %v651
      %v653 = vpop.f32.mrf.mxu0
      %v654 = vadd.f32 %v565, %v653
      %655 = vmatmul.bf16.gmra.mxu0 %v499
      %v656 = vpop.f32.mrf.mxu0
      %v657 = vadd.f32 %v568, %v656
      %v658 = vpop.f32.mrf.mxu0
      %v659 = vadd.f32 %v570, %v658
      %660 = vmatmul.bf16.gmra.mxu0 %v502
      %v661 = vpop.f32.mrf.mxu0
      %v662 = vadd.f32 %v573, %v661
      %v663 = vpop.f32.mrf.mxu0
      %v664 = vadd.f32 %v575, %v663
      %665 = vmatmul.bf16.gmra.mxu0 %v505
      %v666 = vpop.f32.mrf.mxu0
      %v667 = vadd.f32 %v578, %v666
      %v668 = vpop.f32.mrf.mxu0
      %v669 = vadd.f32 %v580, %v668
      %670 = vmatmul.bf16.gmra.mxu0 %v508
      %v671 = vpop.f32.mrf.mxu0
      %v672 = vadd.f32 %v583, %v671
      %v673 = vpop.f32.mrf.mxu0
      %v674 = vadd.f32 %v585, %v673
      %675 = vmatmul.bf16.gmra.mxu0 %v511
      %v676 = vpop.f32.mrf.mxu0
      %v677 = vadd.f32 %v588, %v676
      %v678 = vpop.f32.mrf.mxu0
      %v679 = vadd.f32 %v590, %v678
      %680 = vmatmul.bf16.gmra.mxu0 %v514
      %v681 = vpop.f32.mrf.mxu0
      %v682 = vadd.f32 %v593, %v681
      %v683 = vpop.f32.mrf.mxu0
      %v684 = vadd.f32 %v595, %v683
      %685 = vmatmul.bf16.gmra.mxu0 %v517
      %v686 = vpop.f32.mrf.mxu0
      %v687 = vadd.f32 %v598, %v686
      %v688 = vpop.f32.mrf.mxu0
      %v689 = vadd.f32 %v600, %v688
      %690 = vmatmul.bf16.gmra.mxu0 %v520
      %v691 = vpop.f32.mrf.mxu0
      %v692 = vadd.f32 %v603, %v691
      %v693 = vpop.f32.mrf.mxu0
      %v694 = vadd.f32 %v605, %v693
      %695 = vmatmul.bf16.gmra.mxu0 %v523
      %v696 = vpop.f32.mrf.mxu0
      %v697 = vadd.f32 %v608, %v696
      %v698 = vpop.f32.mrf.mxu0
      %v699 = vadd.f32 %v610, %v698
      %700 = vmatmul.bf16.gmra.mxu0 %v526
      %v701 = vpop.f32.mrf.mxu0
      %v702 = vadd.f32 %v613, %v701
      %v703 = vpop.f32.mrf.mxu0
      %v704 = vadd.f32 %v615, %v703
      %705 = vdwg.mxu0
      %v706 = vld [vmem:[%s218] sm:$0xf]
      %v707 = vld [vmem:[%s218 + $0x4] sm:$0xf]
      %v708 = vld [vmem:[%s218 + $0x8] sm:$0xf]
      %v709 = vld [vmem:[%s218 + $0xc] sm:$0xf]
      %v710 = vld [vmem:[%s218 + $0x10] sm:$0xf]
      %v711 = vld [vmem:[%s218 + $0x14] sm:$0xf]
      %v712 = vld [vmem:[%s218 + $0x18] sm:$0xf]
      %v713 = vld [vmem:[%s218 + $0x1c] sm:$0xf]
      %v714 = vld [vmem:[%s218 + $0x20] sm:$0xf]
      %v715 = vld [vmem:[%s218 + $0x24] sm:$0xf]
      %v716 = vld [vmem:[%s218 + $0x28] sm:$0xf]
      %v717 = vld [vmem:[%s218 + $0x2c] sm:$0xf]
      %v718 = vld [vmem:[%s218 + $0x30] sm:$0xf]
      %v719 = vld [vmem:[%s218 + $0x34] sm:$0xf]
      %v720 = vld [vmem:[%s218 + $0x38] sm:$0xf]
      %v721 = vld [vmem:[%s218 + $0x3c] sm:$0xf]
      %v722 = vld [vmem:[%s218 + $0x40] sm:$0xf]
      %v723 = vld [vmem:[%s218 + $0x44] sm:$0xf]
      %v724 = vld [vmem:[%s218 + $0x48] sm:$0xf]
      %v725 = vld [vmem:[%s218 + $0x4c] sm:$0xf]
      %v726 = vld [vmem:[%s218 + $0x50] sm:$0xf]
      %v727 = vld [vmem:[%s218 + $0x54] sm:$0xf]
      %v728 = vld [vmem:[%s218 + $0x58] sm:$0xf]
      %v729 = vld [vmem:[%s218 + $0x5c] sm:$0xf]
      %v730 = vld [vmem:[%s218 + $0x60] sm:$0xf]
      %v731 = vld [vmem:[%s218 + $0x64] sm:$0xf]
      %v732 = vld [vmem:[%s218 + $0x68] sm:$0xf]
      %v733 = vld [vmem:[%s218 + $0x6c] sm:$0xf]
      %v734 = vld [vmem:[%s218 + $0x70] sm:$0xf]
      %v735 = vld [vmem:[%s218 + $0x74] sm:$0xf]
      %v736 = vld [vmem:[%s218 + $0x78] sm:$0xf]
      %v737 = vld [vmem:[%s218 + $0x7c] sm:$0xf]
      %v738 = vunpack.c.l.bf16 %v706
      %v739 = vunpack.c.l.bf16 %v707
      %v740 = vunpack.c.l.bf16 %v708
      %v741 = vunpack.c.l.bf16 %v709
      %v742 = vunpack.c.l.bf16 %v710
      %v743 = vunpack.c.l.bf16 %v711
      %v744 = vunpack.c.l.bf16 %v712
      %v745 = vunpack.c.l.bf16 %v713
      %v746 = vunpack.c.l.bf16 %v714
      %v747 = vunpack.c.l.bf16 %v715
      %v748 = vunpack.c.l.bf16 %v716
      %v749 = vunpack.c.l.bf16 %v717
      %v750 = vunpack.c.l.bf16 %v718
      %v751 = vunpack.c.l.bf16 %v719
      %v752 = vunpack.c.l.bf16 %v720
      %v753 = vunpack.c.l.bf16 %v721
      %v754 = vunpack.c.l.bf16 %v722
      %v755 = vunpack.c.l.bf16 %v723
      %v756 = vunpack.c.l.bf16 %v724
      %v757 = vunpack.c.l.bf16 %v725
      %v758 = vunpack.c.l.bf16 %v726
      %v759 = vunpack.c.l.bf16 %v727
      %v760 = vunpack.c.l.bf16 %v728
      %v761 = vunpack.c.l.bf16 %v729
      %v762 = vunpack.c.l.bf16 %v730
      %v763 = vunpack.c.l.bf16 %v731
      %v764 = vunpack.c.l.bf16 %v732
      %v765 = vunpack.c.l.bf16 %v733
      %v766 = vunpack.c.l.bf16 %v734
      %v767 = vunpack.c.l.bf16 %v735
      %v768 = vunpack.c.l.bf16 %v736
      %v769 = vunpack.c.l.bf16 %v737
      %v770 = vadd.f32 %v627, %v738
      %v771 = vadd.f32 %v629, %v739
      %v772 = vadd.f32 %v632, %v740
      %v773 = vadd.f32 %v634, %v741
      %v774 = vadd.f32 %v637, %v742
      %v775 = vadd.f32 %v639, %v743
      %v776 = vadd.f32 %v642, %v744
      %v777 = vadd.f32 %v644, %v745
      %v778 = vadd.f32 %v647, %v746
      %v779 = vadd.f32 %v649, %v747
      %v780 = vadd.f32 %v652, %v748
      %v781 = vadd.f32 %v654, %v749
      %v782 = vadd.f32 %v657, %v750
      %v783 = vadd.f32 %v659, %v751
      %v784 = vadd.f32 %v662, %v752
      %v785 = vadd.f32 %v664, %v753
      %v786 = vadd.f32 %v667, %v754
      %v787 = vadd.f32 %v669, %v755
      %v788 = vadd.f32 %v672, %v756
      %v789 = vadd.f32 %v674, %v757
      %v790 = vadd.f32 %v677, %v758
      %v791 = vadd.f32 %v679, %v759
      %v792 = vadd.f32 %v682, %v760
      %v793 = vadd.f32 %v684, %v761
      %v794 = vadd.f32 %v687, %v762
      %v795 = vadd.f32 %v689, %v763
      %v796 = vadd.f32 %v692, %v764
      %v797 = vadd.f32 %v694, %v765
      %v798 = vadd.f32 %v697, %v766
      %v799 = vadd.f32 %v699, %v767
      %v800 = vadd.f32 %v702, %v768
      %v801 = vadd.f32 %v704, %v769
      %v802 = vmax.f32 %v770, 0.0
      %v803 = vmax.f32 %v771, 0.0
      %v804 = vmax.f32 %v772, 0.0
      %v805 = vmax.f32 %v773, 0.0
      %v806 = vmax.f32 %v774, 0.0
      %v807 = vmax.f32 %v775, 0.0
      %v808 = vmax.f32 %v776, 0.0
      %v809 = vmax.f32 %v777, 0.0
      %v810 = vmax.f32 %v778, 0.0
      %v811 = vmax.f32 %v779, 0.0
      %v812 = vmax.f32 %v780, 0.0
      %v813 = vmax.f32 %v781, 0.0
      %v814 = vmax.f32 %v782, 0.0
      %v815 = vmax.f32 %v783, 0.0
      %v816 = vmax.f32 %v784, 0.0
      %v817 = vmax.f32 %v785, 0.0
      %v818 = vmax.f32 %v786, 0.0
      %v819 = vmax.f32 %v787, 0.0
      %v820 = vmax.f32 %v788, 0.0
      %v821 = vmax.f32 %v789, 0.0
      %v822 = vmax.f32 %v790, 0.0
      %v823 = vmax.f32 %v791, 0.0
      %v824 = vmax.f32 %v792, 0.0
      %v825 = vmax.f32 %v793, 0.0
      %v826 = vmax.f32 %v794, 0.0
      %v827 = vmax.f32 %v795, 0.0
      %v828 = vmax.f32 %v796, 0.0
      %v829 = vmax.f32 %v797, 0.0
      %v830 = vmax.f32 %v798, 0.0
      %v831 = vmax.f32 %v799, 0.0
      %v832 = vmax.f32 %v800, 0.0
      %v833 = vmax.f32 %v801, 0.0
      %v834 = vpack.c.bf16 %v802, %v802
      %v835 = vpack.c.bf16 %v803, %v803
      %v836 = vpack.c.bf16 %v804, %v804
      %v837 = vpack.c.bf16 %v805, %v805
      %v838 = vpack.c.bf16 %v806, %v806
      %v839 = vpack.c.bf16 %v807, %v807
      %v840 = vpack.c.bf16 %v808, %v808
      %v841 = vpack.c.bf16 %v809, %v809
      %v842 = vpack.c.bf16 %v810, %v810
      %v843 = vpack.c.bf16 %v811, %v811
      %v844 = vpack.c.bf16 %v812, %v812
      %v845 = vpack.c.bf16 %v813, %v813
      %v846 = vpack.c.bf16 %v814, %v814
      %v847 = vpack.c.bf16 %v815, %v815
      %v848 = vpack.c.bf16 %v816, %v816
      %v849 = vpack.c.bf16 %v817, %v817
      %v850 = vpack.c.bf16 %v818, %v818
      %v851 = vpack.c.bf16 %v819, %v819
      %v852 = vpack.c.bf16 %v820, %v820
      %v853 = vpack.c.bf16 %v821, %v821
      %v854 = vpack.c.bf16 %v822, %v822
      %v855 = vpack.c.bf16 %v823, %v823
      %v856 = vpack.c.bf16 %v824, %v824
      %v857 = vpack.c.bf16 %v825, %v825
      %v858 = vpack.c.bf16 %v826, %v826
      %v859 = vpack.c.bf16 %v827, %v827
      %v860 = vpack.c.bf16 %v828, %v828
      %v861 = vpack.c.bf16 %v829, %v829
      %v862 = vpack.c.bf16 %v830, %v830
      %v863 = vpack.c.bf16 %v831, %v831
      %v864 = vpack.c.bf16 %v832, %v832
      %v865 = vpack.c.bf16 %v833, %v833
      %866 = vst [vmem:[%s224] sm:$0xf] %v834
      %867 = vst [vmem:[%s224 + $0x4] sm:$0xf] %v835
      %868 = vst [vmem:[%s224 + $0x8] sm:$0xf] %v836
      %869 = vst [vmem:[%s224 + $0xc] sm:$0xf] %v837
      %870 = vst [vmem:[%s224 + $0x10] sm:$0xf] %v838
      %871 = vst [vmem:[%s224 + $0x14] sm:$0xf] %v839
      %872 = vst [vmem:[%s224 + $0x18] sm:$0xf] %v840
      %873 = vst [vmem:[%s224 + $0x1c] sm:$0xf] %v841
      %874 = vst [vmem:[%s224 + $0x20] sm:$0xf] %v842
      %875 = vst [vmem:[%s224 + $0x24] sm:$0xf] %v843
      %876 = vst [vmem:[%s224 + $0x28] sm:$0xf] %v844
      %877 = vst [vmem:[%s224 + $0x2c] sm:$0xf] %v845
      %878 = vst [vmem:[%s224 + $0x30] sm:$0xf] %v846
      %879 = vst [vmem:[%s224 + $0x34] sm:$0xf] %v847
      %880 = vst [vmem:[%s224 + $0x38] sm:$0xf] %v848
      %881 = vst [vmem:[%s224 + $0x3c] sm:$0xf] %v849
      %882 = vst [vmem:[%s224 + $0x40] sm:$0xf] %v850
      %883 = vst [vmem:[%s224 + $0x44] sm:$0xf] %v851
      %884 = vst [vmem:[%s224 + $0x48] sm:$0xf] %v852
      %885 = vst [vmem:[%s224 + $0x4c] sm:$0xf] %v853
      %886 = vst [vmem:[%s224 + $0x50] sm:$0xf] %v854
      %887 = vst [vmem:[%s224 + $0x54] sm:$0xf] %v855
      %888 = vst [vmem:[%s224 + $0x58] sm:$0xf] %v856
      %889 = vst [vmem:[%s224 + $0x5c] sm:$0xf] %v857
      %890 = vst [vmem:[%s224 + $0x60] sm:$0xf] %v858
      %891 = vst [vmem:[%s224 + $0x64] sm:$0xf] %v859
      %892 = vst [vmem:[%s224 + $0x68] sm:$0xf] %v860
      %893 = vst [vmem:[%s224 + $0x6c] sm:$0xf] %v861
      %894 = vst [vmem:[%s224 + $0x70] sm:$0xf] %v862
      %895 = vst [vmem:[%s224 + $0x74] sm:$0xf] %v863
      %896 = vst [vmem:[%s224 + $0x78] sm:$0xf] %v864
      %897 = vst [vmem:[%s224 + $0x7c] sm:$0xf] %v865
      %s898 = smul.u32 32, %s15
      %p899 = scmp.lt.s32.totalorder %s898, 63
      %s900 = scalar_select %p899, %s898, 63
      %s901 = smul.addr %s900, 4
      %s902 = scalar_lea.vmem %s4, %s901
      // Predicated region
      $region37: #{resnet_forward.10} parent=35 // pred_check
        %p903 = pneg %p127
      $region38: #{resnet_forward.10} parent=35 // pred_check_branch
        %905 = sbr.rel (%p903) target = $region40
      $region39: #{resnet_forward.10} parent=35 // pred_region
        %s906 = smul.u32 32, %s15
      $region40: #{resnet_forward.10} parent=35 // pred_fallthru
        _
    $region36: #{resnet_forward.10} parent=5 // pred_fallthru
      _
    %p907 = scmp.le.s32.totalorder 2, %s10
    // Predicated region
    $region41: #{resnet_forward.10} parent=5 // pred_check
      %p908 = pneg %p907
    $region42: #{resnet_forward.10} parent=5 // pred_check_branch
      %910 = sbr.rel (%p908) target = $region44
    $region43: #{resnet_forward.10} parent=5 // pred_region
      %s911 = ssub.s32 %s10, 2
      // Predicated region
      $region45: #{resnet_forward.10} parent=43 // pred_check
        %p912 = pneg %p133
      $region46: #{resnet_forward.10} parent=43 // pred_check_branch
        %914 = sbr.rel (%p912) target = $region48
      $region47: #{resnet_forward.10} parent=43 // pred_region
        %s915 = smul.u32 32, %s16
        %p916 = scmp.lt.s32.totalorder %s915, 63
        %s917 = scalar_select %p916, %s915, 63
        %s918 = smul.addr %s917, 4
        %s919 = scalar_lea.vmem %s4, %s918
      $region48: #{resnet_forward.10} parent=43 // pred_fallthru
        _
    $region44: #{resnet_forward.10} parent=5 // pred_fallthru
      _
  $region6: #{resnet_forward.10} parent=0 // loop_footer
    %s14 = sadd.s32 1, %s10
  $region7: #{resnet_forward.10} parent=0 // loop_footer_branch
    %9 = sbr.rel target = $region3
  $region8: #{resnet_forward.10} parent=0 // loop_exit
    _

// kernel: resnet_forward.11
$region0: #{resnet_forward.11}
  #allocation0 [shape = 'u32[]', space=smem, size = 0x4, offset = 0x4, fixed_abs, tag = 'smem constant byte address 0x4 - core index']
  #allocation1 [shape = 'u32[72,128]{1,0:T(1,128)}', space=vmem, size = 0x9000, scoped, tag = 'internal scratch']
  %s0 = inlined_call_operand.vmem [shape: bf16[128,144], index: 0, kind: input, shape index: {}]
  %s1 = inlined_call_operand.vmem [shape: bf16[144,128], index: 1, kind: input, shape index: {}]
  %s2 = inlined_call_operand.vmem [shape: f32[1,128], index: 2, kind: input, shape index: {}]
  %s3 = inlined_call_operand.vmem [shape: bf16[128,128], index: 3, kind: output, shape index: {}]
  %s4 = sld [smem:[#allocation0]]
  $region22: #{resnet_forward.11} parent=0
    _
  %s6 = ssub.s32 1, %s4
  %s7 = scalar_select 0, %s6, %s4
  // Predicated region
  $region2: #{resnet_forward.11} parent=0 // pred_check
    _
  $region3: #{resnet_forward.11} parent=0 // pred_check_branch
    %9 = sbr.rel (0) target = $region5
  $region4: #{resnet_forward.11} parent=0 // pred_region
    _
  $region5: #{resnet_forward.11} parent=0 // pred_fallthru
    _
  // Predicated region
  $region6: #{resnet_forward.11} parent=0 // pred_check
    _
  $region7: #{resnet_forward.11} parent=0 // pred_check_branch
    %11 = sbr.rel (0) target = $region9
  $region8: #{resnet_forward.11} parent=0 // pred_region
    _
  $region9: #{resnet_forward.11} parent=0 // pred_fallthru
    _
  // Predicated region
  $region10: #{resnet_forward.11} parent=0 // pred_check
    _
  $region11: #{resnet_forward.11} parent=0 // pred_check_branch
    %13 = sbr.rel (0) target = $region13
  $region12: #{resnet_forward.11} parent=0 // pred_region
    _
  $region13: #{resnet_forward.11} parent=0 // pred_fallthru
    _
  %v15 = vld [vmem:[%s0] sm:$0xff]
  %v16 = vld [vmem:[%s0 + $0x8] sm:$0xff]
  %v17 = vld [vmem:[%s0 + $0x10] sm:$0xff]
  %v18 = vld [vmem:[%s0 + $0x18] sm:$0xff]
  %v19 = vld [vmem:[%s0 + $0x20] sm:$0xff]
  %v20 = vld [vmem:[%s0 + $0x28] sm:$0xff]
  %v21 = vld [vmem:[%s0 + $0x30] sm:$0xff]
  %v22 = vld [vmem:[%s0 + $0x38] sm:$0xff]
  %v23 = vld [vmem:[%s0 + $0x40] sm:$0xff]
  %v24 = vld [vmem:[%s0 + $0x48] sm:$0xff]
  %v25 = vld [vmem:[%s0 + $0x50] sm:$0xff]
  %v26 = vld [vmem:[%s0 + $0x58] sm:$0xff]
  %v27 = vld [vmem:[%s0 + $0x60] sm:$0xff]
  %v28 = vld [vmem:[%s0 + $0x68] sm:$0xff]
  %v29 = vld [vmem:[%s0 + $0x70] sm:$0xff]
  %v30 = vld [vmem:[%s0 + $0x78] sm:$0xff]
  %v31 = vld [vmem:[%s1] sm:$0xf]
  %v32 = vld [vmem:[%s1 + $0x4] sm:$0xf]
  %v33 = vld [vmem:[%s1 + $0x8] sm:$0xf]
  %v34 = vld [vmem:[%s1 + $0xc] sm:$0xf]
  %v35 = vld [vmem:[%s1 + $0x10] sm:$0xf]
  %v36 = vld [vmem:[%s1 + $0x14] sm:$0xf]
  %v37 = vld [vmem:[%s1 + $0x18] sm:$0xf]
  %v38 = vld [vmem:[%s1 + $0x1c] sm:$0xf]
  %v39 = vld [vmem:[%s1 + $0x20] sm:$0xf]
  %v40 = vld [vmem:[%s1 + $0x24] sm:$0xf]
  %v41 = vld [vmem:[%s1 + $0x28] sm:$0xf]
  %v42 = vld [vmem:[%s1 + $0x2c] sm:$0xf]
  %v43 = vld [vmem:[%s1 + $0x30] sm:$0xf]
  %v44 = vld [vmem:[%s1 + $0x34] sm:$0xf]
  %v45 = vld [vmem:[%s1 + $0x38] sm:$0xf]
  %v46 = vld [vmem:[%s1 + $0x3c] sm:$0xf]
  %v47 = vld [vmem:[%s1 + $0x40] sm:$0xf]
  %v48 = vld [vmem:[%s1 + $0x44] sm:$0xf]
  %v49 = vld [vmem:[%s2] sm:$0x1]
  %v51 = vperm.slane %v49, 0
  %v69 = vunpack.c.l.b16 %v15
  %v70 = vunpack.c.h.b16 %v15
  %v71 = vunpack.c.l.b16 %v16
  %v72 = vunpack.c.h.b16 %v16
  %v73 = vunpack.c.l.b16 %v17
  %v74 = vunpack.c.h.b16 %v17
  %v75 = vunpack.c.l.b16 %v18
  %v76 = vunpack.c.h.b16 %v18
  %v77 = vunpack.c.l.b16 %v19
  %v78 = vunpack.c.h.b16 %v19
  %v79 = vunpack.c.l.b16 %v20
  %v80 = vunpack.c.h.b16 %v20
  %v81 = vunpack.c.l.b16 %v21
  %v82 = vunpack.c.h.b16 %v21
  %v83 = vunpack.c.l.b16 %v22
  %v84 = vunpack.c.h.b16 %v22
  %v85 = vunpack.c.l.b16 %v23
  %v86 = vunpack.c.h.b16 %v23
  %v87 = vunpack.c.l.b16 %v24
  %v88 = vunpack.c.h.b16 %v24
  %v89 = vunpack.c.l.b16 %v25
  %v90 = vunpack.c.h.b16 %v25
  %v91 = vunpack.c.l.b16 %v26
  %v92 = vunpack.c.h.b16 %v26
  %v93 = vunpack.c.l.b16 %v27
  %v94 = vunpack.c.h.b16 %v27
  %v95 = vunpack.c.l.b16 %v28
  %v96 = vunpack.c.h.b16 %v28
  %v97 = vunpack.c.l.b16 %v29
  %v98 = vunpack.c.h.b16 %v29
  %v99 = vunpack.c.l.b16 %v30
  %v100 = vunpack.c.h.b16 %v30
  %v101 = vpack.c.b16 %v71, %v69
  %v102 = vpack.c.b16 %v72, %v70
  %v103 = vpack.c.b16 %v75, %v73
  %v104 = vpack.c.b16 %v76, %v74
  %v105 = vpack.c.b16 %v79, %v77
  %v106 = vpack.c.b16 %v80, %v78
  %v107 = vpack.c.b16 %v83, %v81
  %v108 = vpack.c.b16 %v84, %v82
  %v109 = vpack.c.b16 %v87, %v85
  %v110 = vpack.c.b16 %v88, %v86
  %v111 = vpack.c.b16 %v91, %v89
  %v112 = vpack.c.b16 %v92, %v90
  %v113 = vpack.c.b16 %v95, %v93
  %v114 = vpack.c.b16 %v96, %v94
  %v115 = vpack.c.b16 %v99, %v97
  %v116 = vpack.c.b16 %v100, %v98
  %v143 = vunpack.c.l.b16 %v31
  %v144 = vunpack.c.l.b16 %v32
  %v145 = vunpack.c.l.b16 %v33
  %v146 = vunpack.c.l.b16 %v34
  %v147 = vunpack.c.l.b16 %v35
  %v148 = vunpack.c.l.b16 %v36
  %v149 = vunpack.c.l.b16 %v37
  %v150 = vunpack.c.l.b16 %v38
  %v151 = vunpack.c.l.b16 %v39
  %v152 = vunpack.c.l.b16 %v40
  %v153 = vunpack.c.l.b16 %v41
  %v154 = vunpack.c.l.b16 %v42
  %v155 = vunpack.c.l.b16 %v43
  %v156 = vunpack.c.l.b16 %v44
  %v157 = vunpack.c.l.b16 %v45
  %v158 = vunpack.c.l.b16 %v46
  %v159 = vunpack.c.l.b16 %v47
  %v160 = vunpack.c.l.b16 %v48
  %v161 = vpack.c.b16 %v144, %v143
  %v162 = vpack.c.b16 %v146, %v145
  %v163 = vpack.c.b16 %v148, %v147
  %v164 = vpack.c.b16 %v150, %v149
  %v165 = vpack.c.b16 %v152, %v151
  %v166 = vpack.c.b16 %v154, %v153
  %v167 = vpack.c.b16 %v156, %v155
  %v168 = vpack.c.b16 %v158, %v157
  %v169 = vpack.c.b16 %v160, %v159
  %vm179 = vcmask 130048
  %v181 = vsel %vm179, %v102, 0
  %v184 = vsel %vm179, %v104, 0
  %v187 = vsel %vm179, %v106, 0
  %v190 = vsel %vm179, %v108, 0
  %v193 = vsel %vm179, %v110, 0
  %v196 = vsel %vm179, %v112, 0
  %v199 = vsel %vm179, %v114, 0
  %v202 = vsel %vm179, %v116, 0
  %204 = vmatpush.bf16.msra.mxu0 %v168
  %205 = vmatpush.bf16.msra.mxu0 %v167
  %206 = vmatpush.bf16.msra.mxu0 %v166
  %207 = vmatpush.bf16.msra.mxu0 %v165
  %208 = vmatpush.bf16.msra.mxu0 %v164
  %209 = vmatpush.bf16.msra.mxu0 %v163
  %210 = vmatpush.bf16.msra.mxu0 %v162
  %211 = vmatpush.bf16.msra.mxu0 %v161
  %212 = vmatmul.bf16.gmra.mxu0 %v101
  %v213 = vpop.f32.mrf.mxu0
  %v214 = vadd.f32 %v51, %v213
  %v215 = vpop.f32.mrf.mxu0
  %v216 = vadd.f32 %v51, %v215
  %217 = vmatmul.bf16.gmra.mxu0 %v103
  %v218 = vpop.f32.mrf.mxu0
  %v219 = vadd.f32 %v51, %v218
  %v220 = vpop.f32.mrf.mxu0
  %v221 = vadd.f32 %v51, %v220
  %222 = vmatmul.bf16.gmra.mxu0 %v105
  %v223 = vpop.f32.mrf.mxu0
  %v224 = vadd.f32 %v51, %v223
  %v225 = vpop.f32.mrf.mxu0
  %v226 = vadd.f32 %v51, %v225
  %227 = vmatmul.bf16.gmra.mxu0 %v107
  %v228 = vpop.f32.mrf.mxu0
  %v229 = vadd.f32 %v51, %v228
  %v230 = vpop.f32.mrf.mxu0
  %v231 = vadd.f32 %v51, %v230
  %232 = vmatmul.bf16.gmra.mxu0 %v109
  %v233 = vpop.f32.mrf.mxu0
  %v234 = vadd.f32 %v51, %v233
  %v235 = vpop.f32.mrf.mxu0
  %v236 = vadd.f32 %v51, %v235
  %237 = vmatmul.bf16.gmra.mxu0 %v111
  %v238 = vpop.f32.mrf.mxu0
  %v239 = vadd.f32 %v51, %v238
  %v240 = vpop.f32.mrf.mxu0
  %v241 = vadd.f32 %v51, %v240
  %242 = vmatmul.bf16.gmra.mxu0 %v113
  %v243 = vpop.f32.mrf.mxu0
  %v244 = vadd.f32 %v51, %v243
  %v245 = vpop.f32.mrf.mxu0
  %v246 = vadd.f32 %v51, %v245
  %247 = vmatmul.bf16.gmra.mxu0 %v115
  %v248 = vpop.f32.mrf.mxu0
  %v249 = vadd.f32 %v51, %v248
  %v250 = vpop.f32.mrf.mxu0
  %v251 = vadd.f32 %v51, %v250
  %252 = vdwg.mxu0
  %253 = vmatpush.bf16.msra.mxu0 0
  %254 = vmatpush.bf16.msra.mxu0 0
  %255 = vmatpush.bf16.msra.mxu0 0
  %256 = vmatpush.bf16.msra.mxu0 0
  %257 = vmatpush.bf16.msra.mxu0 0
  %258 = vmatpush.bf16.msra.mxu0 0
  %259 = vmatpush.bf16.msra.mxu0 0
  %260 = vmatpush.bf16.msra.mxu0 %v169
  %261 = vmatmul.bf16.gmra.mxu0 %v181
  %v262 = vpop.f32.mrf.mxu0
  %v263 = vadd.f32 %v214, %v262
  %v264 = vpop.f32.mrf.mxu0
  %v265 = vadd.f32 %v216, %v264
  %266 = vmatmul.bf16.gmra.mxu0 %v184
  %v267 = vpop.f32.mrf.mxu0
  %v268 = vadd.f32 %v219, %v267
  %v269 = vpop.f32.mrf.mxu0
  %v270 = vadd.f32 %v221, %v269
  %271 = vmatmul.bf16.gmra.mxu0 %v187
  %v272 = vpop.f32.mrf.mxu0
  %v273 = vadd.f32 %v224, %v272
  %v274 = vpop.f32.mrf.mxu0
  %v275 = vadd.f32 %v226, %v274
  %276 = vmatmul.bf16.gmra.mxu0 %v190
  %v277 = vpop.f32.mrf.mxu0
  %v278 = vadd.f32 %v229, %v277
  %v279 = vpop.f32.mrf.mxu0
  %v280 = vadd.f32 %v231, %v279
  %281 = vmatmul.bf16.gmra.mxu0 %v193
  %v282 = vpop.f32.mrf.mxu0
  %v283 = vadd.f32 %v234, %v282
  %v284 = vpop.f32.mrf.mxu0
  %v285 = vadd.f32 %v236, %v284
  %286 = vmatmul.bf16.gmra.mxu0 %v196
  %v287 = vpop.f32.mrf.mxu0
  %v288 = vadd.f32 %v239, %v287
  %v289 = vpop.f32.mrf.mxu0
  %v290 = vadd.f32 %v241, %v289
  %291 = vmatmul.bf16.gmra.mxu0 %v199
  %v292 = vpop.f32.mrf.mxu0
  %v293 = vadd.f32 %v244, %v292
  %v294 = vpop.f32.mrf.mxu0
  %v295 = vadd.f32 %v246, %v294
  %296 = vmatmul.bf16.gmra.mxu0 %v202
  %v297 = vpop.f32.mrf.mxu0
  %v298 = vadd.f32 %v249, %v297
  %v299 = vpop.f32.mrf.mxu0
  %v300 = vadd.f32 %v251, %v299
  %301 = vdwg.mxu0
  %v302 = vmax.f32 %v263, 0.0
  %v303 = vmax.f32 %v265, 0.0
  %v304 = vmax.f32 %v268, 0.0
  %v305 = vmax.f32 %v270, 0.0
  %v306 = vmax.f32 %v273, 0.0
  %v307 = vmax.f32 %v275, 0.0
  %v308 = vmax.f32 %v278, 0.0
  %v309 = vmax.f32 %v280, 0.0
  %v310 = vmax.f32 %v283, 0.0
  %v311 = vmax.f32 %v285, 0.0
  %v312 = vmax.f32 %v288, 0.0
  %v313 = vmax.f32 %v290, 0.0
  %v314 = vmax.f32 %v293, 0.0
  %v315 = vmax.f32 %v295, 0.0
  %v316 = vmax.f32 %v298, 0.0
  %v317 = vmax.f32 %v300, 0.0
  %v318 = vpack.c.bf16 %v302, %v302
  %v319 = vpack.c.bf16 %v303, %v303
  %v320 = vpack.c.bf16 %v304, %v304
  %v321 = vpack.c.bf16 %v305, %v305
  %v322 = vpack.c.bf16 %v306, %v306
  %v323 = vpack.c.bf16 %v307, %v307
  %v324 = vpack.c.bf16 %v308, %v308
  %v325 = vpack.c.bf16 %v309, %v309
  %v326 = vpack.c.bf16 %v310, %v310
  %v327 = vpack.c.bf16 %v311, %v311
  %v328 = vpack.c.bf16 %v312, %v312
  %v329 = vpack.c.bf16 %v313, %v313
  %v330 = vpack.c.bf16 %v314, %v314
  %v331 = vpack.c.bf16 %v315, %v315
  %v332 = vpack.c.bf16 %v316, %v316
  %v333 = vpack.c.bf16 %v317, %v317
  %334 = vst [vmem:[%s3] sm:$0xf] %v318
  %335 = vst [vmem:[%s3 + $0x4] sm:$0xf] %v319
  %336 = vst [vmem:[%s3 + $0x8] sm:$0xf] %v320
  %337 = vst [vmem:[%s3 + $0xc] sm:$0xf] %v321
  %338 = vst [vmem:[%s3 + $0x10] sm:$0xf] %v322
  %339 = vst [vmem:[%s3 + $0x14] sm:$0xf] %v323
  %340 = vst [vmem:[%s3 + $0x18] sm:$0xf] %v324
  %341 = vst [vmem:[%s3 + $0x1c] sm:$0xf] %v325
  %342 = vst [vmem:[%s3 + $0x20] sm:$0xf] %v326
  %343 = vst [vmem:[%s3 + $0x24] sm:$0xf] %v327
  %344 = vst [vmem:[%s3 + $0x28] sm:$0xf] %v328
  %345 = vst [vmem:[%s3 + $0x2c] sm:$0xf] %v329
  %346 = vst [vmem:[%s3 + $0x30] sm:$0xf] %v330
  %347 = vst [vmem:[%s3 + $0x34] sm:$0xf] %v331
  %348 = vst [vmem:[%s3 + $0x38] sm:$0xf] %v332
  %349 = vst [vmem:[%s3 + $0x3c] sm:$0xf] %v333
  // Predicated region
  $region14: #{resnet_forward.11} parent=0 // pred_check
    _
  $region15: #{resnet_forward.11} parent=0 // pred_check_branch
    %351 = sbr.rel (0) target = $region17
  $region16: #{resnet_forward.11} parent=0 // pred_region
    _
  $region17: #{resnet_forward.11} parent=0 // pred_fallthru
    _
  // Predicated region
  $region18: #{resnet_forward.11} parent=0 // pred_check
    _
  $region19: #{resnet_forward.11} parent=0 // pred_check_branch
    %353 = sbr.rel (0) target = $region21
  $region20: #{resnet_forward.11} parent=0 // pred_region
    _
  $region21: #{resnet_forward.11} parent=0 // pred_fallthru
    _

// kernel: resnet_forward.12
$region0: #{resnet_forward.12}
  #allocation0 [shape = 'u32[]', space=smem, size = 0x4, offset = 0x4, fixed_abs, tag = 'smem constant byte address 0x4 - core index']
  #allocation1 [shape = 'u32[72,128]{1,0:T(1,128)}', space=vmem, size = 0x9000, scoped, tag = 'internal scratch']
  %s0 = inlined_call_operand.vmem [shape: bf16[128,288], index: 0, kind: input, shape index: {}]
  %s1 = inlined_call_operand.vmem [shape: bf16[288,128], index: 1, kind: input, shape index: {}]
  %s2 = inlined_call_operand.vmem [shape: f32[1,128], index: 2, kind: input, shape index: {}]
  %s3 = inlined_call_operand.vmem [shape: bf16[128,128], index: 3, kind: input, shape index: {}]
  %s4 = inlined_call_operand.vmem [shape: bf16[128,128], index: 4, kind: output, shape index: {}]
  %s5 = sld [smem:[#allocation0]]
  $region26: #{resnet_forward.12} parent=0
    _
  %s7 = ssub.s32 1, %s5
  %s8 = scalar_select 0, %s7, %s5
  // Predicated region
  $region2: #{resnet_forward.12} parent=0 // pred_check
    _
  $region3: #{resnet_forward.12} parent=0 // pred_check_branch
    %10 = sbr.rel (0) target = $region5
  $region4: #{resnet_forward.12} parent=0 // pred_region
    _
  $region5: #{resnet_forward.12} parent=0 // pred_fallthru
    _
  // Predicated region
  $region6: #{resnet_forward.12} parent=0 // pred_check
    _
  $region7: #{resnet_forward.12} parent=0 // pred_check_branch
    %12 = sbr.rel (0) target = $region9
  $region8: #{resnet_forward.12} parent=0 // pred_region
    _
  $region9: #{resnet_forward.12} parent=0 // pred_fallthru
    _
  // Predicated region
  $region10: #{resnet_forward.12} parent=0 // pred_check
    _
  $region11: #{resnet_forward.12} parent=0 // pred_check_branch
    %14 = sbr.rel (0) target = $region13
  $region12: #{resnet_forward.12} parent=0 // pred_region
    _
  $region13: #{resnet_forward.12} parent=0 // pred_fallthru
    _
  // Predicated region
  $region14: #{resnet_forward.12} parent=0 // pred_check
    _
  $region15: #{resnet_forward.12} parent=0 // pred_check_branch
    %16 = sbr.rel (0) target = $region17
  $region16: #{resnet_forward.12} parent=0 // pred_region
    _
  $region17: #{resnet_forward.12} parent=0 // pred_fallthru
    _
  %v18 = vld [vmem:[%s0] sm:$0xff]
  %v19 = vld [vmem:[%s0 + $0x8] sm:$0xf]
  %v20 = vld [vmem:[%s0 + $0xc] sm:$0xff]
  %v21 = vld [vmem:[%s0 + $0x14] sm:$0xf]
  %v22 = vld [vmem:[%s0 + $0x18] sm:$0xff]
  %v23 = vld [vmem:[%s0 + $0x20] sm:$0xf]
  %v24 = vld [vmem:[%s0 + $0x24] sm:$0xff]
  %v25 = vld [vmem:[%s0 + $0x2c] sm:$0xf]
  %v26 = vld [vmem:[%s0 + $0x30] sm:$0xff]
  %v27 = vld [vmem:[%s0 + $0x38] sm:$0xf]
  %v28 = vld [vmem:[%s0 + $0x3c] sm:$0xff]
  %v29 = vld [vmem:[%s0 + $0x44] sm:$0xf]
  %v30 = vld [vmem:[%s0 + $0x48] sm:$0xff]
  %v31 = vld [vmem:[%s0 + $0x50] sm:$0xf]
  %v32 = vld [vmem:[%s0 + $0x54] sm:$0xff]
  %v33 = vld [vmem:[%s0 + $0x5c] sm:$0xf]
  %v34 = vld [vmem:[%s0 + $0x60] sm:$0xff]
  %v35 = vld [vmem:[%s0 + $0x68] sm:$0xf]
  %v36 = vld [vmem:[%s0 + $0x6c] sm:$0xff]
  %v37 = vld [vmem:[%s0 + $0x74] sm:$0xf]
  %v38 = vld [vmem:[%s0 + $0x78] sm:$0xff]
  %v39 = vld [vmem:[%s0 + $0x80] sm:$0xf]
  %v40 = vld [vmem:[%s0 + $0x84] sm:$0xff]
  %v41 = vld [vmem:[%s0 + $0x8c] sm:$0xf]
  %v42 = vld [vmem:[%s0 + $0x90] sm:$0xff]
  %v43 = vld [vmem:[%s0 + $0x98] sm:$0xf]
  %v44 = vld [vmem:[%s0 + $0x9c] sm:$0xff]
  %v45 = vld [vmem:[%s0 + $0xa4] sm:$0xf]
  %v46 = vld [vmem:[%s0 + $0xa8] sm:$0xff]
  %v47 = vld [vmem:[%s0 + $0xb0] sm:$0xf]
  %v48 = vld [vmem:[%s0 + $0xb4] sm:$0xff]
  %v49 = vld [vmem:[%s0 + $0xbc] sm:$0xf]
  %v50 = vld [vmem:[%s1] sm:$0xf]
  %v51 = vld [vmem:[%s1 + $0x4] sm:$0xf]
  %v52 = vld [vmem:[%s1 + $0x8] sm:$0xf]
  %v53 = vld [vmem:[%s1 + $0xc] sm:$0xf]
  %v54 = vld [vmem:[%s1 + $0x10] sm:$0xf]
  %v55 = vld [vmem:[%s1 + $0x14] sm:$0xf]
  %v56 = vld [vmem:[%s1 + $0x18] sm:$0xf]
  %v57 = vld [vmem:[%s1 + $0x1c] sm:$0xf]
  %v58 = vld [vmem:[%s1 + $0x20] sm:$0xf]
  %v59 = vld [vmem:[%s1 + $0x24] sm:$0xf]
  %v60 = vld [vmem:[%s1 + $0x28] sm:$0xf]
  %v61 = vld [vmem:[%s1 + $0x2c] sm:$0xf]
  %v62 = vld [vmem:[%s1 + $0x30] sm:$0xf]
  %v63 = vld [vmem:[%s1 + $0x34] sm:$0xf]
  %v64 = vld [vmem:[%s1 + $0x38] sm:$0xf]
  %v65 = vld [vmem:[%s1 + $0x3c] sm:$0xf]
  %v66 = vld [vmem:[%s1 + $0x40] sm:$0xf]
  %v67 = vld [vmem:[%s1 + $0x44] sm:$0xf]
  %v68 = vld [vmem:[%s1 + $0x48] sm:$0xf]
  %v69 = vld [vmem:[%s1 + $0x4c] sm:$0xf]
  %v70 = vld [vmem:[%s1 + $0x50] sm:$0xf]
  %v71 = vld [vmem:[%s1 + $0x54] sm:$0xf]
  %v72 = vld [vmem:[%s1 + $0x58] sm:$0xf]
  %v73 = vld [vmem:[%s1 + $0x5c] sm:$0xf]
  %v74 = vld [vmem:[%s1 + $0x60] sm:$0xf]
  %v75 = vld [vmem:[%s1 + $0x64] sm:$0xf]
  %v76 = vld [vmem:[%s1 + $0x68] sm:$0xf]
  %v77 = vld [vmem:[%s1 + $0x6c] sm:$0xf]
  %v78 = vld [vmem:[%s1 + $0x70] sm:$0xf]
  %v79 = vld [vmem:[%s1 + $0x74] sm:$0xf]
  %v80 = vld [vmem:[%s1 + $0x78] sm:$0xf]
  %v81 = vld [vmem:[%s1 + $0x7c] sm:$0xf]
  %v82 = vld [vmem:[%s1 + $0x80] sm:$0xf]
  %v83 = vld [vmem:[%s1 + $0x84] sm:$0xf]
  %v84 = vld [vmem:[%s1 + $0x88] sm:$0xf]
  %v85 = vld [vmem:[%s1 + $0x8c] sm:$0xf]
  %v86 = vld [vmem:[%s2] sm:$0x1]
  %v88 = vperm.slane %v86, 0
  %v122 = vunpack.c.l.b16 %v18
  %v123 = vunpack.c.h.b16 %v18
  %v124 = vunpack.c.l.b16 %v19
  %v125 = vunpack.c.l.b16 %v20
  %v126 = vunpack.c.h.b16 %v20
  %v127 = vunpack.c.l.b16 %v21
  %v128 = vunpack.c.l.b16 %v22
  %v129 = vunpack.c.h.b16 %v22
  %v130 = vunpack.c.l.b16 %v23
  %v131 = vunpack.c.l.b16 %v24
  %v132 = vunpack.c.h.b16 %v24
  %v133 = vunpack.c.l.b16 %v25
  %v134 = vunpack.c.l.b16 %v26
  %v135 = vunpack.c.h.b16 %v26
  %v136 = vunpack.c.l.b16 %v27
  %v137 = vunpack.c.l.b16 %v28
  %v138 = vunpack.c.h.b16 %v28
  %v139 = vunpack.c.l.b16 %v29
  %v140 = vunpack.c.l.b16 %v30
  %v141 = vunpack.c.h.b16 %v30
  %v142 = vunpack.c.l.b16 %v31
  %v143 = vunpack.c.l.b16 %v32
  %v144 = vunpack.c.h.b16 %v32
  %v145 = vunpack.c.l.b16 %v33
  %v146 = vunpack.c.l.b16 %v34
  %v147 = vunpack.c.h.b16 %v34
  %v148 = vunpack.c.l.b16 %v35
  %v149 = vunpack.c.l.b16 %v36
  %v150 = vunpack.c.h.b16 %v36
  %v151 = vunpack.c.l.b16 %v37
  %v152 = vunpack.c.l.b16 %v38
  %v153 = vunpack.c.h.b16 %v38
  %v154 = vunpack.c.l.b16 %v39
  %v155 = vunpack.c.l.b16 %v40
  %v156 = vunpack.c.h.b16 %v40
  %v157 = vunpack.c.l.b16 %v41
  %v158 = vunpack.c.l.b16 %v42
  %v159 = vunpack.c.h.b16 %v42
  %v160 = vunpack.c.l.b16 %v43
  %v161 = vunpack.c.l.b16 %v44
  %v162 = vunpack.c.h.b16 %v44
  %v163 = vunpack.c.l.b16 %v45
  %v164 = vunpack.c.l.b16 %v46
  %v165 = vunpack.c.h.b16 %v46
  %v166 = vunpack.c.l.b16 %v47
  %v167 = vunpack.c.l.b16 %v48
  %v168 = vunpack.c.h.b16 %v48
  %v169 = vunpack.c.l.b16 %v49
  %v170 = vpack.c.b16 %v125, %v122
  %v171 = vpack.c.b16 %v126, %v123
  %v172 = vpack.c.b16 %v127, %v124
  %v173 = vpack.c.b16 %v131, %v128
  %v174 = vpack.c.b16 %v132, %v129
  %v175 = vpack.c.b16 %v133, %v130
  %v176 = vpack.c.b16 %v137, %v134
  %v177 = vpack.c.b16 %v138, %v135
  %v178 = vpack.c.b16 %v139, %v136
  %v179 = vpack.c.b16 %v143, %v140
  %v180 = vpack.c.b16 %v144, %v141
  %v181 = vpack.c.b16 %v145, %v142
  %v182 = vpack.c.b16 %v149, %v146
  %v183 = vpack.c.b16 %v150, %v147
  %v184 = vpack.c.b16 %v151, %v148
  %v185 = vpack.c.b16 %v155, %v152
  %v186 = vpack.c.b16 %v156, %v153
  %v187 = vpack.c.b16 %v157, %v154
  %v188 = vpack.c.b16 %v161, %v158
  %v189 = vpack.c.b16 %v162, %v159
  %v190 = vpack.c.b16 %v163, %v160
  %v191 = vpack.c.b16 %v167, %v164
  %v192 = vpack.c.b16 %v168, %v165
  %v193 = vpack.c.b16 %v169, %v166
  %v246 = vunpack.c.l.b16 %v50
  %v247 = vunpack.c.l.b16 %v51
  %v248 = vunpack.c.l.b16 %v52
  %v249 = vunpack.c.l.b16 %v53
  %v250 = vunpack.c.l.b16 %v54
  %v251 = vunpack.c.l.b16 %v55
  %v252 = vunpack.c.l.b16 %v56
  %v253 = vunpack.c.l.b16 %v57
  %v254 = vunpack.c.l.b16 %v58
  %v255 = vunpack.c.l.b16 %v59
  %v256 = vunpack.c.l.b16 %v60
  %v257 = vunpack.c.l.b16 %v61
  %v258 = vunpack.c.l.b16 %v62
  %v259 = vunpack.c.l.b16 %v63
  %v260 = vunpack.c.l.b16 %v64
  %v261 = vunpack.c.l.b16 %v65
  %v262 = vunpack.c.l.b16 %v66
  %v263 = vunpack.c.l.b16 %v67
  %v264 = vunpack.c.l.b16 %v68
  %v265 = vunpack.c.l.b16 %v69
  %v266 = vunpack.c.l.b16 %v70
  %v267 = vunpack.c.l.b16 %v71
  %v268 = vunpack.c.l.b16 %v72
  %v269 = vunpack.c.l.b16 %v73
  %v270 = vunpack.c.l.b16 %v74
  %v271 = vunpack.c.l.b16 %v75
  %v272 = vunpack.c.l.b16 %v76
  %v273 = vunpack.c.l.b16 %v77
  %v274 = vunpack.c.l.b16 %v78
  %v275 = vunpack.c.l.b16 %v79
  %v276 = vunpack.c.l.b16 %v80
  %v277 = vunpack.c.l.b16 %v81
  %v278 = vunpack.c.l.b16 %v82
  %v279 = vunpack.c.l.b16 %v83
  %v280 = vunpack.c.l.b16 %v84
  %v281 = vunpack.c.l.b16 %v85
  %v282 = vpack.c.b16 %v247, %v246
  %v283 = vpack.c.b16 %v249, %v248
  %v284 = vpack.c.b16 %v251, %v250
  %v285 = vpack.c.b16 %v253, %v252
  %v286 = vpack.c.b16 %v255, %v254
  %v287 = vpack.c.b16 %v257, %v256
  %v288 = vpack.c.b16 %v259, %v258
  %v289 = vpack.c.b16 %v261, %v260
  %v290 = vpack.c.b16 %v263, %v262
  %v291 = vpack.c.b16 %v265, %v264
  %v292 = vpack.c.b16 %v267, %v266
  %v293 = vpack.c.b16 %v269, %v268
  %v294 = vpack.c.b16 %v271, %v270
  %v295 = vpack.c.b16 %v273, %v272
  %v296 = vpack.c.b16 %v275, %v274
  %v297 = vpack.c.b16 %v277, %v276
  %v298 = vpack.c.b16 %v279, %v278
  %v299 = vpack.c.b16 %v281, %v280
  %vm318 = vcmask 261120
  %v320 = vsel %vm318, %v172, 0
  %v323 = vsel %vm318, %v175, 0
  %v326 = vsel %vm318, %v178, 0
  %v329 = vsel %vm318, %v181, 0
  %v332 = vsel %vm318, %v184, 0
  %v335 = vsel %vm318, %v187, 0
  %v338 = vsel %vm318, %v190, 0
  %v341 = vsel %vm318, %v193, 0
  %343 = vmatpush.bf16.msra.mxu0 %v289
  %344 = vmatpush.bf16.msra.mxu0 %v288
  %345 = vmatpush.bf16.msra.mxu0 %v287
  %346 = vmatpush.bf16.msra.mxu0 %v286
  %347 = vmatpush.bf16.msra.mxu0 %v285
  %348 = vmatpush.bf16.msra.mxu0 %v284
  %349 = vmatpush.bf16.msra.mxu0 %v283
  %350 = vmatpush.bf16.msra.mxu0 %v282
  %351 = vmatmul.bf16.gmra.mxu0 %v170
  %v352 = vpop.f32.mrf.mxu0
  %v353 = vadd.f32 %v88, %v352
  %v354 = vpop.f32.mrf.mxu0
  %v355 = vadd.f32 %v88, %v354
  %356 = vmatmul.bf16.gmra.mxu0 %v173
  %v357 = vpop.f32.mrf.mxu0
  %v358 = vadd.f32 %v88, %v357
  %v359 = vpop.f32.mrf.mxu0
  %v360 = vadd.f32 %v88, %v359
  %361 = vmatmul.bf16.gmra.mxu0 %v176
  %v362 = vpop.f32.mrf.mxu0
  %v363 = vadd.f32 %v88, %v362
  %v364 = vpop.f32.mrf.mxu0
  %v365 = vadd.f32 %v88, %v364
  %366 = vmatmul.bf16.gmra.mxu0 %v179
  %v367 = vpop.f32.mrf.mxu0
  %v368 = vadd.f32 %v88, %v367
  %v369 = vpop.f32.mrf.mxu0
  %v370 = vadd.f32 %v88, %v369
  %371 = vmatmul.bf16.gmra.mxu0 %v182
  %v372 = vpop.f32.mrf.mxu0
  %v373 = vadd.f32 %v88, %v372
  %v374 = vpop.f32.mrf.mxu0
  %v375 = vadd.f32 %v88, %v374
  %376 = vmatmul.bf16.gmra.mxu0 %v185
  %v377 = vpop.f32.mrf.mxu0
  %v378 = vadd.f32 %v88, %v377
  %v379 = vpop.f32.mrf.mxu0
  %v380 = vadd.f32 %v88, %v379
  %381 = vmatmul.bf16.gmra.mxu0 %v188
  %v382 = vpop.f32.mrf.mxu0
  %v383 = vadd.f32 %v88, %v382
  %v384 = vpop.f32.mrf.mxu0
  %v385 = vadd.f32 %v88, %v384
  %386 = vmatmul.bf16.gmra.mxu0 %v191
  %v387 = vpop.f32.mrf.mxu0
  %v388 = vadd.f32 %v88, %v387
  %v389 = vpop.f32.mrf.mxu0
  %v390 = vadd.f32 %v88, %v389
  %391 = vdwg.mxu0
  %392 = vmatpush.bf16.msra.mxu0 %v297
  %393 = vmatpush.bf16.msra.mxu0 %v296
  %394 = vmatpush.bf16.msra.mxu0 %v295
  %395 = vmatpush.bf16.msra.mxu0 %v294
  %396 = vmatpush.bf16.msra.mxu0 %v293
  %397 = vmatpush.bf16.msra.mxu0 %v292
  %398 = vmatpush.bf16.msra.mxu0 %v291
  %399 = vmatpush.bf16.msra.mxu0 %v290
  %400 = vmatmul.bf16.gmra.mxu0 %v171
  %v401 = vpop.f32.mrf.mxu0
  %v402 = vadd.f32 %v353, %v401
  %v403 = vpop.f32.mrf.mxu0
  %v404 = vadd.f32 %v355, %v403
  %405 = vmatmul.bf16.gmra.mxu0 %v174
  %v406 = vpop.f32.mrf.mxu0
  %v407 = vadd.f32 %v358, %v406
  %v408 = vpop.f32.mrf.mxu0
  %v409 = vadd.f32 %v360, %v408
  %410 = vmatmul.bf16.gmra.mxu0 %v177
  %v411 = vpop.f32.mrf.mxu0
  %v412 = vadd.f32 %v363, %v411
  %v413 = vpop.f32.mrf.mxu0
  %v414 = vadd.f32 %v365, %v413
  %415 = vmatmul.bf16.gmra.mxu0 %v180
  %v416 = vpop.f32.mrf.mxu0
  %v417 = vadd.f32 %v368, %v416
  %v418 = vpop.f32.mrf.mxu0
  %v419 = vadd.f32 %v370, %v418
  %420 = vmatmul.bf16.gmra.mxu0 %v183
  %v421 = vpop.f32.mrf.mxu0
  %v422 = vadd.f32 %v373, %v421
  %v423 = vpop.f32.mrf.mxu0
  %v424 = vadd.f32 %v375, %v423
  %425 = vmatmul.bf16.gmra.mxu0 %v186
  %v426 = vpop.f32.mrf.mxu0
  %v427 = vadd.f32 %v378, %v426
  %v428 = vpop.f32.mrf.mxu0
  %v429 = vadd.f32 %v380, %v428
  %430 = vmatmul.bf16.gmra.mxu0 %v189
  %v431 = vpop.f32.mrf.mxu0
  %v432 = vadd.f32 %v383, %v431
  %v433 = vpop.f32.mrf.mxu0
  %v434 = vadd.f32 %v385, %v433
  %435 = vmatmul.bf16.gmra.mxu0 %v192
  %v436 = vpop.f32.mrf.mxu0
  %v437 = vadd.f32 %v388, %v436
  %v438 = vpop.f32.mrf.mxu0
  %v439 = vadd.f32 %v390, %v438
  %440 = vdwg.mxu0
  %441 = vmatpush.bf16.msra.mxu0 0
  %442 = vmatpush.bf16.msra.mxu0 0
  %443 = vmatpush.bf16.msra.mxu0 0
  %444 = vmatpush.bf16.msra.mxu0 0
  %445 = vmatpush.bf16.msra.mxu0 0
  %446 = vmatpush.bf16.msra.mxu0 0
  %447 = vmatpush.bf16.msra.mxu0 %v299
  %448 = vmatpush.bf16.msra.mxu0 %v298
  %449 = vmatmul.bf16.gmra.mxu0 %v320
  %v450 = vpop.f32.mrf.mxu0
  %v451 = vadd.f32 %v402, %v450
  %v452 = vpop.f32.mrf.mxu0
  %v453 = vadd.f32 %v404, %v452
  %454 = vmatmul.bf16.gmra.mxu0 %v323
  %v455 = vpop.f32.mrf.mxu0
  %v456 = vadd.f32 %v407, %v455
  %v457 = vpop.f32.mrf.mxu0
  %v458 = vadd.f32 %v409, %v457
  %459 = vmatmul.bf16.gmra.mxu0 %v326
  %v460 = vpop.f32.mrf.mxu0
  %v461 = vadd.f32 %v412, %v460
  %v462 = vpop.f32.mrf.mxu0
  %v463 = vadd.f32 %v414, %v462
  %464 = vmatmul.bf16.gmra.mxu0 %v329
  %v465 = vpop.f32.mrf.mxu0
  %v466 = vadd.f32 %v417, %v465
  %v467 = vpop.f32.mrf.mxu0
  %v468 = vadd.f32 %v419, %v467
  %469 = vmatmul.bf16.gmra.mxu0 %v332
  %v470 = vpop.f32.mrf.mxu0
  %v471 = vadd.f32 %v422, %v470
  %v472 = vpop.f32.mrf.mxu0
  %v473 = vadd.f32 %v424, %v472
  %474 = vmatmul.bf16.gmra.mxu0 %v335
  %v475 = vpop.f32.mrf.mxu0
  %v476 = vadd.f32 %v427, %v475
  %v477 = vpop.f32.mrf.mxu0
  %v478 = vadd.f32 %v429, %v477
  %479 = vmatmul.bf16.gmra.mxu0 %v338
  %v480 = vpop.f32.mrf.mxu0
  %v481 = vadd.f32 %v432, %v480
  %v482 = vpop.f32.mrf.mxu0
  %v483 = vadd.f32 %v434, %v482
  %484 = vmatmul.bf16.gmra.mxu0 %v341
  %v485 = vpop.f32.mrf.mxu0
  %v486 = vadd.f32 %v437, %v485
  %v487 = vpop.f32.mrf.mxu0
  %v488 = vadd.f32 %v439, %v487
  %489 = vdwg.mxu0
  %v490 = vld [vmem:[%s3] sm:$0xf]
  %v491 = vld [vmem:[%s3 + $0x4] sm:$0xf]
  %v492 = vld [vmem:[%s3 + $0x8] sm:$0xf]
  %v493 = vld [vmem:[%s3 + $0xc] sm:$0xf]
  %v494 = vld [vmem:[%s3 + $0x10] sm:$0xf]
  %v495 = vld [vmem:[%s3 + $0x14] sm:$0xf]
  %v496 = vld [vmem:[%s3 + $0x18] sm:$0xf]
  %v497 = vld [vmem:[%s3 + $0x1c] sm:$0xf]
  %v498 = vld [vmem:[%s3 + $0x20] sm:$0xf]
  %v499 = vld [vmem:[%s3 + $0x24] sm:$0xf]
  %v500 = vld [vmem:[%s3 + $0x28] sm:$0xf]
  %v501 = vld [vmem:[%s3 + $0x2c] sm:$0xf]
  %v502 = vld [vmem:[%s3 + $0x30] sm:$0xf]
  %v503 = vld [vmem:[%s3 + $0x34] sm:$0xf]
  %v504 = vld [vmem:[%s3 + $0x38] sm:$0xf]
  %v505 = vld [vmem:[%s3 + $0x3c] sm:$0xf]
  %v506 = vunpack.c.l.bf16 %v490
  %v507 = vunpack.c.l.bf16 %v491
  %v508 = vunpack.c.l.bf16 %v492
  %v509 = vunpack.c.l.bf16 %v493
  %v510 = vunpack.c.l.bf16 %v494
  %v511 = vunpack.c.l.bf16 %v495
  %v512 = vunpack.c.l.bf16 %v496
  %v513 = vunpack.c.l.bf16 %v497
  %v514 = vunpack.c.l.bf16 %v498
  %v515 = vunpack.c.l.bf16 %v499
  %v516 = vunpack.c.l.bf16 %v500
  %v517 = vunpack.c.l.bf16 %v501
  %v518 = vunpack.c.l.bf16 %v502
  %v519 = vunpack.c.l.bf16 %v503
  %v520 = vunpack.c.l.bf16 %v504
  %v521 = vunpack.c.l.bf16 %v505
  %v522 = vadd.f32 %v451, %v506
  %v523 = vadd.f32 %v453, %v507
  %v524 = vadd.f32 %v456, %v508
  %v525 = vadd.f32 %v458, %v509
  %v526 = vadd.f32 %v461, %v510
  %v527 = vadd.f32 %v463, %v511
  %v528 = vadd.f32 %v466, %v512
  %v529 = vadd.f32 %v468, %v513
  %v530 = vadd.f32 %v471, %v514
  %v531 = vadd.f32 %v473, %v515
  %v532 = vadd.f32 %v476, %v516
  %v533 = vadd.f32 %v478, %v517
  %v534 = vadd.f32 %v481, %v518
  %v535 = vadd.f32 %v483, %v519
  %v536 = vadd.f32 %v486, %v520
  %v537 = vadd.f32 %v488, %v521
  %v538 = vmax.f32 %v522, 0.0
  %v539 = vmax.f32 %v523, 0.0
  %v540 = vmax.f32 %v524, 0.0
  %v541 = vmax.f32 %v525, 0.0
  %v542 = vmax.f32 %v526, 0.0
  %v543 = vmax.f32 %v527, 0.0
  %v544 = vmax.f32 %v528, 0.0
  %v545 = vmax.f32 %v529, 0.0
  %v546 = vmax.f32 %v530, 0.0
  %v547 = vmax.f32 %v531, 0.0
  %v548 = vmax.f32 %v532, 0.0
  %v549 = vmax.f32 %v533, 0.0
  %v550 = vmax.f32 %v534, 0.0
  %v551 = vmax.f32 %v535, 0.0
  %v552 = vmax.f32 %v536, 0.0
  %v553 = vmax.f32 %v537, 0.0
  %v554 = vpack.c.bf16 %v538, %v538
  %v555 = vpack.c.bf16 %v539, %v539
  %v556 = vpack.c.bf16 %v540, %v540
  %v557 = vpack.c.bf16 %v541, %v541
  %v558 = vpack.c.bf16 %v542, %v542
  %v559 = vpack.c.bf16 %v543, %v543
  %v560 = vpack.c.bf16 %v544, %v544
  %v561 = vpack.c.bf16 %v545, %v545
  %v562 = vpack.c.bf16 %v546, %v546
  %v563 = vpack.c.bf16 %v547, %v547
  %v564 = vpack.c.bf16 %v548, %v548
  %v565 = vpack.c.bf16 %v549, %v549
  %v566 = vpack.c.bf16 %v550, %v550
  %v567 = vpack.c.bf16 %v551, %v551
  %v568 = vpack.c.bf16 %v552, %v552
  %v569 = vpack.c.bf16 %v553, %v553
  %570 = vst [vmem:[%s4] sm:$0xf] %v554
  %571 = vst [vmem:[%s4 + $0x4] sm:$0xf] %v555
  %572 = vst [vmem:[%s4 + $0x8] sm:$0xf] %v556
  %573 = vst [vmem:[%s4 + $0xc] sm:$0xf] %v557
  %574 = vst [vmem:[%s4 + $0x10] sm:$0xf] %v558
  %575 = vst [vmem:[%s4 + $0x14] sm:$0xf] %v559
  %576 = vst [vmem:[%s4 + $0x18] sm:$0xf] %v560
  %577 = vst [vmem:[%s4 + $0x1c] sm:$0xf] %v561
  %578 = vst [vmem:[%s4 + $0x20] sm:$0xf] %v562
  %579 = vst [vmem:[%s4 + $0x24] sm:$0xf] %v563
  %580 = vst [vmem:[%s4 + $0x28] sm:$0xf] %v564
  %581 = vst [vmem:[%s4 + $0x2c] sm:$0xf] %v565
  %582 = vst [vmem:[%s4 + $0x30] sm:$0xf] %v566
  %583 = vst [vmem:[%s4 + $0x34] sm:$0xf] %v567
  %584 = vst [vmem:[%s4 + $0x38] sm:$0xf] %v568
  %585 = vst [vmem:[%s4 + $0x3c] sm:$0xf] %v569
  // Predicated region
  $region18: #{resnet_forward.12} parent=0 // pred_check
    _
  $region19: #{resnet_forward.12} parent=0 // pred_check_branch
    %587 = sbr.rel (0) target = $region21
  $region20: #{resnet_forward.12} parent=0 // pred_region
    _
  $region21: #{resnet_forward.12} parent=0 // pred_fallthru
    _
  // Predicated region
  $region22: #{resnet_forward.12} parent=0 // pred_check
    _
  $region23: #{resnet_forward.12} parent=0 // pred_check_branch
    %589 = sbr.rel (0) target = $region25
  $region24: #{resnet_forward.12} parent=0 // pred_region
    _
  $region25: #{resnet_forward.12} parent=0 // pred_fallthru
    _

// kernel: resnet_forward.13
$region0: #{resnet_forward.13}
  #allocation0 [shape = 'u32[]', space=smem, size = 0x4, offset = 0x4, fixed_abs, tag = 'smem constant byte address 0x4 - core index']
  #allocation1 [shape = 'u32[72,128]{1,0:T(1,128)}', space=vmem, size = 0x9000, scoped, tag = 'internal scratch']
  %s0 = inlined_call_operand.vmem [shape: bf16[32,288], index: 0, kind: input, shape index: {}]
  %s1 = inlined_call_operand.vmem [shape: bf16[288,128], index: 1, kind: input, shape index: {}]
  %s2 = inlined_call_operand.vmem [shape: f32[1,128], index: 2, kind: input, shape index: {}]
  %s3 = inlined_call_operand.vmem [shape: bf16[32,128], index: 3, kind: output, shape index: {}]
  %s4 = sld [smem:[#allocation0]]
  $region22: #{resnet_forward.13} parent=0
    _
  %s6 = ssub.s32 1, %s4
  %s7 = scalar_select 0, %s6, %s4
  // Predicated region
  $region2: #{resnet_forward.13} parent=0 // pred_check
    _
  $region3: #{resnet_forward.13} parent=0 // pred_check_branch
    %9 = sbr.rel (0) target = $region5
  $region4: #{resnet_forward.13} parent=0 // pred_region
    _
  $region5: #{resnet_forward.13} parent=0 // pred_fallthru
    _
  // Predicated region
  $region6: #{resnet_forward.13} parent=0 // pred_check
    _
  $region7: #{resnet_forward.13} parent=0 // pred_check_branch
    %11 = sbr.rel (0) target = $region9
  $region8: #{resnet_forward.13} parent=0 // pred_region
    _
  $region9: #{resnet_forward.13} parent=0 // pred_fallthru
    _
  // Predicated region
  $region10: #{resnet_forward.13} parent=0 // pred_check
    _
  $region11: #{resnet_forward.13} parent=0 // pred_check_branch
    %13 = sbr.rel (0) target = $region13
  $region12: #{resnet_forward.13} parent=0 // pred_region
    _
  $region13: #{resnet_forward.13} parent=0 // pred_fallthru
    _
  %v15 = vld [vmem:[%s0] sm:$0xff]
  %v16 = vld [vmem:[%s0 + $0x8] sm:$0xf]
  %v17 = vld [vmem:[%s0 + $0xc] sm:$0xff]
  %v18 = vld [vmem:[%s0 + $0x14] sm:$0xf]
  %v19 = vld [vmem:[%s0 + $0x18] sm:$0xff]
  %v20 = vld [vmem:[%s0 + $0x20] sm:$0xf]
  %v21 = vld [vmem:[%s0 + $0x24] sm:$0xff]
  %v22 = vld [vmem:[%s0 + $0x2c] sm:$0xf]
  %v23 = vld [vmem:[%s1] sm:$0xf]
  %v24 = vld [vmem:[%s1 + $0x4] sm:$0xf]
  %v25 = vld [vmem:[%s1 + $0x8] sm:$0xf]
  %v26 = vld [vmem:[%s1 + $0xc] sm:$0xf]
  %v27 = vld [vmem:[%s1 + $0x10] sm:$0xf]
  %v28 = vld [vmem:[%s1 + $0x14] sm:$0xf]
  %v29 = vld [vmem:[%s1 + $0x18] sm:$0xf]
  %v30 = vld [vmem:[%s1 + $0x1c] sm:$0xf]
  %v31 = vld [vmem:[%s1 + $0x20] sm:$0xf]
  %v32 = vld [vmem:[%s1 + $0x24] sm:$0xf]
  %v33 = vld [vmem:[%s1 + $0x28] sm:$0xf]
  %v34 = vld [vmem:[%s1 + $0x2c] sm:$0xf]
  %v35 = vld [vmem:[%s1 + $0x30] sm:$0xf]
  %v36 = vld [vmem:[%s1 + $0x34] sm:$0xf]
  %v37 = vld [vmem:[%s1 + $0x38] sm:$0xf]
  %v38 = vld [vmem:[%s1 + $0x3c] sm:$0xf]
  %v39 = vld [vmem:[%s1 + $0x40] sm:$0xf]
  %v40 = vld [vmem:[%s1 + $0x44] sm:$0xf]
  %v41 = vld [vmem:[%s1 + $0x48] sm:$0xf]
  %v42 = vld [vmem:[%s1 + $0x4c] sm:$0xf]
  %v43 = vld [vmem:[%s1 + $0x50] sm:$0xf]
  %v44 = vld [vmem:[%s1 + $0x54] sm:$0xf]
  %v45 = vld [vmem:[%s1 + $0x58] sm:$0xf]
  %v46 = vld [vmem:[%s1 + $0x5c] sm:$0xf]
  %v47 = vld [vmem:[%s1 + $0x60] sm:$0xf]
  %v48 = vld [vmem:[%s1 + $0x64] sm:$0xf]
  %v49 = vld [vmem:[%s1 + $0x68] sm:$0xf]
  %v50 = vld [vmem:[%s1 + $0x6c] sm:$0xf]
  %v51 = vld [vmem:[%s1 + $0x70] sm:$0xf]
  %v52 = vld [vmem:[%s1 + $0x74] sm:$0xf]
  %v53 = vld [vmem:[%s1 + $0x78] sm:$0xf]
  %v54 = vld [vmem:[%s1 + $0x7c] sm:$0xf]
  %v55 = vld [vmem:[%s1 + $0x80] sm:$0xf]
  %v56 = vld [vmem:[%s1 + $0x84] sm:$0xf]
  %v57 = vld [vmem:[%s1 + $0x88] sm:$0xf]
  %v58 = vld [vmem:[%s1 + $0x8c] sm:$0xf]
  %v59 = vld [vmem:[%s2] sm:$0x1]
  %v61 = vperm.slane %v59, 0
  %v71 = vunpack.c.l.b16 %v15
  %v72 = vunpack.c.h.b16 %v15
  %v73 = vunpack.c.l.b16 %v16
  %v74 = vunpack.c.l.b16 %v17
  %v75 = vunpack.c.h.b16 %v17
  %v76 = vunpack.c.l.b16 %v18
  %v77 = vunpack.c.l.b16 %v19
  %v78 = vunpack.c.h.b16 %v19
  %v79 = vunpack.c.l.b16 %v20
  %v80 = vunpack.c.l.b16 %v21
  %v81 = vunpack.c.h.b16 %v21
  %v82 = vunpack.c.l.b16 %v22
  %v83 = vpack.c.b16 %v74, %v71
  %v84 = vpack.c.b16 %v75, %v72
  %v85 = vpack.c.b16 %v76, %v73
  %v86 = vpack.c.b16 %v80, %v77
  %v87 = vpack.c.b16 %v81, %v78
  %v88 = vpack.c.b16 %v82, %v79
  %v129 = vunpack.c.l.b16 %v23
  %v130 = vunpack.c.l.b16 %v24
  %v131 = vunpack.c.l.b16 %v25
  %v132 = vunpack.c.l.b16 %v26
  %v133 = vunpack.c.l.b16 %v27
  %v134 = vunpack.c.l.b16 %v28
  %v135 = vunpack.c.l.b16 %v29
  %v136 = vunpack.c.l.b16 %v30
  %v137 = vunpack.c.l.b16 %v31
  %v138 = vunpack.c.l.b16 %v32
  %v139 = vunpack.c.l.b16 %v33
  %v140 = vunpack.c.l.b16 %v34
  %v141 = vunpack.c.l.b16 %v35
  %v142 = vunpack.c.l.b16 %v36
  %v143 = vunpack.c.l.b16 %v37
  %v144 = vunpack.c.l.b16 %v38
  %v145 = vunpack.c.l.b16 %v39
  %v146 = vunpack.c.l.b16 %v40
  %v147 = vunpack.c.l.b16 %v41
  %v148 = vunpack.c.l.b16 %v42
  %v149 = vunpack.c.l.b16 %v43
  %v150 = vunpack.c.l.b16 %v44
  %v151 = vunpack.c.l.b16 %v45
  %v152 = vunpack.c.l.b16 %v46
  %v153 = vunpack.c.l.b16 %v47
  %v154 = vunpack.c.l.b16 %v48
  %v155 = vunpack.c.l.b16 %v49
  %v156 = vunpack.c.l.b16 %v50
  %v157 = vunpack.c.l.b16 %v51
  %v158 = vunpack.c.l.b16 %v52
  %v159 = vunpack.c.l.b16 %v53
  %v160 = vunpack.c.l.b16 %v54
  %v161 = vunpack.c.l.b16 %v55
  %v162 = vunpack.c.l.b16 %v56
  %v163 = vunpack.c.l.b16 %v57
  %v164 = vunpack.c.l.b16 %v58
  %v165 = vpack.c.b16 %v130, %v129
  %v166 = vpack.c.b16 %v132, %v131
  %v167 = vpack.c.b16 %v134, %v133
  %v168 = vpack.c.b16 %v136, %v135
  %v169 = vpack.c.b16 %v138, %v137
  %v170 = vpack.c.b16 %v140, %v139
  %v171 = vpack.c.b16 %v142, %v141
  %v172 = vpack.c.b16 %v144, %v143
  %v173 = vpack.c.b16 %v146, %v145
  %v174 = vpack.c.b16 %v148, %v147
  %v175 = vpack.c.b16 %v150, %v149
  %v176 = vpack.c.b16 %v152, %v151
  %v177 = vpack.c.b16 %v154, %v153
  %v178 = vpack.c.b16 %v156, %v155
  %v179 = vpack.c.b16 %v158, %v157
  %v180 = vpack.c.b16 %v160, %v159
  %v181 = vpack.c.b16 %v162, %v161
  %v182 = vpack.c.b16 %v164, %v163
  %vm201 = vcmask 261120
  %v203 = vsel %vm201, %v85, 0
  %v206 = vsel %vm201, %v88, 0
  %208 = vmatpush.bf16.msra.mxu0 %v172
  %209 = vmatpush.bf16.msra.mxu0 %v171
  %210 = vmatpush.bf16.msra.mxu0 %v170
  %211 = vmatpush.bf16.msra.mxu0 %v169
  %212 = vmatpush.bf16.msra.mxu0 %v168
  %213 = vmatpush.bf16.msra.mxu0 %v167
  %214 = vmatpush.bf16.msra.mxu0 %v166
  %215 = vmatpush.bf16.msra.mxu0 %v165
  %216 = vmatmul.bf16.gmra.mxu0 %v83
  %v217 = vpop.f32.mrf.mxu0
  %v218 = vadd.f32 %v61, %v217
  %v219 = vpop.f32.mrf.mxu0
  %v220 = vadd.f32 %v61, %v219
  %221 = vmatmul.bf16.gmra.mxu0 %v86
  %v222 = vpop.f32.mrf.mxu0
  %v223 = vadd.f32 %v61, %v222
  %v224 = vpop.f32.mrf.mxu0
  %v225 = vadd.f32 %v61, %v224
  %226 = vdwg.mxu0
  %227 = vmatpush.bf16.msra.mxu0 %v180
  %228 = vmatpush.bf16.msra.mxu0 %v179
  %229 = vmatpush.bf16.msra.mxu0 %v178
  %230 = vmatpush.bf16.msra.mxu0 %v177
  %231 = vmatpush.bf16.msra.mxu0 %v176
  %232 = vmatpush.bf16.msra.mxu0 %v175
  %233 = vmatpush.bf16.msra.mxu0 %v174
  %234 = vmatpush.bf16.msra.mxu0 %v173
  %235 = vmatmul.bf16.gmra.mxu0 %v84
  %v236 = vpop.f32.mrf.mxu0
  %v237 = vadd.f32 %v218, %v236
  %v238 = vpop.f32.mrf.mxu0
  %v239 = vadd.f32 %v220, %v238
  %240 = vmatmul.bf16.gmra.mxu0 %v87
  %v241 = vpop.f32.mrf.mxu0
  %v242 = vadd.f32 %v223, %v241
  %v243 = vpop.f32.mrf.mxu0
  %v244 = vadd.f32 %v225, %v243
  %245 = vdwg.mxu0
  %246 = vmatpush.bf16.msra.mxu0 0
  %247 = vmatpush.bf16.msra.mxu0 0
  %248 = vmatpush.bf16.msra.mxu0 0
  %249 = vmatpush.bf16.msra.mxu0 0
  %250 = vmatpush.bf16.msra.mxu0 0
  %251 = vmatpush.bf16.msra.mxu0 0
  %252 = vmatpush.bf16.msra.mxu0 %v182
  %253 = vmatpush.bf16.msra.mxu0 %v181
  %254 = vmatmul.bf16.gmra.mxu0 %v203
  %v255 = vpop.f32.mrf.mxu0
  %v256 = vadd.f32 %v237, %v255
  %v257 = vpop.f32.mrf.mxu0
  %v258 = vadd.f32 %v239, %v257
  %259 = vmatmul.bf16.gmra.mxu0 %v206
  %v260 = vpop.f32.mrf.mxu0
  %v261 = vadd.f32 %v242, %v260
  %v262 = vpop.f32.mrf.mxu0
  %v263 = vadd.f32 %v244, %v262
  %264 = vdwg.mxu0
  %v265 = vmax.f32 %v256, 0.0
  %v266 = vmax.f32 %v258, 0.0
  %v267 = vmax.f32 %v261, 0.0
  %v268 = vmax.f32 %v263, 0.0
  %v269 = vpack.c.bf16 %v265, %v265
  %v270 = vpack.c.bf16 %v266, %v266
  %v271 = vpack.c.bf16 %v267, %v267
  %v272 = vpack.c.bf16 %v268, %v268
  %273 = vst [vmem:[%s3] sm:$0xf] %v269
  %274 = vst [vmem:[%s3 + $0x4] sm:$0xf] %v270
  %275 = vst [vmem:[%s3 + $0x8] sm:$0xf] %v271
  %276 = vst [vmem:[%s3 + $0xc] sm:$0xf] %v272
  // Predicated region
  $region14: #{resnet_forward.13} parent=0 // pred_check
    _
  $region15: #{resnet_forward.13} parent=0 // pred_check_branch
    %278 = sbr.rel (0) target = $region17
  $region16: #{resnet_forward.13} parent=0 // pred_region
    _
  $region17: #{resnet_forward.13} parent=0 // pred_fallthru
    _
  // Predicated region
  $region18: #{resnet_forward.13} parent=0 // pred_check
    _
  $region19: #{resnet_forward.13} parent=0 // pred_check_branch
    %280 = sbr.rel (0) target = $region21
  $region20: #{resnet_forward.13} parent=0 // pred_region
    _
  $region21: #{resnet_forward.13} parent=0 // pred_fallthru
    _

// kernel: resnet_forward.15
$region0: #{resnet_forward.15}
  #allocation0 [shape = 'u32[]', space=smem, size = 0x4, offset = 0x4, fixed_abs, tag = 'smem constant byte address 0x4 - core index']
  #allocation1 [shape = 'u32[72,128]{1,0:T(1,128)}', space=vmem, size = 0x9000, scoped, tag = 'internal scratch']
  %s0 = inlined_call_operand.vmem [shape: bf16[2,16,64], index: 0, kind: input, shape index: {}]
  %s1 = inlined_call_operand.vmem [shape: bf16[64,128], index: 1, kind: input, shape index: {}]
  %s2 = inlined_call_operand.vmem [shape: f32[1,128], index: 2, kind: input, shape index: {}]
  %s3 = inlined_call_operand.hbm [shape: f32[2,128], index: 3, kind: output, shape index: {}]
  %s4 = sld [smem:[#allocation0]]
  $region22: #{resnet_forward.15} parent=0
    _
  %s6 = ssub.s32 1, %s4
  %s7 = scalar_select 0, %s6, %s4
  $region1: #{resnet_forward.15} parent=0
    #allocation2 [shape = 'u8[1024]{0}', space=vmem, size = 0x400, scoped, tag = 'output window, operand 0, single buffered']
    #allocation3 [shape = 's32[1]{0}', space=sflag, size = 0x4, scoped, tag = 'scoped memory for resnet_forward.15']
    %8 = vsyncpa [#allocation3], 0
    // Predicated region
    $region2: #{resnet_forward.15} parent=1 // pred_check
      _
    $region3: #{resnet_forward.15} parent=1 // pred_check_branch
      %10 = sbr.rel (0) target = $region5
    $region4: #{resnet_forward.15} parent=1 // pred_region
      _
    $region5: #{resnet_forward.15} parent=1 // pred_fallthru
      _
    // Predicated region
    $region6: #{resnet_forward.15} parent=1 // pred_check
      _
    $region7: #{resnet_forward.15} parent=1 // pred_check_branch
      %12 = sbr.rel (0) target = $region9
    $region8: #{resnet_forward.15} parent=1 // pred_region
      _
    $region9: #{resnet_forward.15} parent=1 // pred_fallthru
      _
    // Predicated region
    $region10: #{resnet_forward.15} parent=1 // pred_check
      _
    $region11: #{resnet_forward.15} parent=1 // pred_check_branch
      %14 = sbr.rel (0) target = $region13
    $region12: #{resnet_forward.15} parent=1 // pred_region
      _
    $region13: #{resnet_forward.15} parent=1 // pred_fallthru
      _
    %v16 = vld [vmem:[%s0] sm:$0xf]
    %v17 = vld [vmem:[%s0 + $0x4] sm:$0xf]
    %v18 = vld [vmem:[%s0 + $0x8] sm:$0xf]
    %v19 = vld [vmem:[%s0 + $0xc] sm:$0xf]
    %v20 = vunpack.c.l.bf16 %v16
    %v21 = vunpack.c.l.bf16 %v17
    %v22 = vunpack.c.l.bf16 %v18
    %v23 = vunpack.c.l.bf16 %v19
    %vm24 = vcmask 523264
    %v25 = vsel %vm24, %v20, 0.0
    %v26 = vsel %vm24, %v21, 0.0
    %v27 = vadd.f32 %v25, %v26
    %v28 = vrot.slane %v27, 4
    %v29 = vadd.f32 %v27, %v28
    %v30 = vrot.slane %v29, 2
    %v31 = vadd.f32 %v29, %v30
    %v32 = vrot.slane %v31, 1
    %v33 = vadd.f32 %v31, %v32
    %v34 = vsel %vm24, %v22, 0.0
    %v35 = vsel %vm24, %v23, 0.0
    %v36 = vadd.f32 %v34, %v35
    %v37 = vrot.slane %v36, 4
    %v38 = vadd.f32 %v36, %v37
    %v39 = vrot.slane %v38, 2
    %v40 = vadd.f32 %v38, %v39
    %v41 = vrot.slane %v40, 1
    %v42 = vadd.f32 %v40, %v41
    %v43 = vrcp.pop 16.0
    %v44 = vmul.f32 16.0, %v43
    %v45 = vsub.f32 1.0, %v44
    %v46 = vmul.f32 %v43, %v45
    %v47 = vadd.f32 %v43, %v46
    %vm48 = vweird.f32 %v43
    %v49 = vsel %vm48, %v43, %v47
    %v50 = vmul.f32 %v33, %v49
    %v51 = vmul.f32 %v42, %v49
    %v52 = vpack.c.bf16 %v50, %v50
    %v53 = vpack.c.bf16 %v51, %v51
    %v54 = vld [vmem:[%s1] sm:$0xf]
    %v55 = vld [vmem:[%s1 + $0x4] sm:$0xf]
    %v56 = vld [vmem:[%s1 + $0x8] sm:$0xf]
    %v57 = vld [vmem:[%s1 + $0xc] sm:$0xf]
    %v58 = vld [vmem:[%s1 + $0x10] sm:$0xf]
    %v59 = vld [vmem:[%s1 + $0x14] sm:$0xf]
    %v60 = vld [vmem:[%s1 + $0x18] sm:$0xf]
    %v61 = vld [vmem:[%s1 + $0x1c] sm:$0xf]
    %v62 = vld [vmem:[%s2] sm:$0x1]
    %v64 = vperm.slane %v62, 0
    %v68 = vunpack.c.l.b16 %v52
    %v69 = vunpack.c.l.b16 %v53
    %vm70 = vcmask 1041409
    %v71 = vsel %vm70, %v69, %v68
    %v72 = vpack.c.b16 %v71, %v71
    %v81 = vunpack.c.l.b16 %v54
    %v82 = vunpack.c.l.b16 %v55
    %v83 = vunpack.c.l.b16 %v56
    %v84 = vunpack.c.l.b16 %v57
    %v85 = vunpack.c.l.b16 %v58
    %v86 = vunpack.c.l.b16 %v59
    %v87 = vunpack.c.l.b16 %v60
    %v88 = vunpack.c.l.b16 %v61
    %v89 = vpack.c.b16 %v82, %v81
    %v90 = vpack.c.b16 %v84, %v83
    %v91 = vpack.c.b16 %v86, %v85
    %v92 = vpack.c.b16 %v88, %v87
    %v98 = vsel %vm24, %v72, 0
    %100 = vmatpush.bf16.msra.mxu0 0
    %101 = vmatpush.bf16.msra.mxu0 0
    %102 = vmatpush.bf16.msra.mxu0 0
    %103 = vmatpush.bf16.msra.mxu0 0
    %104 = vmatpush.bf16.msra.mxu0 %v92
    %105 = vmatpush.bf16.msra.mxu0 %v91
    %106 = vmatpush.bf16.msra.mxu0 %v90
    %107 = vmatpush.bf16.msra.mxu0 %v89
    %108 = vmatmul.bf16.gmra.mxu0 %v98
    %v109 = vpop.f32.mrf.mxu0
    %v110 = vadd.f32 %v64, %v109
    %v111 = vpop.f32.mrf.mxu0
    %112 = vdwg.mxu0
    %113 = vst [vmem:[#allocation2] sm:$0x3] %v110
    // Predicated region
    $region14: #{resnet_forward.15} parent=1 // pred_check
      _
    $region15: #{resnet_forward.15} parent=1 // pred_check_branch
      %115 = sbr.rel (0) target = $region17
    $region16: #{resnet_forward.15} parent=1 // pred_region
      %117 = vsyncadd [#allocation3], 0
      %s119 = sshll.u32 [#allocation2], 4
      %s120 = int_to_ptr.vmem [resolvable:$true] %s119
      %s121 = sshll.u32 %s3, 4
      %s122 = int_to_ptr.hbm [resolvable:$true] %s121
      %124 = dma.vmem_to_hbm [thread:$0]  %s120, 32, %s122, [#allocation3]
    $region17: #{resnet_forward.15} parent=1 // pred_fallthru
      _
    // Predicated region
    $region18: #{resnet_forward.15} parent=1 // pred_check
      _
    $region19: #{resnet_forward.15} parent=1 // pred_check_branch
      %126 = sbr.rel (0) target = $region21
    $region20: #{resnet_forward.15} parent=1 // pred_region
      %128 = dma.done [#allocation3], 32
    $region21: #{resnet_forward.15} parent=1 // pred_fallthru
      _
    %129 = vsyncpa [#allocation3], 1

// kernel: resnet_forward.14
$region0: #{resnet_forward.14}
  #allocation0 [shape = 'u32[]', space=smem, size = 0x4, offset = 0x4, fixed_abs, tag = 'smem constant byte address 0x4 - core index']
  #allocation1 [shape = 'u32[72,128]{1,0:T(1,128)}', space=vmem, size = 0x9000, scoped, tag = 'internal scratch']
  %s0 = inlined_call_operand.vmem [shape: bf16[32,576], index: 0, kind: input, shape index: {}]
  %s1 = inlined_call_operand.vmem [shape: bf16[576,128], index: 1, kind: input, shape index: {}]
  %s2 = inlined_call_operand.vmem [shape: f32[1,128], index: 2, kind: input, shape index: {}]
  %s3 = inlined_call_operand.vmem [shape: bf16[32,128], index: 3, kind: input, shape index: {}]
  %s4 = inlined_call_operand.vmem [shape: bf16[32,128], index: 4, kind: output, shape index: {}]
  %s5 = sld [smem:[#allocation0]]
  $region26: #{resnet_forward.14} parent=0
    _
  %s7 = ssub.s32 1, %s5
  %s8 = scalar_select 0, %s7, %s5
  // Predicated region
  $region2: #{resnet_forward.14} parent=0 // pred_check
    _
  $region3: #{resnet_forward.14} parent=0 // pred_check_branch
    %10 = sbr.rel (0) target = $region5
  $region4: #{resnet_forward.14} parent=0 // pred_region
    _
  $region5: #{resnet_forward.14} parent=0 // pred_fallthru
    _
  // Predicated region
  $region6: #{resnet_forward.14} parent=0 // pred_check
    _
  $region7: #{resnet_forward.14} parent=0 // pred_check_branch
    %12 = sbr.rel (0) target = $region9
  $region8: #{resnet_forward.14} parent=0 // pred_region
    _
  $region9: #{resnet_forward.14} parent=0 // pred_fallthru
    _
  // Predicated region
  $region10: #{resnet_forward.14} parent=0 // pred_check
    _
  $region11: #{resnet_forward.14} parent=0 // pred_check_branch
    %14 = sbr.rel (0) target = $region13
  $region12: #{resnet_forward.14} parent=0 // pred_region
    _
  $region13: #{resnet_forward.14} parent=0 // pred_fallthru
    _
  // Predicated region
  $region14: #{resnet_forward.14} parent=0 // pred_check
    _
  $region15: #{resnet_forward.14} parent=0 // pred_check_branch
    %16 = sbr.rel (0) target = $region17
  $region16: #{resnet_forward.14} parent=0 // pred_region
    _
  $region17: #{resnet_forward.14} parent=0 // pred_fallthru
    _
  %v18 = vld [vmem:[%s0] sm:$0xff]
  %v19 = vld [vmem:[%s0 + $0x8] sm:$0xff]
  %v20 = vld [vmem:[%s0 + $0x10] sm:$0xf]
  %v21 = vld [vmem:[%s0 + $0x14] sm:$0xff]
  %v22 = vld [vmem:[%s0 + $0x1c] sm:$0xff]
  %v23 = vld [vmem:[%s0 + $0x24] sm:$0xf]
  %v24 = vld [vmem:[%s0 + $0x28] sm:$0xff]
  %v25 = vld [vmem:[%s0 + $0x30] sm:$0xff]
  %v26 = vld [vmem:[%s0 + $0x38] sm:$0xf]
  %v27 = vld [vmem:[%s0 + $0x3c] sm:$0xff]
  %v28 = vld [vmem:[%s0 + $0x44] sm:$0xff]
  %v29 = vld [vmem:[%s0 + $0x4c] sm:$0xf]
  %v30 = vld [vmem:[%s1] sm:$0xf]
  %v31 = vld [vmem:[%s1 + $0x4] sm:$0xf]
  %v32 = vld [vmem:[%s1 + $0x8] sm:$0xf]
  %v33 = vld [vmem:[%s1 + $0xc] sm:$0xf]
  %v34 = vld [vmem:[%s1 + $0x10] sm:$0xf]
  %v35 = vld [vmem:[%s1 + $0x14] sm:$0xf]
  %v36 = vld [vmem:[%s1 + $0x18] sm:$0xf]
  %v37 = vld [vmem:[%s1 + $0x1c] sm:$0xf]
  %v38 = vld [vmem:[%s1 + $0x20] sm:$0xf]
  %v39 = vld [vmem:[%s1 + $0x24] sm:$0xf]
  %v40 = vld [vmem:[%s1 + $0x28] sm:$0xf]
  %v41 = vld [vmem:[%s1 + $0x2c] sm:$0xf]
  %v42 = vld [vmem:[%s1 + $0x30] sm:$0xf]
  %v43 = vld [vmem:[%s1 + $0x34] sm:$0xf]
  %v44 = vld [vmem:[%s1 + $0x38] sm:$0xf]
  %v45 = vld [vmem:[%s1 + $0x3c] sm:$0xf]
  %v46 = vld [vmem:[%s1 + $0x40] sm:$0xf]
  %v47 = vld [vmem:[%s1 + $0x44] sm:$0xf]
  %v48 = vld [vmem:[%s1 + $0x48] sm:$0xf]
  %v49 = vld [vmem:[%s1 + $0x4c] sm:$0xf]
  %v50 = vld [vmem:[%s1 + $0x50] sm:$0xf]
  %v51 = vld [vmem:[%s1 + $0x54] sm:$0xf]
  %v52 = vld [vmem:[%s1 + $0x58] sm:$0xf]
  %v53 = vld [vmem:[%s1 + $0x5c] sm:$0xf]
  %v54 = vld [vmem:[%s1 + $0x60] sm:$0xf]
  %v55 = vld [vmem:[%s1 + $0x64] sm:$0xf]
  %v56 = vld [vmem:[%s1 + $0x68] sm:$0xf]
  %v57 = vld [vmem:[%s1 + $0x6c] sm:$0xf]
  %v58 = vld [vmem:[%s1 + $0x70] sm:$0xf]
  %v59 = vld [vmem:[%s1 + $0x74] sm:$0xf]
  %v60 = vld [vmem:[%s1 + $0x78] sm:$0xf]
  %v61 = vld [vmem:[%s1 + $0x7c] sm:$0xf]
  %v62 = vld [vmem:[%s1 + $0x80] sm:$0xf]
  %v63 = vld [vmem:[%s1 + $0x84] sm:$0xf]
  %v64 = vld [vmem:[%s1 + $0x88] sm:$0xf]
  %v65 = vld [vmem:[%s1 + $0x8c] sm:$0xf]
  %v66 = vld [vmem:[%s1 + $0x90] sm:$0xf]
  %v67 = vld [vmem:[%s1 + $0x94] sm:$0xf]
  %v68 = vld [vmem:[%s1 + $0x98] sm:$0xf]
  %v69 = vld [vmem:[%s1 + $0x9c] sm:$0xf]
  %v70 = vld [vmem:[%s1 + $0xa0] sm:$0xf]
  %v71 = vld [vmem:[%s1 + $0xa4] sm:$0xf]
  %v72 = vld [vmem:[%s1 + $0xa8] sm:$0xf]
  %v73 = vld [vmem:[%s1 + $0xac] sm:$0xf]
  %v74 = vld [vmem:[%s1 + $0xb0] sm:$0xf]
  %v75 = vld [vmem:[%s1 + $0xb4] sm:$0xf]
  %v76 = vld [vmem:[%s1 + $0xb8] sm:$0xf]
  %v77 = vld [vmem:[%s1 + $0xbc] sm:$0xf]
  %v78 = vld [vmem:[%s1 + $0xc0] sm:$0xf]
  %v79 = vld [vmem:[%s1 + $0xc4] sm:$0xf]
  %v80 = vld [vmem:[%s1 + $0xc8] sm:$0xf]
  %v81 = vld [vmem:[%s1 + $0xcc] sm:$0xf]
  %v82 = vld [vmem:[%s1 + $0xd0] sm:$0xf]
  %v83 = vld [vmem:[%s1 + $0xd4] sm:$0xf]
  %v84 = vld [vmem:[%s1 + $0xd8] sm:$0xf]
  %v85 = vld [vmem:[%s1 + $0xdc] sm:$0xf]
  %v86 = vld [vmem:[%s1 + $0xe0] sm:$0xf]
  %v87 = vld [vmem:[%s1 + $0xe4] sm:$0xf]
  %v88 = vld [vmem:[%s1 + $0xe8] sm:$0xf]
  %v89 = vld [vmem:[%s1 + $0xec] sm:$0xf]
  %v90 = vld [vmem:[%s1 + $0xf0] sm:$0xf]
  %v91 = vld [vmem:[%s1 + $0xf4] sm:$0xf]
  %v92 = vld [vmem:[%s1 + $0xf8] sm:$0xf]
  %v93 = vld [vmem:[%s1 + $0xfc] sm:$0xf]
  %v94 = vld [vmem:[%s1 + $0x100] sm:$0xf]
  %v95 = vld [vmem:[%s1 + $0x104] sm:$0xf]
  %v96 = vld [vmem:[%s1 + $0x108] sm:$0xf]
  %v97 = vld [vmem:[%s1 + $0x10c] sm:$0xf]
  %v98 = vld [vmem:[%s1 + $0x110] sm:$0xf]
  %v99 = vld [vmem:[%s1 + $0x114] sm:$0xf]
  %v100 = vld [vmem:[%s1 + $0x118] sm:$0xf]
  %v101 = vld [vmem:[%s1 + $0x11c] sm:$0xf]
  %v102 = vld [vmem:[%s2] sm:$0x1]
  %v104 = vperm.slane %v102, 0
  %v118 = vunpack.c.l.b16 %v18
  %v119 = vunpack.c.h.b16 %v18
  %v120 = vunpack.c.l.b16 %v19
  %v121 = vunpack.c.h.b16 %v19
  %v122 = vunpack.c.l.b16 %v20
  %v123 = vunpack.c.l.b16 %v21
  %v124 = vunpack.c.h.b16 %v21
  %v125 = vunpack.c.l.b16 %v22
  %v126 = vunpack.c.h.b16 %v22
  %v127 = vunpack.c.l.b16 %v23
  %v128 = vunpack.c.l.b16 %v24
  %v129 = vunpack.c.h.b16 %v24
  %v130 = vunpack.c.l.b16 %v25
  %v131 = vunpack.c.h.b16 %v25
  %v132 = vunpack.c.l.b16 %v26
  %v133 = vunpack.c.l.b16 %v27
  %v134 = vunpack.c.h.b16 %v27
  %v135 = vunpack.c.l.b16 %v28
  %v136 = vunpack.c.h.b16 %v28
  %v137 = vunpack.c.l.b16 %v29
  %v138 = vpack.c.b16 %v123, %v118
  %v139 = vpack.c.b16 %v124, %v119
  %v140 = vpack.c.b16 %v125, %v120
  %v141 = vpack.c.b16 %v126, %v121
  %v142 = vpack.c.b16 %v127, %v122
  %v143 = vpack.c.b16 %v133, %v128
  %v144 = vpack.c.b16 %v134, %v129
  %v145 = vpack.c.b16 %v135, %v130
  %v146 = vpack.c.b16 %v136, %v131
  %v147 = vpack.c.b16 %v137, %v132
  %v228 = vunpack.c.l.b16 %v30
  %v229 = vunpack.c.l.b16 %v31
  %v230 = vunpack.c.l.b16 %v32
  %v231 = vunpack.c.l.b16 %v33
  %v232 = vunpack.c.l.b16 %v34
  %v233 = vunpack.c.l.b16 %v35
  %v234 = vunpack.c.l.b16 %v36
  %v235 = vunpack.c.l.b16 %v37
  %v236 = vunpack.c.l.b16 %v38
  %v237 = vunpack.c.l.b16 %v39
  %v238 = vunpack.c.l.b16 %v40
  %v239 = vunpack.c.l.b16 %v41
  %v240 = vunpack.c.l.b16 %v42
  %v241 = vunpack.c.l.b16 %v43
  %v242 = vunpack.c.l.b16 %v44
  %v243 = vunpack.c.l.b16 %v45
  %v244 = vunpack.c.l.b16 %v46
  %v245 = vunpack.c.l.b16 %v47
  %v246 = vunpack.c.l.b16 %v48
  %v247 = vunpack.c.l.b16 %v49
  %v248 = vunpack.c.l.b16 %v50
  %v249 = vunpack.c.l.b16 %v51
  %v250 = vunpack.c.l.b16 %v52
  %v251 = vunpack.c.l.b16 %v53
  %v252 = vunpack.c.l.b16 %v54
  %v253 = vunpack.c.l.b16 %v55
  %v254 = vunpack.c.l.b16 %v56
  %v255 = vunpack.c.l.b16 %v57
  %v256 = vunpack.c.l.b16 %v58
  %v257 = vunpack.c.l.b16 %v59
  %v258 = vunpack.c.l.b16 %v60
  %v259 = vunpack.c.l.b16 %v61
  %v260 = vunpack.c.l.b16 %v62
  %v261 = vunpack.c.l.b16 %v63
  %v262 = vunpack.c.l.b16 %v64
  %v263 = vunpack.c.l.b16 %v65
  %v264 = vunpack.c.l.b16 %v66
  %v265 = vunpack.c.l.b16 %v67
  %v266 = vunpack.c.l.b16 %v68
  %v267 = vunpack.c.l.b16 %v69
  %v268 = vunpack.c.l.b16 %v70
  %v269 = vunpack.c.l.b16 %v71
  %v270 = vunpack.c.l.b16 %v72
  %v271 = vunpack.c.l.b16 %v73
  %v272 = vunpack.c.l.b16 %v74
  %v273 = vunpack.c.l.b16 %v75
  %v274 = vunpack.c.l.b16 %v76
  %v275 = vunpack.c.l.b16 %v77
  %v276 = vunpack.c.l.b16 %v78
  %v277 = vunpack.c.l.b16 %v79
  %v278 = vunpack.c.l.b16 %v80
  %v279 = vunpack.c.l.b16 %v81
  %v280 = vunpack.c.l.b16 %v82
  %v281 = vunpack.c.l.b16 %v83
  %v282 = vunpack.c.l.b16 %v84
  %v283 = vunpack.c.l.b16 %v85
  %v284 = vunpack.c.l.b16 %v86
  %v285 = vunpack.c.l.b16 %v87
  %v286 = vunpack.c.l.b16 %v88
  %v287 = vunpack.c.l.b16 %v89
  %v288 = vunpack.c.l.b16 %v90
  %v289 = vunpack.c.l.b16 %v91
  %v290 = vunpack.c.l.b16 %v92
  %v291 = vunpack.c.l.b16 %v93
  %v292 = vunpack.c.l.b16 %v94
  %v293 = vunpack.c.l.b16 %v95
  %v294 = vunpack.c.l.b16 %v96
  %v295 = vunpack.c.l.b16 %v97
  %v296 = vunpack.c.l.b16 %v98
  %v297 = vunpack.c.l.b16 %v99
  %v298 = vunpack.c.l.b16 %v100
  %v299 = vunpack.c.l.b16 %v101
  %v300 = vpack.c.b16 %v229, %v228
  %v301 = vpack.c.b16 %v231, %v230
  %v302 = vpack.c.b16 %v233, %v232
  %v303 = vpack.c.b16 %v235, %v234
  %v304 = vpack.c.b16 %v237, %v236
  %v305 = vpack.c.b16 %v239, %v238
  %v306 = vpack.c.b16 %v241, %v240
  %v307 = vpack.c.b16 %v243, %v242
  %v308 = vpack.c.b16 %v245, %v244
  %v309 = vpack.c.b16 %v247, %v246
  %v310 = vpack.c.b16 %v249, %v248
  %v311 = vpack.c.b16 %v251, %v250
  %v312 = vpack.c.b16 %v253, %v252
  %v313 = vpack.c.b16 %v255, %v254
  %v314 = vpack.c.b16 %v257, %v256
  %v315 = vpack.c.b16 %v259, %v258
  %v316 = vpack.c.b16 %v261, %v260
  %v317 = vpack.c.b16 %v263, %v262
  %v318 = vpack.c.b16 %v265, %v264
  %v319 = vpack.c.b16 %v267, %v266
  %v320 = vpack.c.b16 %v269, %v268
  %v321 = vpack.c.b16 %v271, %v270
  %v322 = vpack.c.b16 %v273, %v272
  %v323 = vpack.c.b16 %v275, %v274
  %v324 = vpack.c.b16 %v277, %v276
  %v325 = vpack.c.b16 %v279, %v278
  %v326 = vpack.c.b16 %v281, %v280
  %v327 = vpack.c.b16 %v283, %v282
  %v328 = vpack.c.b16 %v285, %v284
  %v329 = vpack.c.b16 %v287, %v286
  %v330 = vpack.c.b16 %v289, %v288
  %v331 = vpack.c.b16 %v291, %v290
  %v332 = vpack.c.b16 %v293, %v292
  %v333 = vpack.c.b16 %v295, %v294
  %v334 = vpack.c.b16 %v297, %v296
  %v335 = vpack.c.b16 %v299, %v298
  %vm372 = vcmask 523264
  %v374 = vsel %vm372, %v142, 0
  %v377 = vsel %vm372, %v147, 0
  %379 = vmatpush.bf16.msra.mxu0 %v307
  %380 = vmatpush.bf16.msra.mxu0 %v306
  %381 = vmatpush.bf16.msra.mxu0 %v305
  %382 = vmatpush.bf16.msra.mxu0 %v304
  %383 = vmatpush.bf16.msra.mxu0 %v303
  %384 = vmatpush.bf16.msra.mxu0 %v302
  %385 = vmatpush.bf16.msra.mxu0 %v301
  %386 = vmatpush.bf16.msra.mxu0 %v300
  %387 = vmatmul.bf16.gmra.mxu0 %v138
  %v388 = vpop.f32.mrf.mxu0
  %v389 = vadd.f32 %v104, %v388
  %v390 = vpop.f32.mrf.mxu0
  %v391 = vadd.f32 %v104, %v390
  %392 = vmatmul.bf16.gmra.mxu0 %v143
  %v393 = vpop.f32.mrf.mxu0
  %v394 = vadd.f32 %v104, %v393
  %v395 = vpop.f32.mrf.mxu0
  %v396 = vadd.f32 %v104, %v395
  %397 = vdwg.mxu0
  %398 = vmatpush.bf16.msra.mxu0 %v315
  %399 = vmatpush.bf16.msra.mxu0 %v314
  %400 = vmatpush.bf16.msra.mxu0 %v313
  %401 = vmatpush.bf16.msra.mxu0 %v312
  %402 = vmatpush.bf16.msra.mxu0 %v311
  %403 = vmatpush.bf16.msra.mxu0 %v310
  %404 = vmatpush.bf16.msra.mxu0 %v309
  %405 = vmatpush.bf16.msra.mxu0 %v308
  %406 = vmatmul.bf16.gmra.mxu0 %v139
  %v407 = vpop.f32.mrf.mxu0
  %v408 = vadd.f32 %v389, %v407
  %v409 = vpop.f32.mrf.mxu0
  %v410 = vadd.f32 %v391, %v409
  %411 = vmatmul.bf16.gmra.mxu0 %v144
  %v412 = vpop.f32.mrf.mxu0
  %v413 = vadd.f32 %v394, %v412
  %v414 = vpop.f32.mrf.mxu0
  %v415 = vadd.f32 %v396, %v414
  %416 = vdwg.mxu0
  %417 = vmatpush.bf16.msra.mxu0 %v323
  %418 = vmatpush.bf16.msra.mxu0 %v322
  %419 = vmatpush.bf16.msra.mxu0 %v321
  %420 = vmatpush.bf16.msra.mxu0 %v320
  %421 = vmatpush.bf16.msra.mxu0 %v319
  %422 = vmatpush.bf16.msra.mxu0 %v318
  %423 = vmatpush.bf16.msra.mxu0 %v317
  %424 = vmatpush.bf16.msra.mxu0 %v316
  %425 = vmatmul.bf16.gmra.mxu0 %v140
  %v426 = vpop.f32.mrf.mxu0
  %v427 = vadd.f32 %v408, %v426
  %v428 = vpop.f32.mrf.mxu0
  %v429 = vadd.f32 %v410, %v428
  %430 = vmatmul.bf16.gmra.mxu0 %v145
  %v431 = vpop.f32.mrf.mxu0
  %v432 = vadd.f32 %v413, %v431
  %v433 = vpop.f32.mrf.mxu0
  %v434 = vadd.f32 %v415, %v433
  %435 = vdwg.mxu0
  %436 = vmatpush.bf16.msra.mxu0 %v331
  %437 = vmatpush.bf16.msra.mxu0 %v330
  %438 = vmatpush.bf16.msra.mxu0 %v329
  %439 = vmatpush.bf16.msra.mxu0 %v328
  %440 = vmatpush.bf16.msra.mxu0 %v327
  %441 = vmatpush.bf16.msra.mxu0 %v326
  %442 = vmatpush.bf16.msra.mxu0 %v325
  %443 = vmatpush.bf16.msra.mxu0 %v324
  %444 = vmatmul.bf16.gmra.mxu0 %v141
  %v445 = vpop.f32.mrf.mxu0
  %v446 = vadd.f32 %v427, %v445
  %v447 = vpop.f32.mrf.mxu0
  %v448 = vadd.f32 %v429, %v447
  %449 = vmatmul.bf16.gmra.mxu0 %v146
  %v450 = vpop.f32.mrf.mxu0
  %v451 = vadd.f32 %v432, %v450
  %v452 = vpop.f32.mrf.mxu0
  %v453 = vadd.f32 %v434, %v452
  %454 = vdwg.mxu0
  %455 = vmatpush.bf16.msra.mxu0 0
  %456 = vmatpush.bf16.msra.mxu0 0
  %457 = vmatpush.bf16.msra.mxu0 0
  %458 = vmatpush.bf16.msra.mxu0 0
  %459 = vmatpush.bf16.msra.mxu0 %v335
  %460 = vmatpush.bf16.msra.mxu0 %v334
  %461 = vmatpush.bf16.msra.mxu0 %v333
  %462 = vmatpush.bf16.msra.mxu0 %v332
  %463 = vmatmul.bf16.gmra.mxu0 %v374
  %v464 = vpop.f32.mrf.mxu0
  %v465 = vadd.f32 %v446, %v464
  %v466 = vpop.f32.mrf.mxu0
  %v467 = vadd.f32 %v448, %v466
  %468 = vmatmul.bf16.gmra.mxu0 %v377
  %v469 = vpop.f32.mrf.mxu0
  %v470 = vadd.f32 %v451, %v469
  %v471 = vpop.f32.mrf.mxu0
  %v472 = vadd.f32 %v453, %v471
  %473 = vdwg.mxu0
  %v474 = vld [vmem:[%s3] sm:$0xf]
  %v475 = vld [vmem:[%s3 + $0x4] sm:$0xf]
  %v476 = vld [vmem:[%s3 + $0x8] sm:$0xf]
  %v477 = vld [vmem:[%s3 + $0xc] sm:$0xf]
  %v478 = vunpack.c.l.bf16 %v474
  %v479 = vunpack.c.l.bf16 %v475
  %v480 = vunpack.c.l.bf16 %v476
  %v481 = vunpack.c.l.bf16 %v477
  %v482 = vadd.f32 %v465, %v478
  %v483 = vadd.f32 %v467, %v479
  %v484 = vadd.f32 %v470, %v480
  %v485 = vadd.f32 %v472, %v481
  %v486 = vmax.f32 %v482, 0.0
  %v487 = vmax.f32 %v483, 0.0
  %v488 = vmax.f32 %v484, 0.0
  %v489 = vmax.f32 %v485, 0.0
  %v490 = vpack.c.bf16 %v486, %v486
  %v491 = vpack.c.bf16 %v487, %v487
  %v492 = vpack.c.bf16 %v488, %v488
  %v493 = vpack.c.bf16 %v489, %v489
  %494 = vst [vmem:[%s4] sm:$0xf] %v490
  %495 = vst [vmem:[%s4 + $0x4] sm:$0xf] %v491
  %496 = vst [vmem:[%s4 + $0x8] sm:$0xf] %v492
  %497 = vst [vmem:[%s4 + $0xc] sm:$0xf] %v493
  // Predicated region
  $region18: #{resnet_forward.14} parent=0 // pred_check
    _
  $region19: #{resnet_forward.14} parent=0 // pred_check_branch
    %499 = sbr.rel (0) target = $region21
  $region20: #{resnet_forward.14} parent=0 // pred_region
    _
  $region21: #{resnet_forward.14} parent=0 // pred_fallthru
    _
  // Predicated region
  $region22: #{resnet_forward.14} parent=0 // pred_check
    _
  $region23: #{resnet_forward.14} parent=0 // pred_check_branch
    %501 = sbr.rel (0) target = $region25
  $region24: #{resnet_forward.14} parent=0 // pred_region
    _
  $region25: #{resnet_forward.14} parent=0 // pred_fallthru
    _

</llo_original>
